<compile_context>
chip_gen: v6e
topology: v6e:2x2x1
jax: 0.10.0
libtpu: 0.0.40
codegen_flags: <defaults>
</compile_context>

<pallas_src>
import jax
import jax.numpy as jnp
from jax.experimental import pallas as pl
from jax.experimental.pallas import tpu as pltpu

NUM_FILTERS  = [100, 200, 200, 200, 200, 100, 100, 100, 100, 100, 160, 160]
FILTER_SIZES = [1, 2, 3, 4, 5, 6, 7, 8, 9, 10, 15, 20]
EMBED_DIM = 64
F_MAX    = max(FILTER_SIZES)                       # 20
K_IM2COL = F_MAX * EMBED_DIM                       # 1280
N_TOTAL  = sum(NUM_FILTERS)                        # 1720
LANE     = 128
N_PAD    = ((N_TOTAL + LANE - 1) // LANE) * LANE   # 1792 (lane-dense output width)
TILE_N   = 256                                     # 1792 = 7 * 256
assert N_PAD % TILE_N == 0

# filter size owning each (padded) output column; padding columns get f=1 (weights are 0)
_F_PER_COL = []
for _f, _n in zip(FILTER_SIZES, NUM_FILTERS):
    _F_PER_COL += [_f] * _n
_F_PER_COL += [1] * (N_PAD - N_TOTAL)


# ---------------------------------------------------------------------------
# Fused kernel: conv(+mask)+maxpool+bias+ReLU per column tile, highway accum,
# head (highway gate + linear + log_softmax) finalized on the last tile.
# ---------------------------------------------------------------------------
def _fused_kernel(x2_ref, w_ref, b_ref, tmax_ref, hw_w_ref, hw_b_ref,
                  lin_w_ref, lin_b_ref, o_ref, pred_s, h_s):
    j = pl.program_id(0)
    nt = pred_s.shape[0]                     # static number of 256-wide column tiles
    B, S, _ = x2_ref.shape

    # ---- all 12 convs for this column tile as a single big-K MXU matmul ----
    y = jnp.einsum("bsk,kn->bsn", x2_ref[...], w_ref[...],
                   preferred_element_type=jnp.float32)           # (B, S, TILE_N) f32
    # mask time positions outside each column's valid conv range (t > S - f)
    t_idx = jax.lax.broadcasted_iota(jnp.int32, (S, TILE_N), 0)
    valid = t_idx <= tmax_ref[...]                               # (S, TILE_N)
    y = jnp.where(valid[None, :, :], y, -jnp.inf)
    pooled = jnp.max(y, axis=1)                                  # (B, TILE_N)
    # bias + ReLU after the pool (monotone => same result, L-fold less VPU work)
    pred_t = jnp.maximum(pooled + b_ref[...], 0.0)               # (B, TILE_N) f32
    pred_s[j] = pred_t

    # ---- accumulate highway pre-activation: h += pred_tile @ hw_w[tile_rows, :] ----
    @pl.when(j == 0)
    def _():
        h_s[...] = jnp.zeros_like(h_s)

    h_s[...] += jnp.dot(pred_t.astype(jnp.bfloat16), hw_w_ref[...],
                        preferred_element_type=jnp.float32)      # (B, N_PAD)

    # ---- finalize head on the last tile (pred never leaves VMEM) ----
    @pl.when(j == nt - 1)
    def _():
        pred = jnp.concatenate([pred_s[tt] for tt in range(nt)], axis=-1)  # (B, N_PAD)
        h = h_s[...] + hw_b_ref[...]
        s = jax.nn.sigmoid(h)
        gated = s * jnp.maximum(h, 0.0) + (1.0 - s) * pred       # highway gate
        # Dropout is identity at inference time (eval mode).
        logits = jnp.dot(gated.astype(jnp.bfloat16), lin_w_ref[...],
                         preferred_element_type=jnp.float32) + lin_b_ref[...]  # (B, 2)
        m = jnp.max(logits, axis=-1, keepdims=True)
        z = logits - m
        o_ref[...] = z - jnp.log(jnp.sum(jnp.exp(z), axis=-1, keepdims=True))


def _fused_forward(x2, w_all, b_all, tmax, hw_w, hw_b, lin_w, lin_b):
    B, S, K = x2.shape
    nt = N_PAD // TILE_N
    flops = 2 * B * S * K * N_PAD + 2 * B * N_PAD * N_PAD + 2 * B * N_PAD * 2
    bytes_accessed = (x2.size * 2 + w_all.size * 2 + hw_w.size * 2 + lin_w.size * 2
                      + (b_all.size + tmax.size + hw_b.size + lin_b.size + B * 2) * 4)
    return pl.pallas_call(
        _fused_kernel,
        out_shape=jax.ShapeDtypeStruct((B, 2), jnp.float32),
        grid_spec=pltpu.PrefetchScalarGridSpec(
            num_scalar_prefetch=0,
            grid=(nt,),
            in_specs=[
                pl.BlockSpec((B, S, K), lambda j: (0, 0, 0)),     # im2col slab (stays resident)
                pl.BlockSpec((K, TILE_N), lambda j: (0, j)),      # packed conv weights (streamed)
                pl.BlockSpec((1, TILE_N), lambda j: (0, j)),      # conv bias
                pl.BlockSpec((1, TILE_N), lambda j: (0, j)),      # last valid t per column
                pl.BlockSpec((TILE_N, N_PAD), lambda j: (j, 0)),  # highway weight rows (streamed)
                pl.BlockSpec((1, N_PAD), lambda j: (0, 0)),       # highway bias
                pl.BlockSpec((N_PAD, 2), lambda j: (0, 0)),       # final linear weight
                pl.BlockSpec((1, 2), lambda j: (0, 0)),           # final linear bias
            ],
            out_specs=pl.BlockSpec((B, 2), lambda j: (0, 0)),
            scratch_shapes=[
                pltpu.VMEM((nt, B, TILE_N), jnp.float32),         # pred tiles
                pltpu.VMEM((B, N_PAD), jnp.float32),              # highway pre-activation acc
            ],
        ),
        compiler_params=pltpu.CompilerParams(dimension_semantics=("arbitrary",)),
        cost_estimate=pl.CostEstimate(
            flops=int(flops),
            transcendentals=int(B * N_PAD + 3 * B),
            bytes_accessed=int(bytes_accessed)),
    )(x2, w_all, b_all, tmax, hw_w, hw_b, lin_w, lin_b)


# ---------------------------------------------------------------------------
# Parameters (uniform(-0.05, 0.05) like init_parameters()) + packing to the
# fused / padded / bf16 layout the kernel consumes.
# ---------------------------------------------------------------------------
def init_raw_params(key, total_locations, embedding_dim=EMBED_DIM):
    keys = list(jax.random.split(key, 1 + 2 * len(NUM_FILTERS) + 4))
    ki = iter(keys)
    u = lambda k, shape: jax.random.uniform(k, shape, jnp.float32, -0.05, 0.05)
    return {
        "embedding": u(next(ki), (total_locations, embedding_dim)),
        "convs": [(u(next(ki), (f, embedding_dim, n)), u(next(ki), (n,)))
                  for n, f in zip(NUM_FILTERS, FILTER_SIZES)],
        "hw_w": u(next(ki), (N_TOTAL, N_TOTAL)),   # stored (in, out): y = x @ W + b
        "hw_b": u(next(ki), (N_TOTAL,)),
        "lin_w": u(next(ki), (N_TOTAL, 2)),
        "lin_b": u(next(ki), (2,)),
    }


def pack_params(raw):
    """Zero-pad taps to F_MAX, concatenate branches into one (F_MAX*D, N_PAD) weight and
    pad the head to the lane-dense width N_PAD (padding is inert: all zeros)."""
    w_all = jnp.zeros((K_IM2COL, N_PAD), jnp.float32)
    b_all = jnp.zeros((1, N_PAD), jnp.float32)
    off = 0
    for (w, b), f, n in zip(raw["convs"], FILTER_SIZES, NUM_FILTERS):
        w_all = w_all.at[: f * EMBED_DIM, off:off + n].set(w.reshape(f * EMBED_DIM, n))
        b_all = b_all.at[0, off:off + n].set(b)
        off += n
    hw_w = jnp.zeros((N_PAD, N_PAD), jnp.float32).at[:N_TOTAL, :N_TOTAL].set(raw["hw_w"])
    hw_b = jnp.zeros((1, N_PAD), jnp.float32).at[0, :N_TOTAL].set(raw["hw_b"])
    lin_w = jnp.zeros((N_PAD, 2), jnp.float32).at[:N_TOTAL, :].set(raw["lin_w"])
    lin_b = raw["lin_b"].reshape(1, 2)
    return {
        "embedding": raw["embedding"],
        "w_all": w_all.astype(jnp.bfloat16),
        "b_all": b_all,
        "hw_w": hw_w.astype(jnp.bfloat16),
        "hw_b": hw_b,
        "lin_w": lin_w.astype(jnp.bfloat16),
        "lin_b": lin_b,
    }


# ---------------------------------------------------------------------------
# Forward pass (embedding gather + im2col in XLA glue, everything else fused)
# ---------------------------------------------------------------------------
@jax.jit
def recover_cnn_forward(params, x):
    # x: (B, S) int32 location ids -> (B, 2) log-probs
    B, S = x.shape
    assert S >= F_MAX, "sequence must be at least as long as the largest filter (20)"
    emb = jnp.take(params["embedding"], x, axis=0)                       # (B, S, D) f32
    emb_pad = jnp.pad(emb, ((0, 0), (0, F_MAX - 1), (0, 0)))
    x2 = jnp.concatenate([emb_pad[:, k:k + S, :] for k in range(F_MAX)],
                         axis=-1).astype(jnp.bfloat16)                   # (B, S, F_MAX*D)
    tmax = jnp.asarray([S - f for f in _F_PER_COL], jnp.int32).reshape(1, N_PAD)
    return _fused_forward(x2, params["w_all"], params["b_all"], tmax,
                          params["hw_w"], params["hw_b"],
                          params["lin_w"], params["lin_b"])


# ---------------------------------------------------------------------------
# Pure-JAX f32 reference (mirrors the PyTorch forward; dropout = identity)
# ---------------------------------------------------------------------------
def reference_forward(raw, x):
    emb = jnp.take(raw["embedding"], x, axis=0)
    S = x.shape[1]
    pools = []
    for (w, b), f in zip(raw["convs"], FILTER_SIZES):
        L = S - f + 1
        conv = jnp.zeros((x.shape[0], L, w.shape[-1]), jnp.float32)
        for k in range(f):
            conv = conv + jnp.einsum("bld,dn->bln", emb[:, k:k + L, :], w[k])
        conv = jnp.maximum(conv + b[None, None, :], 0.0)
        pools.append(jnp.max(conv, axis=1))
    pred = jnp.concatenate(pools, axis=1)                               # (B, 1720)
    h = pred @ raw["hw_w"] + raw["hw_b"]
    s = jax.nn.sigmoid(h)
    gated = s * jnp.maximum(h, 0.0) + (1.0 - s) * pred
    logits = gated @ raw["lin_w"] + raw["lin_b"]
    return jax.nn.log_softmax(logits, axis=-1)


if __name__ == "__main__":
    TOTAL_LOCATIONS = 64   # small synthetic vocab
    BATCH = 2
    SEQ = 24               # must be >= max filter size (20)

    key = jax.random.PRNGKey(0)
    k_params, k_x = jax.random.split(key)
    raw = init_raw_params(k_params, TOTAL_LOCATIONS, EMBED_DIM)
    params = pack_params(raw)
    x = jax.random.randint(k_x, (BATCH, SEQ), 0, TOTAL_LOCATIONS, dtype=jnp.int32)

    out = jax.block_until_ready(recover_cnn_forward(params, x))
    assert out.shape == (BATCH, 2)
    assert bool(jnp.all(jnp.isfinite(out)))
    # log_softmax rows exponentiate-sum to 1
    assert jnp.allclose(jnp.sum(jnp.exp(out), axis=-1), 1.0, atol=1e-3)
    # matches the pure-JAX f32 reference up to bf16 weight/activation rounding
    ref = reference_forward(raw, x)
    assert jnp.allclose(out, ref, atol=5e-2)
    print("KERNEL_OK")
</pallas_src>

<mosaic_0001>
module attributes {stable_mosaic.version = 11 : i64} {
  func.func @_fused_kernel(%arg0: i32, %arg1: memref<2x24x1280xbf16, #tpu.memory_space<vmem>>, %arg2: memref<1280x256xbf16, #tpu.memory_space<vmem>>, %arg3: memref<1x256xf32, #tpu.memory_space<vmem>>, %arg4: memref<1x256xi32, #tpu.memory_space<vmem>>, %arg5: memref<256x1792xbf16, #tpu.memory_space<vmem>>, %arg6: memref<1x1792xf32, #tpu.memory_space<vmem>>, %arg7: memref<1792x2xbf16, #tpu.memory_space<vmem>>, %arg8: memref<1x2xf32, #tpu.memory_space<vmem>>, %arg9: memref<2x2xf32, #tpu.memory_space<vmem>>, %arg10: memref<7x2x256xf32, #tpu.memory_space<vmem>>, %arg11: memref<2x1792xf32, #tpu.memory_space<vmem>>) attributes {dimension_semantics = [#tpu.dimension_semantics<arbitrary>], iteration_bounds = array<i64: 7>, scalar_prefetch = 0 : i64, scratch_operands = 2 : i64, tpu.core_type = #tpu.core_type<tc>, window_params = [{pipeline_mode = #tpu.pipeline_mode<synchronous>, transform_indices = @transform_0, window_bounds = array<i64: 2, 24, 1280>}, {transform_indices = @transform_1, window_bounds = array<i64: 1280, 256>}, {transform_indices = @transform_2, window_bounds = array<i64: 1, 256>}, {transform_indices = @transform_3, window_bounds = array<i64: 1, 256>}, {transform_indices = @transform_4, window_bounds = array<i64: 256, 1792>}, {pipeline_mode = #tpu.pipeline_mode<synchronous>, transform_indices = @transform_5, window_bounds = array<i64: 1, 1792>}, {pipeline_mode = #tpu.pipeline_mode<synchronous>, transform_indices = @transform_6, window_bounds = array<i64: 1792, 2>}, {pipeline_mode = #tpu.pipeline_mode<synchronous>, transform_indices = @transform_7, window_bounds = array<i64: 1, 2>}, {pipeline_mode = #tpu.pipeline_mode<synchronous>, transform_indices = @transform_8, window_bounds = array<i64: 2, 2>}]} {
    %c0 = arith.constant 0 : index
    %c0_0 = arith.constant 0 : index
    %c0_1 = arith.constant 0 : index
    %0 = vector.load %arg1[%c0, %c0_0, %c0_1] : memref<2x24x1280xbf16, #tpu.memory_space<vmem>>, vector<2x24x1280xbf16>
    %c0_2 = arith.constant 0 : index
    %c0_3 = arith.constant 0 : index
    %1 = vector.load %arg2[%c0_2, %c0_3] : memref<1280x256xbf16, #tpu.memory_space<vmem>>, vector<1280x256xbf16>
    "tpu.trace_start"() <{level = 10 : i32, message = "bsk,kn->bsn"}> : () -> ()
    %cst = arith.constant dense<0.000000e+00> : vector<2x24x256xf32>
    %2 = tpu.matmul %0, %1, %cst {dimension_numbers = #tpu.dot_dimension_numbers<[2], [0], [0, 1], [1], [0, 0, 0, 1, 1, 1], [], []>} : vector<2x24x1280xbf16>, vector<1280x256xbf16>, vector<2x24x256xf32> -> vector<2x24x256xf32>
    "tpu.trace_stop"() : () -> ()
    %3 = tpu.iota {dimensions = array<i32: 0>} : vector<24x256xi32>
    %c0_4 = arith.constant 0 : index
    %c0_5 = arith.constant 0 : index
    %4 = vector.load %arg4[%c0_4, %c0_5] : memref<1x256xi32, #tpu.memory_space<vmem>>, vector<1x256xi32>
    %5 = vector.broadcast %4 : vector<1x256xi32> to vector<24x256xi32>
    %6 = arith.cmpi sle, %3, %5 : vector<24x256xi32>
    %7 = vector.shape_cast %6 : vector<24x256xi1> to vector<1x24x256xi1>
    %cst_6 = arith.constant 0xFF800000 : f32
    %8 = vector.shape_cast %7 : vector<1x24x256xi1> to vector<1x24x256xi1>
    %9 = vector.broadcast %8 : vector<1x24x256xi1> to vector<2x24x256xi1>
    %10 = vector.broadcast %cst_6 : f32 to vector<2x24x256xf32>
    %11 = arith.select %9, %2, %10 : vector<2x24x256xi1>, vector<2x24x256xf32>
    %cst_7 = arith.constant dense<0xFF800000> : vector<2x256xf32>
    %12 = vector.multi_reduction <maximumf>, %11, %cst_7 [1] : vector<2x24x256xf32> to vector<2x256xf32>
    %c0_8 = arith.constant 0 : index
    %c0_9 = arith.constant 0 : index
    %13 = vector.load %arg3[%c0_8, %c0_9] : memref<1x256xf32, #tpu.memory_space<vmem>>, vector<1x256xf32>
    %14 = vector.broadcast %13 : vector<1x256xf32> to vector<2x256xf32>
    %15 = arith.addf %12, %14 : vector<2x256xf32>
    %cst_10 = arith.constant 0.000000e+00 : f32
    %16 = vector.broadcast %cst_10 : f32 to vector<2x256xf32>
    %17 = arith.maximumf %15, %16 : vector<2x256xf32>
    %18 = arith.index_cast %arg0 : i32 to index
    %c0_11 = arith.constant 0 : index
    %c0_12 = arith.constant 0 : index
    %19 = vector.load %arg10[%18, %c0_11, %c0_12] : memref<7x2x256xf32, #tpu.memory_space<vmem>>, vector<1x2x256xf32>
    %20 = vector.shape_cast %19 : vector<1x2x256xf32> to vector<2x256xf32>
    %21 = vector.shape_cast %17 : vector<2x256xf32> to vector<1x2x256xf32>
    tpu.vector_store %arg10[%18, %c0_11, %c0_12], %21 {strides = array<i32>} : memref<7x2x256xf32, #tpu.memory_space<vmem>>, vector<1x2x256xf32>,
    %c0_i32 = arith.constant 0 : i32
    %22 = arith.cmpi eq, %arg0, %c0_i32 : i32
    %23 = arith.extui %22 : i1 to i32
    %c0_i32_13 = arith.constant 0 : i32
    %24 = arith.cmpi ne, %23, %c0_i32_13 : i32
    scf.if %24 {
      %cst_22 = arith.constant 0.000000e+00 : f32
      %34 = vector.broadcast %cst_22 : f32 to vector<2x1792xf32>
      %c0_23 = arith.constant 0 : index
      %c0_24 = arith.constant 0 : index
      %35 = vector.load %arg11[%c0_23, %c0_24] : memref<2x1792xf32, #tpu.memory_space<vmem>>, vector<2x1792xf32>
      tpu.vector_store %arg11[%c0_23, %c0_24], %34 {strides = array<i32>} : memref<2x1792xf32, #tpu.memory_space<vmem>>, vector<2x1792xf32>,
    } else {
    }
    %c0_14 = arith.constant 0 : index
    %c0_15 = arith.constant 0 : index
    %25 = vector.load %arg11[%c0_14, %c0_15] : memref<2x1792xf32, #tpu.memory_space<vmem>>, vector<2x1792xf32>
    %26 = arith.truncf %17 : vector<2x256xf32> to vector<2x256xbf16>
    %c0_16 = arith.constant 0 : index
    %c0_17 = arith.constant 0 : index
    %27 = vector.load %arg5[%c0_16, %c0_17] : memref<256x1792xbf16, #tpu.memory_space<vmem>>, vector<256x1792xbf16>
    %cst_18 = arith.constant dense<0.000000e+00> : vector<2x1792xf32>
    %28 = tpu.matmul %26, %27, %cst_18 {dimension_numbers = #tpu.dot_dimension_numbers<[1], [0], [0], [1], [0, 0, 1, 1], [], []>} : vector<2x256xbf16>, vector<256x1792xbf16>, vector<2x1792xf32> -> vector<2x1792xf32>
    %29 = arith.addf %25, %28 : vector<2x1792xf32>
    %c0_19 = arith.constant 0 : index
    %c0_20 = arith.constant 0 : index
    %30 = vector.load %arg11[%c0_19, %c0_20] : memref<2x1792xf32, #tpu.memory_space<vmem>>, vector<2x1792xf32>
    tpu.vector_store %arg11[%c0_19, %c0_20], %29 {strides = array<i32>} : memref<2x1792xf32, #tpu.memory_space<vmem>>, vector<2x1792xf32>,
    %c6_i32 = arith.constant 6 : i32
    %31 = arith.cmpi eq, %arg0, %c6_i32 : i32
    %32 = arith.extui %31 : i1 to i32
    %c0_i32_21 = arith.constant 0 : i32
    %33 = arith.cmpi ne, %32, %c0_i32_21 : i32
    scf.if %33 {
      %c0_22 = arith.constant 0 : index
      %c0_23 = arith.constant 0 : index
      %c0_24 = arith.constant 0 : index
      %34 = vector.load %arg10[%c0_22, %c0_23, %c0_24] : memref<7x2x256xf32, #tpu.memory_space<vmem>>, vector<1x2x256xf32>
      %35 = vector.shape_cast %34 : vector<1x2x256xf32> to vector<2x256xf32>
      %c1 = arith.constant 1 : index
      %c0_25 = arith.constant 0 : index
      %c0_26 = arith.constant 0 : index
      %36 = vector.load %arg10[%c1, %c0_25, %c0_26] : memref<7x2x256xf32, #tpu.memory_space<vmem>>, vector<1x2x256xf32>
      %37 = vector.shape_cast %36 : vector<1x2x256xf32> to vector<2x256xf32>
      %c2 = arith.constant 2 : index
      %c0_27 = arith.constant 0 : index
      %c0_28 = arith.constant 0 : index
      %38 = vector.load %arg10[%c2, %c0_27, %c0_28] : memref<7x2x256xf32, #tpu.memory_space<vmem>>, vector<1x2x256xf32>
      %39 = vector.shape_cast %38 : vector<1x2x256xf32> to vector<2x256xf32>
      %c3 = arith.constant 3 : index
      %c0_29 = arith.constant 0 : index
      %c0_30 = arith.constant 0 : index
      %40 = vector.load %arg10[%c3, %c0_29, %c0_30] : memref<7x2x256xf32, #tpu.memory_space<vmem>>, vector<1x2x256xf32>
      %41 = vector.shape_cast %40 : vector<1x2x256xf32> to vector<2x256xf32>
      %c4 = arith.constant 4 : index
      %c0_31 = arith.constant 0 : index
      %c0_32 = arith.constant 0 : index
      %42 = vector.load %arg10[%c4, %c0_31, %c0_32] : memref<7x2x256xf32, #tpu.memory_space<vmem>>, vector<1x2x256xf32>
      %43 = vector.shape_cast %42 : vector<1x2x256xf32> to vector<2x256xf32>
      %c5 = arith.constant 5 : index
      %c0_33 = arith.constant 0 : index
      %c0_34 = arith.constant 0 : index
      %44 = vector.load %arg10[%c5, %c0_33, %c0_34] : memref<7x2x256xf32, #tpu.memory_space<vmem>>, vector<1x2x256xf32>
      %45 = vector.shape_cast %44 : vector<1x2x256xf32> to vector<2x256xf32>
      %c6 = arith.constant 6 : index
      %c0_35 = arith.constant 0 : index
      %c0_36 = arith.constant 0 : index
      %46 = vector.load %arg10[%c6, %c0_35, %c0_36] : memref<7x2x256xf32, #tpu.memory_space<vmem>>, vector<1x2x256xf32>
      %47 = vector.shape_cast %46 : vector<1x2x256xf32> to vector<2x256xf32>
      %48 = tpu.concatenate %35, %37, %39, %41, %43, %45, %47 in 1 : vector<2x256xf32>, vector<2x256xf32>, vector<2x256xf32>, vector<2x256xf32>, vector<2x256xf32>, vector<2x256xf32>, vector<2x256xf32> -> vector<2x1792xf32>
      %c0_37 = arith.constant 0 : index
      %c0_38 = arith.constant 0 : index
      %49 = vector.load %arg11[%c0_37, %c0_38] : memref<2x1792xf32, #tpu.memory_space<vmem>>, vector<2x1792xf32>
      %c0_39 = arith.constant 0 : index
      %c0_40 = arith.constant 0 : index
      %50 = vector.load %arg6[%c0_39, %c0_40] : memref<1x1792xf32, #tpu.memory_space<vmem>>, vector<1x1792xf32>
      %51 = vector.broadcast %50 : vector<1x1792xf32> to vector<2x1792xf32>
      %52 = arith.addf %49, %51 : vector<2x1792xf32>
      %53 = arith.negf %52 : vector<2x1792xf32>
      %54 = math.exp %53 : vector<2x1792xf32>
      %cst_41 = arith.constant 1.000000e+00 : f32
      %55 = vector.broadcast %cst_41 : f32 to vector<2x1792xf32>
      %56 = arith.addf %55, %54 : vector<2x1792xf32>
      %57 = arith.divf %55, %56 : vector<2x1792xf32>
      %cst_42 = arith.constant 0.000000e+00 : f32
      %58 = vector.broadcast %cst_42 : f32 to vector<2x1792xf32>
      %59 = arith.maximumf %52, %58 : vector<2x1792xf32>
      %60 = arith.mulf %57, %59 : vector<2x1792xf32>
      %cst_43 = arith.constant 1.000000e+00 : f32
      %61 = vector.broadcast %cst_43 : f32 to vector<2x1792xf32>
      %62 = arith.subf %61, %57 : vector<2x1792xf32>
      %63 = arith.mulf %62, %48 : vector<2x1792xf32>
      %64 = arith.addf %60, %63 : vector<2x1792xf32>
      %65 = arith.truncf %64 : vector<2x1792xf32> to vector<2x1792xbf16>
      %c0_44 = arith.constant 0 : index
      %c0_45 = arith.constant 0 : index
      %66 = vector.load %arg7[%c0_44, %c0_45] : memref<1792x2xbf16, #tpu.memory_space<vmem>>, vector<1792x2xbf16>
      %cst_46 = arith.constant dense<0.000000e+00> : vector<2x2xf32>
      %67 = tpu.matmul %65, %66, %cst_46 {dimension_numbers = #tpu.dot_dimension_numbers<[1], [0], [0], [1], [0, 0, 1, 1], [], []>} : vector<2x1792xbf16>, vector<1792x2xbf16>, vector<2x2xf32> -> vector<2x2xf32>
      %c0_47 = arith.constant 0 : index
      %c0_48 = arith.constant 0 : index
      %68 = vector.load %arg8[%c0_47, %c0_48] : memref<1x2xf32, #tpu.memory_space<vmem>>, vector<1x2xf32>
      %69 = vector.broadcast %68 : vector<1x2xf32> to vector<2x2xf32>
      %70 = arith.addf %67, %69 : vector<2x2xf32>
      %cst_49 = arith.constant dense<0xFF800000> : vector<2xf32>
      %71 = vector.multi_reduction <maximumf>, %70, %cst_49 [1] : vector<2x2xf32> to vector<2xf32>
      %72 = vector.shape_cast %71 : vector<2xf32> to vector<2x1xf32>
      %73 = vector.broadcast %72 : vector<2x1xf32> to vector<2x2xf32>
      %74 = arith.subf %70, %73 : vector<2x2xf32>
      %75 = math.exp %74 : vector<2x2xf32>
      %cst_50 = arith.constant dense<0.000000e+00> : vector<2xf32>
      %76 = vector.multi_reduction <add>, %75, %cst_50 [1] : vector<2x2xf32> to vector<2xf32>
      %77 = vector.shape_cast %76 : vector<2xf32> to vector<2x1xf32>
      %78 = math.log %77 : vector<2x1xf32>
      %79 = vector.broadcast %78 : vector<2x1xf32> to vector<2x2xf32>
      %80 = arith.subf %74, %79 : vector<2x2xf32>
      %c0_51 = arith.constant 0 : index
      %c0_52 = arith.constant 0 : index
      %81 = vector.load %arg9[%c0_51, %c0_52] : memref<2x2xf32, #tpu.memory_space<vmem>>, vector<2x2xf32>
      tpu.vector_store %arg9[%c0_51, %c0_52], %80 {strides = array<i32>} : memref<2x2xf32, #tpu.memory_space<vmem>>, vector<2x2xf32>,
    } else {
    }
    return
  }
  func.func @transform_0(%arg0: i32) -> (i32, i32, i32) {
    %c0_i32 = arith.constant 0 : i32
    %c0_i32_0 = arith.constant 0 : i32
    %c0_i32_1 = arith.constant 0 : i32
    %c0_i32_2 = arith.constant 0 : i32
    return %c0_i32, %c0_i32_0, %c0_i32_1 : i32, i32, i32
  }
  func.func @transform_1(%arg0: i32) -> (i32, i32) {
    %c0_i32 = arith.constant 0 : i32
    %c0_i32_0 = arith.constant 0 : i32
    return %c0_i32, %arg0 : i32, i32
  }
  func.func @transform_2(%arg0: i32) -> (i32, i32) {
    %c0_i32 = arith.constant 0 : i32
    %c0_i32_0 = arith.constant 0 : i32
    return %c0_i32, %arg0 : i32, i32
  }
  func.func @transform_3(%arg0: i32) -> (i32, i32) {
    %c0_i32 = arith.constant 0 : i32
    %c0_i32_0 = arith.constant 0 : i32
    return %c0_i32, %arg0 : i32, i32
  }
  func.func @transform_4(%arg0: i32) -> (i32, i32) {
    %c0_i32 = arith.constant 0 : i32
    %c0_i32_0 = arith.constant 0 : i32
    return %arg0, %c0_i32 : i32, i32
  }
  func.func @transform_5(%arg0: i32) -> (i32, i32) {
    %c0_i32 = arith.constant 0 : i32
    %c0_i32_0 = arith.constant 0 : i32
    %c0_i32_1 = arith.constant 0 : i32
    return %c0_i32, %c0_i32_0 : i32, i32
  }
  func.func @transform_6(%arg0: i32) -> (i32, i32) {
    %c0_i32 = arith.constant 0 : i32
    %c0_i32_0 = arith.constant 0 : i32
    %c0_i32_1 = arith.constant 0 : i32
    return %c0_i32, %c0_i32_0 : i32, i32
  }
  func.func @transform_7(%arg0: i32) -> (i32, i32) {
    %c0_i32 = arith.constant 0 : i32
    %c0_i32_0 = arith.constant 0 : i32
    %c0_i32_1 = arith.constant 0 : i32
    return %c0_i32, %c0_i32_0 : i32, i32
  }
  func.func @transform_8(%arg0: i32) -> (i32, i32) {
    %c0_i32 = arith.constant 0 : i32
    %c0_i32_0 = arith.constant 0 : i32
    %c0_i32_1 = arith.constant 0 : i32
    return %c0_i32, %c0_i32_0 : i32, i32
  }
}

</mosaic_0001>

<llo_original>
// kernel: recover_cnn_forward.1
$region0: #{recover_cnn_forward.1}
  #allocation0 [shape = 'u32[]', space=smem, size = 0x4, offset = 0x4, fixed_abs, tag = 'smem constant byte address 0x4 - core index']
  #allocation1 [shape = 'u32[144,128]{1,0:T(1,128)}', space=vmem, size = 0x12000, scoped, tag = 'internal scratch']
  #allocation2 [shape = 'f32[7,2,256]{2,1,0:T(2,128)}', space=vmem, size = 0x3800, scoped, tag = 'scratch operand']
  #allocation3 [shape = 'f32[2,1792]{1,0:T(2,128)}', space=vmem, size = 0x3800, scoped, tag = 'scratch operand']
  %s0 = inlined_call_operand.vmem [shape: bf16[2,24,1280], index: 0, kind: input, shape index: {}]
  %s1 = inlined_call_operand.hbm [shape: bf16[1280,1792], index: 1, kind: input, shape index: {}]
  %s2 = inlined_call_operand.hbm [shape: f32[1,1792], index: 2, kind: input, shape index: {}]
  %s3 = inlined_call_operand.hbm [shape: s32[1,1792], index: 3, kind: input, shape index: {}]
  %s4 = inlined_call_operand.hbm [shape: bf16[1792,1792], index: 4, kind: input, shape index: {}]
  %s5 = inlined_call_operand.hbm [shape: f32[1,1792], index: 5, kind: input, shape index: {}]
  %s6 = inlined_call_operand.vmem [shape: bf16[1792,2], index: 6, kind: input, shape index: {}]
  %s7 = inlined_call_operand.hbm [shape: f32[1,2], index: 7, kind: input, shape index: {}]
  %s8 = inlined_call_operand.hbm [shape: f32[2,2], index: 8, kind: output, shape index: {}]
  %s9 = sld [smem:[#allocation0]]
  $region97: #{recover_cnn_forward.1} parent=0
    _
  %s11 = ssub.s32 1, %s9
  %s12 = scalar_select 0, %s11, %s9
  $region1: #{recover_cnn_forward.1} parent=0
    #allocation4 [shape = 'u8[1310720]{0}', space=vmem, size = 0x140000, scoped, tag = 'input window, operand 1']
    #allocation5 [shape = 's32[2]{0}', space=sflag, size = 0x8, scoped, tag = 'scoped memory for recover_cnn_forward.1']
    #allocation6 [shape = 's32[2]{0}', space=sflag, size = 0x8, scoped, tag = 'scoped memory for recover_cnn_forward.1']
    #allocation7 [shape = 'u8[2048]{0}', space=vmem, size = 0x800, scoped, tag = 'input window, operand 2']
    #allocation8 [shape = 's32[2]{0}', space=sflag, size = 0x8, scoped, tag = 'scoped memory for recover_cnn_forward.1']
    #allocation9 [shape = 'u8[2048]{0}', space=vmem, size = 0x800, scoped, tag = 'input window, operand 3']
    #allocation10 [shape = 'u8[1835008]{0}', space=vmem, size = 0x1c0000, scoped, tag = 'input window, operand 4']
    #allocation11 [shape = 's32[2]{0}', space=sflag, size = 0x8, scoped, tag = 'scoped memory for recover_cnn_forward.1']
    #allocation12 [shape = 'u8[7168]{0}', space=vmem, size = 0x1c00, scoped, tag = 'input window, operand 5, single buffered']
    #allocation13 [shape = 'u8[512]{0}', space=vmem, size = 0x400, scoped, tag = 'input window, operand 7, single buffered']
    #allocation14 [shape = 's32[1]{0}', space=sflag, size = 0x4, scoped, tag = 'scoped memory for recover_cnn_forward.1']
    #allocation15 [shape = 'u8[1024]{0}', space=vmem, size = 0x400, scoped, tag = 'output window, operand 0, single buffered']
    %13 = vsyncpa [#allocation5], 0
    %s14 = scalar_lea.sflag [#allocation5], 1
    %15 = vsyncpa %s14, 0
    %16 = vsyncpa [#allocation8], 0
    %s17 = scalar_lea.sflag [#allocation8], 1
    %18 = vsyncpa %s17, 0
    %19 = vsyncpa [#allocation11], 0
    %s20 = scalar_lea.sflag [#allocation11], 1
    %21 = vsyncpa %s20, 0
    %22 = vsyncpa [#allocation14], 0
    %23 = vsyncpa [#allocation6], 0
    loop: start=0, step=1, limit=9
    $region2: #{recover_cnn_forward.1} parent=1 // loop_pre_header
      _
    $region3: #{recover_cnn_forward.1} parent=1 // loop_header
      %s25 = sphi 0, %s29
      %p26 = scmp.ge.s32.totalorder %s25, 9
      %s33 = sphi 0, %s33
      %s35 = sphi 0, %s33
      %s36 = sphi 0, %s35
      %s50 = sphi 0, %s36
      %s56 = sphi 0, %s58
      %s59 = sphi 0, %s56
      %s60 = sphi 0, %s59
      %s76 = sphi 0, %s60
      %s82 = sphi 0, %s84
      %s85 = sphi 0, %s82
      %s86 = sphi 0, %s85
      %s102 = sphi 0, %s86
      %s108 = sphi 0, %s110
      %s111 = sphi 0, %s108
      %s112 = sphi 0, %s111
      %s128 = sphi 0, %s112
      %s134 = sphi 0, %s136
      %s137 = sphi 0, %s134
      %s138 = sphi 0, %s137
      %s154 = sphi 0, %s138
      %s158 = sphi 0, %s158
      %s160 = sphi 0, %s158
      %s161 = sphi 0, %s160
      %s175 = sphi 0, %s161
      %s179 = sphi 0, %s179
      %s181 = sphi 0, %s179
      %s182 = sphi 0, %s181
      %s196 = sphi 0, %s182
      %s200 = sphi 0, %s200
      %s202 = sphi 0, %s200
      %s203 = sphi 0, %s202
      %s217 = sphi 0, %s203
      %s221 = sphi 0, %s221
      %s223 = sphi 0, %s221
      %s224 = sphi 0, %s223
      %s238 = sphi 0, %s224
    $region4: #{recover_cnn_forward.1} parent=1 // loop_header_branch
      %28 = sbr.rel (%p26) target = $region8
    $region5: #{recover_cnn_forward.1} parent=1 // loop_body
      %s30 = ssub.s32 %s25, 1
      %s31 = ssub.s32 %s25, 2
      %s32 = sadd.s32 %s25, 1
      %s34 = sadd.s32 %s33, 1
      %p37 = scmp.eq.s32.totalorder %s25, 6
      %p38 = scmp.ne.s32.totalorder %s33, %s35
      %p39 = scmp.eq.s32.totalorder %s25, 0
      %p40 = por %p38, %p39
      %p41 = scmp.ne.s32.totalorder %s33, %s35
      %p42 = scmp.eq.s32.totalorder %s30, 6
      %p43 = por %p41, %p42
      %p44 = scmp.ne.s32.totalorder %s35, %s36
      %p45 = scmp.eq.s32.totalorder %s30, 0
      %p46 = por %p44, %p45
      %p47 = scmp.ne.s32.totalorder %s35, %s36
      %p48 = scmp.eq.s32.totalorder %s31, 6
      %p49 = por %p47, %p48
      %p51 = scmp.ne.s32.totalorder %s36, %s50
      %p52 = scmp.eq.s32.totalorder %s31, 0
      %p53 = por %p51, %p52
      %s54 = ssub.s32 %s25, %s32
      %p55 = scmp.eq.s32.totalorder %s54, 0
      %s57 = sadd.s32 %s56, 1
      %s58 = scalar_select %p55, %s56, %s57
      %p61 = pneg %p55
      %p62 = scmp.eq.s32.totalorder %s25, 6
      %p63 = por %p61, %p62
      %p64 = scmp.ne.s32.totalorder %s56, %s59
      %p65 = scmp.eq.s32.totalorder %s25, 0
      %p66 = por %p64, %p65
      %p67 = scmp.ne.s32.totalorder %s56, %s59
      %p68 = scmp.eq.s32.totalorder %s30, 6
      %p69 = por %p67, %p68
      %p70 = scmp.ne.s32.totalorder %s59, %s60
      %p71 = scmp.eq.s32.totalorder %s30, 0
      %p72 = por %p70, %p71
      %p73 = scmp.ne.s32.totalorder %s59, %s60
      %p74 = scmp.eq.s32.totalorder %s31, 6
      %p75 = por %p73, %p74
      %p77 = scmp.ne.s32.totalorder %s60, %s76
      %p78 = scmp.eq.s32.totalorder %s31, 0
      %p79 = por %p77, %p78
      %s80 = ssub.s32 %s25, %s32
      %p81 = scmp.eq.s32.totalorder %s80, 0
      %s83 = sadd.s32 %s82, 1
      %s84 = scalar_select %p81, %s82, %s83
      %p87 = pneg %p81
      %p88 = scmp.eq.s32.totalorder %s25, 6
      %p89 = por %p87, %p88
      %p90 = scmp.ne.s32.totalorder %s82, %s85
      %p91 = scmp.eq.s32.totalorder %s25, 0
      %p92 = por %p90, %p91
      %p93 = scmp.ne.s32.totalorder %s82, %s85
      %p94 = scmp.eq.s32.totalorder %s30, 6
      %p95 = por %p93, %p94
      %p96 = scmp.ne.s32.totalorder %s85, %s86
      %p97 = scmp.eq.s32.totalorder %s30, 0
      %p98 = por %p96, %p97
      %p99 = scmp.ne.s32.totalorder %s85, %s86
      %p100 = scmp.eq.s32.totalorder %s31, 6
      %p101 = por %p99, %p100
      %p103 = scmp.ne.s32.totalorder %s86, %s102
      %p104 = scmp.eq.s32.totalorder %s31, 0
      %p105 = por %p103, %p104
      %s106 = ssub.s32 %s25, %s32
      %p107 = scmp.eq.s32.totalorder %s106, 0
      %s109 = sadd.s32 %s108, 1
      %s110 = scalar_select %p107, %s108, %s109
      %p113 = pneg %p107
      %p114 = scmp.eq.s32.totalorder %s25, 6
      %p115 = por %p113, %p114
      %p116 = scmp.ne.s32.totalorder %s108, %s111
      %p117 = scmp.eq.s32.totalorder %s25, 0
      %p118 = por %p116, %p117
      %p119 = scmp.ne.s32.totalorder %s108, %s111
      %p120 = scmp.eq.s32.totalorder %s30, 6
      %p121 = por %p119, %p120
      %p122 = scmp.ne.s32.totalorder %s111, %s112
      %p123 = scmp.eq.s32.totalorder %s30, 0
      %p124 = por %p122, %p123
      %p125 = scmp.ne.s32.totalorder %s111, %s112
      %p126 = scmp.eq.s32.totalorder %s31, 6
      %p127 = por %p125, %p126
      %p129 = scmp.ne.s32.totalorder %s112, %s128
      %p130 = scmp.eq.s32.totalorder %s31, 0
      %p131 = por %p129, %p130
      %s132 = ssub.s32 %s25, %s32
      %p133 = scmp.eq.s32.totalorder %s132, 0
      %s135 = sadd.s32 %s134, 1
      %s136 = scalar_select %p133, %s134, %s135
      %p139 = pneg %p133
      %p140 = scmp.eq.s32.totalorder %s25, 6
      %p141 = por %p139, %p140
      %p142 = scmp.ne.s32.totalorder %s134, %s137
      %p143 = scmp.eq.s32.totalorder %s25, 0
      %p144 = por %p142, %p143
      %p145 = scmp.ne.s32.totalorder %s134, %s137
      %p146 = scmp.eq.s32.totalorder %s30, 6
      %p147 = por %p145, %p146
      %p148 = scmp.ne.s32.totalorder %s137, %s138
      %p149 = scmp.eq.s32.totalorder %s30, 0
      %p150 = por %p148, %p149
      %p151 = scmp.ne.s32.totalorder %s137, %s138
      %p152 = scmp.eq.s32.totalorder %s31, 6
      %p153 = por %p151, %p152
      %p155 = scmp.ne.s32.totalorder %s138, %s154
      %p156 = scmp.eq.s32.totalorder %s31, 0
      %p157 = por %p155, %p156
      %s159 = sadd.s32 %s158, 1
      %p162 = scmp.eq.s32.totalorder %s25, 6
      %p163 = scmp.ne.s32.totalorder %s158, %s160
      %p164 = scmp.eq.s32.totalorder %s25, 0
      %p165 = por %p163, %p164
      %p166 = scmp.ne.s32.totalorder %s158, %s160
      %p167 = scmp.eq.s32.totalorder %s30, 6
      %p168 = por %p166, %p167
      %p169 = scmp.ne.s32.totalorder %s160, %s161
      %p170 = scmp.eq.s32.totalorder %s30, 0
      %p171 = por %p169, %p170
      %p172 = scmp.ne.s32.totalorder %s160, %s161
      %p173 = scmp.eq.s32.totalorder %s31, 6
      %p174 = por %p172, %p173
      %p176 = scmp.ne.s32.totalorder %s161, %s175
      %p177 = scmp.eq.s32.totalorder %s31, 0
      %p178 = por %p176, %p177
      %s180 = sadd.s32 %s179, 1
      %p183 = scmp.eq.s32.totalorder %s25, 6
      %p184 = scmp.ne.s32.totalorder %s179, %s181
      %p185 = scmp.eq.s32.totalorder %s25, 0
      %p186 = por %p184, %p185
      %p187 = scmp.ne.s32.totalorder %s179, %s181
      %p188 = scmp.eq.s32.totalorder %s30, 6
      %p189 = por %p187, %p188
      %p190 = scmp.ne.s32.totalorder %s181, %s182
      %p191 = scmp.eq.s32.totalorder %s30, 0
      %p192 = por %p190, %p191
      %p193 = scmp.ne.s32.totalorder %s181, %s182
      %p194 = scmp.eq.s32.totalorder %s31, 6
      %p195 = por %p193, %p194
      %p197 = scmp.ne.s32.totalorder %s182, %s196
      %p198 = scmp.eq.s32.totalorder %s31, 0
      %p199 = por %p197, %p198
      %s201 = sadd.s32 %s200, 1
      %p204 = scmp.eq.s32.totalorder %s25, 6
      %p205 = scmp.ne.s32.totalorder %s200, %s202
      %p206 = scmp.eq.s32.totalorder %s25, 0
      %p207 = por %p205, %p206
      %p208 = scmp.ne.s32.totalorder %s200, %s202
      %p209 = scmp.eq.s32.totalorder %s30, 6
      %p210 = por %p208, %p209
      %p211 = scmp.ne.s32.totalorder %s202, %s203
      %p212 = scmp.eq.s32.totalorder %s30, 0
      %p213 = por %p211, %p212
      %p214 = scmp.ne.s32.totalorder %s202, %s203
      %p215 = scmp.eq.s32.totalorder %s31, 6
      %p216 = por %p214, %p215
      %p218 = scmp.ne.s32.totalorder %s203, %s217
      %p219 = scmp.eq.s32.totalorder %s31, 0
      %p220 = por %p218, %p219
      %s222 = sadd.s32 %s221, 1
      %p225 = scmp.eq.s32.totalorder %s25, 6
      %p226 = scmp.ne.s32.totalorder %s221, %s223
      %p227 = scmp.eq.s32.totalorder %s25, 0
      %p228 = por %p226, %p227
      %p229 = scmp.ne.s32.totalorder %s221, %s223
      %p230 = scmp.eq.s32.totalorder %s30, 6
      %p231 = por %p229, %p230
      %p232 = scmp.ne.s32.totalorder %s223, %s224
      %p233 = scmp.eq.s32.totalorder %s30, 0
      %p234 = por %p232, %p233
      %p235 = scmp.ne.s32.totalorder %s223, %s224
      %p236 = scmp.eq.s32.totalorder %s31, 6
      %p237 = por %p235, %p236
      %p239 = scmp.ne.s32.totalorder %s224, %s238
      %p240 = scmp.eq.s32.totalorder %s31, 0
      %p241 = por %p239, %p240
      %p242 = scmp.le.s32.totalorder 1, %s25
      %p243 = scmp.lt.s32.totalorder %s25, 8
      %p244 = pnand %p242, %p243
      %p245 = pneg %p244
      // Predicated region
      $region9: #{recover_cnn_forward.1} parent=5 // pred_check
        _
      $region10: #{recover_cnn_forward.1} parent=5 // pred_check_branch
        %247 = sbr.rel (%p244) target = $region12
      $region11: #{recover_cnn_forward.1} parent=5 // pred_region
        %s248 = ssub.s32 %s25, 1
        // Predicated region
        $region13: #{recover_cnn_forward.1} parent=11 // pred_check
          %p249 = pneg %p46
        $region14: #{recover_cnn_forward.1} parent=11 // pred_check_branch
          %251 = sbr.rel (%p249) target = $region16
        $region15: #{recover_cnn_forward.1} parent=11 // pred_region
          _
        $region16: #{recover_cnn_forward.1} parent=11 // pred_fallthru
          _
        // Predicated region
        $region17: #{recover_cnn_forward.1} parent=11 // pred_check
          %p252 = pneg %p171
        $region18: #{recover_cnn_forward.1} parent=11 // pred_check_branch
          %254 = sbr.rel (%p252) target = $region20
        $region19: #{recover_cnn_forward.1} parent=11 // pred_region
          %s256 = ssub.s32 224, 224
          %257 = vsyncadd [#allocation11], %s256
          %s259 = sshll.u32 [#allocation12], 4
          %s260 = int_to_ptr.vmem [resolvable:$true] %s259
          %262 = dma.hbm_to_vmem [thread:$0]  %s5, 224, %s260, [#allocation11]
        $region20: #{recover_cnn_forward.1} parent=11 // pred_fallthru
          _
        // Predicated region
        $region21: #{recover_cnn_forward.1} parent=11 // pred_check
          %p263 = pneg %p192
        $region22: #{recover_cnn_forward.1} parent=11 // pred_check_branch
          %265 = sbr.rel (%p263) target = $region24
        $region23: #{recover_cnn_forward.1} parent=11 // pred_region
          _
        $region24: #{recover_cnn_forward.1} parent=11 // pred_fallthru
          _
        // Predicated region
        $region25: #{recover_cnn_forward.1} parent=11 // pred_check
          %p266 = pneg %p213
        $region26: #{recover_cnn_forward.1} parent=11 // pred_check_branch
          %268 = sbr.rel (%p266) target = $region28
        $region27: #{recover_cnn_forward.1} parent=11 // pred_region
          %s270 = ssub.s32 16, 16
          %271 = vsyncadd [#allocation14], %s270
          %s273 = sshll.u32 [#allocation13], 4
          %s274 = int_to_ptr.vmem [resolvable:$true] %s273
          %276 = dma.hbm_to_vmem [thread:$0]  %s7, 16, %s274, [#allocation14]
        $region28: #{recover_cnn_forward.1} parent=11 // pred_fallthru
          _
      $region12: #{recover_cnn_forward.1} parent=5 // pred_fallthru
        _
      %p277 = scmp.lt.s32.totalorder %s25, 7
      // Predicated region
      $region29: #{recover_cnn_forward.1} parent=5 // pred_check
        %p278 = pneg %p277
      $region30: #{recover_cnn_forward.1} parent=5 // pred_check_branch
        %280 = sbr.rel (%p278) target = $region32
      $region31: #{recover_cnn_forward.1} parent=5 // pred_region
        // Predicated region
        $region33: #{recover_cnn_forward.1} parent=31 // pred_check
          %p281 = pneg %p66
        $region34: #{recover_cnn_forward.1} parent=31 // pred_check_branch
          %283 = sbr.rel (%p281) target = $region36
        $region35: #{recover_cnn_forward.1} parent=31 // pred_region
          %s284 = sand.u32 %s56, 1
          %s285 = scalar_lea.sflag [#allocation5], %s284
          %s286 = sand.u32 %s56, 1
          %s287 = smul.addr %s286, 1280
          %s288 = scalar_lea.vmem [#allocation4], %s287
          %s289 = smul.u32 2, %s25
          %s291 = ssub.s32 20480, 20480
          %292 = vsyncadd %s285, %s291
          %s293 = smul.addr %s289, 64
          %s294 = scalar_lea.hbm %s1, %s293
          %s295 = sshll.u32 %s288, 4
          %s296 = int_to_ptr.vmem [resolvable:$true] %s295
          %301 = dma.hbm_to_vmem [thread:$0]  %s294, 20480, %s296, %s285, 896, 128, 8
        $region36: #{recover_cnn_forward.1} parent=31 // pred_fallthru
          _
        // Predicated region
        $region37: #{recover_cnn_forward.1} parent=31 // pred_check
          %p302 = pneg %p92
        $region38: #{recover_cnn_forward.1} parent=31 // pred_check_branch
          %304 = sbr.rel (%p302) target = $region40
        $region39: #{recover_cnn_forward.1} parent=31 // pred_region
          %s305 = sand.u32 %s25, 1
          %s306 = scalar_lea.sflag [#allocation8], %s305
          %s307 = sand.u32 %s82, 1
          %s308 = smul.addr %s307, 2
          %s309 = scalar_lea.vmem [#allocation7], %s308
          %s310 = smul.u32 2, %s25
          %s312 = ssub.s32 32, 32
          %313 = vsyncadd %s306, %s312
          %s314 = smul.addr %s310, 16
          %s315 = scalar_lea.hbm %s2, %s314
          %s317 = sshll.u32 %s309, 4
          %s318 = int_to_ptr.vmem [resolvable:$true] %s317
          %320 = dma.hbm_to_vmem [thread:$0]  %s315, 32, %s318, %s306
        $region40: #{recover_cnn_forward.1} parent=31 // pred_fallthru
          _
        // Predicated region
        $region41: #{recover_cnn_forward.1} parent=31 // pred_check
          %p321 = pneg %p118
        $region42: #{recover_cnn_forward.1} parent=31 // pred_check_branch
          %323 = sbr.rel (%p321) target = $region44
        $region43: #{recover_cnn_forward.1} parent=31 // pred_region
          %s324 = sand.u32 %s25, 1
          %s325 = scalar_lea.sflag [#allocation8], %s324
          %s326 = sand.u32 %s108, 1
          %s327 = smul.addr %s326, 2
          %s328 = scalar_lea.vmem [#allocation9], %s327
          %s329 = smul.u32 2, %s25
          %s331 = ssub.s32 32, 32
          %332 = vsyncadd %s325, %s331
          %s333 = smul.addr %s329, 16
          %s334 = scalar_lea.hbm %s3, %s333
          %s336 = sshll.u32 %s328, 4
          %s337 = int_to_ptr.vmem [resolvable:$true] %s336
          %339 = dma.hbm_to_vmem [thread:$0]  %s334, 32, %s337, %s325
        $region44: #{recover_cnn_forward.1} parent=31 // pred_fallthru
          _
        // Predicated region
        $region45: #{recover_cnn_forward.1} parent=31 // pred_check
          %p340 = pneg %p144
        $region46: #{recover_cnn_forward.1} parent=31 // pred_check_branch
          %342 = sbr.rel (%p340) target = $region48
        $region47: #{recover_cnn_forward.1} parent=31 // pred_region
          %s343 = sand.u32 %s25, 1
          %s344 = scalar_lea.sflag [#allocation11], %s343
          %s345 = sand.u32 %s134, 1
          %s346 = smul.addr %s345, 1792
          %s347 = scalar_lea.vmem [#allocation10], %s346
          %s348 = smul.u32 32, %s25
          %s350 = ssub.s32 28672, 28672
          %351 = vsyncadd %s344, %s350
          %s352 = smul.addr %s348, 14
          %s353 = smul.addr %s352, 64
          %s354 = scalar_lea.hbm %s4, %s353
          %s355 = sshll.u32 %s347, 4
          %s356 = int_to_ptr.vmem [resolvable:$true] %s355
          %361 = dma.hbm_to_vmem [thread:$0]  %s354, 28672, %s356, %s344, 896, 896, 56
        $region48: #{recover_cnn_forward.1} parent=31 // pred_fallthru
          _
      $region32: #{recover_cnn_forward.1} parent=5 // pred_fallthru
        _
      %p362 = scmp.le.s32.totalorder 1, %s25
      %p363 = scmp.lt.s32.totalorder %s25, 8
      %p364 = pnand %p362, %p363
      %p365 = pneg %p364
      // Predicated region
      $region49: #{recover_cnn_forward.1} parent=5 // pred_check
        _
      $region50: #{recover_cnn_forward.1} parent=5 // pred_check_branch
        %367 = sbr.rel (%p364) target = $region52
      $region51: #{recover_cnn_forward.1} parent=5 // pred_region
        %s368 = ssub.s32 %s25, 1
        %s369 = sand.u32 %s59, 1
        %s370 = scalar_lea.sflag [#allocation5], %s369
        %s371 = sand.u32 %s59, 1
        %s372 = smul.addr %s371, 1280
        %s373 = scalar_lea.vmem [#allocation4], %s372
        // Predicated region
        $region53: #{recover_cnn_forward.1} parent=51 // pred_check
          %p374 = pneg %p72
        $region54: #{recover_cnn_forward.1} parent=51 // pred_check_branch
          %376 = sbr.rel (%p374) target = $region56
        $region55: #{recover_cnn_forward.1} parent=51 // pred_region
          %377 = dma.done %s370, 20480
        $region56: #{recover_cnn_forward.1} parent=51 // pred_fallthru
          _
        %s378 = sand.u32 %s30, 1
        %s379 = scalar_lea.sflag [#allocation8], %s378
        %s380 = sand.u32 %s85, 1
        %s381 = smul.addr %s380, 2
        %s382 = scalar_lea.vmem [#allocation7], %s381
        // Predicated region
        $region57: #{recover_cnn_forward.1} parent=51 // pred_check
          %p383 = pneg %p98
        $region58: #{recover_cnn_forward.1} parent=51 // pred_check_branch
          %385 = sbr.rel (%p383) target = $region60
        $region59: #{recover_cnn_forward.1} parent=51 // pred_region
          %386 = dma.done %s379, 32
        $region60: #{recover_cnn_forward.1} parent=51 // pred_fallthru
          _
        %s387 = sand.u32 %s30, 1
        %s388 = scalar_lea.sflag [#allocation8], %s387
        %s389 = sand.u32 %s111, 1
        %s390 = smul.addr %s389, 2
        %s391 = scalar_lea.vmem [#allocation9], %s390
        // Predicated region
        $region61: #{recover_cnn_forward.1} parent=51 // pred_check
          %p392 = pneg %p124
        $region62: #{recover_cnn_forward.1} parent=51 // pred_check_branch
          %394 = sbr.rel (%p392) target = $region64
        $region63: #{recover_cnn_forward.1} parent=51 // pred_region
          %395 = dma.done %s388, 32
        $region64: #{recover_cnn_forward.1} parent=51 // pred_fallthru
          _
        %s396 = sand.u32 %s30, 1
        %s397 = scalar_lea.sflag [#allocation11], %s396
        %s398 = sand.u32 %s137, 1
        %s399 = smul.addr %s398, 1792
        %s400 = scalar_lea.vmem [#allocation10], %s399
        // Predicated region
        $region65: #{recover_cnn_forward.1} parent=51 // pred_check
          %p401 = pneg %p150
        $region66: #{recover_cnn_forward.1} parent=51 // pred_check_branch
          %403 = sbr.rel (%p401) target = $region68
        $region67: #{recover_cnn_forward.1} parent=51 // pred_region
          %404 = dma.done %s397, 28672
        $region68: #{recover_cnn_forward.1} parent=51 // pred_fallthru
          _
        // Predicated region
        $region69: #{recover_cnn_forward.1} parent=51 // pred_check
          %p405 = pneg %p171
        $region70: #{recover_cnn_forward.1} parent=51 // pred_check_branch
          %407 = sbr.rel (%p405) target = $region72
        $region71: #{recover_cnn_forward.1} parent=51 // pred_region
          %408 = dma.done [#allocation11], 224
        $region72: #{recover_cnn_forward.1} parent=51 // pred_fallthru
          _
        // Predicated region
        $region73: #{recover_cnn_forward.1} parent=51 // pred_check
          %p409 = pneg %p213
        $region74: #{recover_cnn_forward.1} parent=51 // pred_check_branch
          %411 = sbr.rel (%p409) target = $region76
        $region75: #{recover_cnn_forward.1} parent=51 // pred_region
          %412 = dma.done [#allocation14], 16
        $region76: #{recover_cnn_forward.1} parent=51 // pred_fallthru
          _
        %p413 = pneg %p46
        %p414 = pneg %p43
        %s415 = sand.u32 %s59, 1
        %s416 = scalar_lea.sflag [#allocation5], %s415
        %s417 = sand.u32 %s59, 1
        %s418 = smul.addr %s417, 1280
        %s419 = scalar_lea.vmem [#allocation4], %s418
        %p420 = pneg %p72
        %p421 = pneg %p69
        %s422 = sand.u32 %s30, 1
        %s423 = scalar_lea.sflag [#allocation8], %s422
        %s424 = sand.u32 %s85, 1
        %s425 = smul.addr %s424, 2
        %s426 = scalar_lea.vmem [#allocation7], %s425
        %p427 = pneg %p98
        %p428 = pneg %p95
        %s429 = sand.u32 %s30, 1
        %s430 = scalar_lea.sflag [#allocation8], %s429
        %s431 = sand.u32 %s111, 1
        %s432 = smul.addr %s431, 2
        %s433 = scalar_lea.vmem [#allocation9], %s432
        %p434 = pneg %p124
        %p435 = pneg %p121
        %s436 = sand.u32 %s30, 1
        %s437 = scalar_lea.sflag [#allocation11], %s436
        %s438 = sand.u32 %s137, 1
        %s439 = smul.addr %s438, 1792
        %s440 = scalar_lea.vmem [#allocation10], %s439
        %p441 = pneg %p150
        %p442 = pneg %p147
        %p443 = pneg %p171
        %p444 = pneg %p168
        %p445 = pneg %p192
        %p446 = pneg %p189
        %p447 = pneg %p213
        %p448 = pneg %p210
        %p449 = pneg %p234
        %p450 = pneg %p231
        %s451 = smul.u32 2, %s30
        %s452 = smul.u32 2, %s30
        %s453 = smul.u32 2, %s30
        %s454 = smul.u32 32, %s30
        %v456 = vld [vmem:[%s0] sm:$0xff]
        %v457 = vld [vmem:[%s0 + $0x8] sm:$0xff]
        %v458 = vld [vmem:[%s0 + $0x10] sm:$0xff]
        %v459 = vld [vmem:[%s0 + $0x18] sm:$0xff]
        %v460 = vld [vmem:[%s0 + $0x20] sm:$0xff]
        %v461 = vld [vmem:[%s0 + $0x28] sm:$0xff]
        %v462 = vld [vmem:[%s0 + $0x30] sm:$0xff]
        %v463 = vld [vmem:[%s0 + $0x38] sm:$0xff]
        %v464 = vld [vmem:[%s0 + $0x40] sm:$0xff]
        %v465 = vld [vmem:[%s0 + $0x48] sm:$0xff]
        %v466 = vld [vmem:[%s0 + $0x50] sm:$0xff]
        %v467 = vld [vmem:[%s0 + $0x58] sm:$0xff]
        %v468 = vld [vmem:[%s0 + $0x60] sm:$0xff]
        %v469 = vld [vmem:[%s0 + $0x68] sm:$0xff]
        %v470 = vld [vmem:[%s0 + $0x70] sm:$0xff]
        %v471 = vld [vmem:[%s0 + $0x78] sm:$0xff]
        %v472 = vld [vmem:[%s0 + $0x80] sm:$0xff]
        %v473 = vld [vmem:[%s0 + $0x88] sm:$0xff]
        %v474 = vld [vmem:[%s0 + $0x90] sm:$0xff]
        %v475 = vld [vmem:[%s0 + $0x98] sm:$0xff]
        %v476 = vld [vmem:[%s0 + $0xa0] sm:$0xff]
        %v477 = vld [vmem:[%s0 + $0xa8] sm:$0xff]
        %v478 = vld [vmem:[%s0 + $0xb0] sm:$0xff]
        %v479 = vld [vmem:[%s0 + $0xb8] sm:$0xff]
        %v480 = vld [vmem:[%s0 + $0xc0] sm:$0xff]
        %v481 = vld [vmem:[%s0 + $0xc8] sm:$0xff]
        %v482 = vld [vmem:[%s0 + $0xd0] sm:$0xff]
        %v483 = vld [vmem:[%s0 + $0xd8] sm:$0xff]
        %v484 = vld [vmem:[%s0 + $0xe0] sm:$0xff]
        %v485 = vld [vmem:[%s0 + $0xe8] sm:$0xff]
        %v486 = vld [vmem:[%s373] sm:$0xff]
        %v487 = vld [vmem:[%s373 + $0x8] sm:$0xff]
        %v488 = vld [vmem:[%s373 + $0x10] sm:$0xff]
        %v489 = vld [vmem:[%s373 + $0x18] sm:$0xff]
        %v490 = vld [vmem:[%s373 + $0x20] sm:$0xff]
        %v491 = vld [vmem:[%s373 + $0x28] sm:$0xff]
        %v492 = vld [vmem:[%s373 + $0x30] sm:$0xff]
        %v493 = vld [vmem:[%s373 + $0x38] sm:$0xff]
        %v494 = vld [vmem:[%s373 + $0x40] sm:$0xff]
        %v495 = vld [vmem:[%s373 + $0x48] sm:$0xff]
        %v496 = vld [vmem:[%s373 + $0x50] sm:$0xff]
        %v497 = vld [vmem:[%s373 + $0x58] sm:$0xff]
        %v498 = vld [vmem:[%s373 + $0x60] sm:$0xff]
        %v499 = vld [vmem:[%s373 + $0x68] sm:$0xff]
        %v500 = vld [vmem:[%s373 + $0x70] sm:$0xff]
        %v501 = vld [vmem:[%s373 + $0x78] sm:$0xff]
        %v502 = vld [vmem:[%s373 + $0x80] sm:$0xff]
        %v503 = vld [vmem:[%s373 + $0x88] sm:$0xff]
        %v504 = vld [vmem:[%s373 + $0x90] sm:$0xff]
        %v505 = vld [vmem:[%s373 + $0x98] sm:$0xff]
        %v506 = vld [vmem:[%s373 + $0xa0] sm:$0xff]
        %v507 = vld [vmem:[%s373 + $0xa8] sm:$0xff]
        %v508 = vld [vmem:[%s373 + $0xb0] sm:$0xff]
        %v509 = vld [vmem:[%s373 + $0xb8] sm:$0xff]
        %v510 = vld [vmem:[%s373 + $0xc0] sm:$0xff]
        %v511 = vld [vmem:[%s373 + $0xc8] sm:$0xff]
        %v512 = vld [vmem:[%s373 + $0xd0] sm:$0xff]
        %v513 = vld [vmem:[%s373 + $0xd8] sm:$0xff]
        %v514 = vld [vmem:[%s373 + $0xe0] sm:$0xff]
        %v515 = vld [vmem:[%s373 + $0xe8] sm:$0xff]
        %v516 = vld [vmem:[%s373 + $0xf0] sm:$0xff]
        %v517 = vld [vmem:[%s373 + $0xf8] sm:$0xff]
        %v518 = vld [vmem:[%s373 + $0x100] sm:$0xff]
        %v519 = vld [vmem:[%s373 + $0x108] sm:$0xff]
        %v520 = vld [vmem:[%s373 + $0x110] sm:$0xff]
        %v521 = vld [vmem:[%s373 + $0x118] sm:$0xff]
        %v522 = vld [vmem:[%s373 + $0x120] sm:$0xff]
        %v523 = vld [vmem:[%s373 + $0x128] sm:$0xff]
        %v524 = vld [vmem:[%s373 + $0x130] sm:$0xff]
        %v525 = vld [vmem:[%s373 + $0x138] sm:$0xff]
        %v526 = vld [vmem:[%s373 + $0x140] sm:$0xff]
        %v527 = vld [vmem:[%s373 + $0x148] sm:$0xff]
        %v528 = vld [vmem:[%s373 + $0x150] sm:$0xff]
        %v529 = vld [vmem:[%s373 + $0x158] sm:$0xff]
        %v530 = vld [vmem:[%s373 + $0x160] sm:$0xff]
        %v531 = vld [vmem:[%s373 + $0x168] sm:$0xff]
        %v532 = vld [vmem:[%s373 + $0x170] sm:$0xff]
        %v533 = vld [vmem:[%s373 + $0x178] sm:$0xff]
        %v534 = vld [vmem:[%s373 + $0x180] sm:$0xff]
        %v535 = vld [vmem:[%s373 + $0x188] sm:$0xff]
        %v536 = vld [vmem:[%s373 + $0x190] sm:$0xff]
        %v537 = vld [vmem:[%s373 + $0x198] sm:$0xff]
        %v538 = vld [vmem:[%s373 + $0x1a0] sm:$0xff]
        %v539 = vld [vmem:[%s373 + $0x1a8] sm:$0xff]
        %v540 = vld [vmem:[%s373 + $0x1b0] sm:$0xff]
        %v541 = vld [vmem:[%s373 + $0x1b8] sm:$0xff]
        %v542 = vld [vmem:[%s373 + $0x1c0] sm:$0xff]
        %v543 = vld [vmem:[%s373 + $0x1c8] sm:$0xff]
        %v544 = vld [vmem:[%s373 + $0x1d0] sm:$0xff]
        %v545 = vld [vmem:[%s373 + $0x1d8] sm:$0xff]
        %v546 = vld [vmem:[%s373 + $0x1e0] sm:$0xff]
        %v547 = vld [vmem:[%s373 + $0x1e8] sm:$0xff]
        %v548 = vld [vmem:[%s373 + $0x1f0] sm:$0xff]
        %v549 = vld [vmem:[%s373 + $0x1f8] sm:$0xff]
        %v550 = vld [vmem:[%s373 + $0x200] sm:$0xff]
        %v551 = vld [vmem:[%s373 + $0x208] sm:$0xff]
        %v552 = vld [vmem:[%s373 + $0x210] sm:$0xff]
        %v553 = vld [vmem:[%s373 + $0x218] sm:$0xff]
        %v554 = vld [vmem:[%s373 + $0x220] sm:$0xff]
        %v555 = vld [vmem:[%s373 + $0x228] sm:$0xff]
        %v556 = vld [vmem:[%s373 + $0x230] sm:$0xff]
        %v557 = vld [vmem:[%s373 + $0x238] sm:$0xff]
        %v558 = vld [vmem:[%s373 + $0x240] sm:$0xff]
        %v559 = vld [vmem:[%s373 + $0x248] sm:$0xff]
        %v560 = vld [vmem:[%s373 + $0x250] sm:$0xff]
        %v561 = vld [vmem:[%s373 + $0x258] sm:$0xff]
        %v562 = vld [vmem:[%s373 + $0x260] sm:$0xff]
        %v563 = vld [vmem:[%s373 + $0x268] sm:$0xff]
        %v564 = vld [vmem:[%s373 + $0x270] sm:$0xff]
        %v565 = vld [vmem:[%s373 + $0x278] sm:$0xff]
        %v566 = vld [vmem:[%s373 + $0x280] sm:$0xff]
        %v567 = vld [vmem:[%s373 + $0x288] sm:$0xff]
        %v568 = vld [vmem:[%s373 + $0x290] sm:$0xff]
        %v569 = vld [vmem:[%s373 + $0x298] sm:$0xff]
        %v570 = vld [vmem:[%s373 + $0x2a0] sm:$0xff]
        %v571 = vld [vmem:[%s373 + $0x2a8] sm:$0xff]
        %v572 = vld [vmem:[%s373 + $0x2b0] sm:$0xff]
        %v573 = vld [vmem:[%s373 + $0x2b8] sm:$0xff]
        %v574 = vld [vmem:[%s373 + $0x2c0] sm:$0xff]
        %v575 = vld [vmem:[%s373 + $0x2c8] sm:$0xff]
        %v576 = vld [vmem:[%s373 + $0x2d0] sm:$0xff]
        %v577 = vld [vmem:[%s373 + $0x2d8] sm:$0xff]
        %v578 = vld [vmem:[%s373 + $0x2e0] sm:$0xff]
        %v579 = vld [vmem:[%s373 + $0x2e8] sm:$0xff]
        %v580 = vld [vmem:[%s373 + $0x2f0] sm:$0xff]
        %v581 = vld [vmem:[%s373 + $0x2f8] sm:$0xff]
        %v582 = vld [vmem:[%s373 + $0x300] sm:$0xff]
        %v583 = vld [vmem:[%s373 + $0x308] sm:$0xff]
        %v584 = vld [vmem:[%s373 + $0x310] sm:$0xff]
        %v585 = vld [vmem:[%s373 + $0x318] sm:$0xff]
        %v586 = vld [vmem:[%s373 + $0x320] sm:$0xff]
        %v587 = vld [vmem:[%s373 + $0x328] sm:$0xff]
        %v588 = vld [vmem:[%s373 + $0x330] sm:$0xff]
        %v589 = vld [vmem:[%s373 + $0x338] sm:$0xff]
        %v590 = vld [vmem:[%s373 + $0x340] sm:$0xff]
        %v591 = vld [vmem:[%s373 + $0x348] sm:$0xff]
        %v592 = vld [vmem:[%s373 + $0x350] sm:$0xff]
        %v593 = vld [vmem:[%s373 + $0x358] sm:$0xff]
        %v594 = vld [vmem:[%s373 + $0x360] sm:$0xff]
        %v595 = vld [vmem:[%s373 + $0x368] sm:$0xff]
        %v596 = vld [vmem:[%s373 + $0x370] sm:$0xff]
        %v597 = vld [vmem:[%s373 + $0x378] sm:$0xff]
        %v598 = vld [vmem:[%s373 + $0x380] sm:$0xff]
        %v599 = vld [vmem:[%s373 + $0x388] sm:$0xff]
        %v600 = vld [vmem:[%s373 + $0x390] sm:$0xff]
        %v601 = vld [vmem:[%s373 + $0x398] sm:$0xff]
        %v602 = vld [vmem:[%s373 + $0x3a0] sm:$0xff]
        %v603 = vld [vmem:[%s373 + $0x3a8] sm:$0xff]
        %v604 = vld [vmem:[%s373 + $0x3b0] sm:$0xff]
        %v605 = vld [vmem:[%s373 + $0x3b8] sm:$0xff]
        %v606 = vld [vmem:[%s373 + $0x3c0] sm:$0xff]
        %v607 = vld [vmem:[%s373 + $0x3c8] sm:$0xff]
        %v608 = vld [vmem:[%s373 + $0x3d0] sm:$0xff]
        %v609 = vld [vmem:[%s373 + $0x3d8] sm:$0xff]
        %v610 = vld [vmem:[%s373 + $0x3e0] sm:$0xff]
        %v611 = vld [vmem:[%s373 + $0x3e8] sm:$0xff]
        %v612 = vld [vmem:[%s373 + $0x3f0] sm:$0xff]
        %v613 = vld [vmem:[%s373 + $0x3f8] sm:$0xff]
        %v614 = vld [vmem:[%s373 + $0x400] sm:$0xff]
        %v615 = vld [vmem:[%s373 + $0x408] sm:$0xff]
        %v616 = vld [vmem:[%s373 + $0x410] sm:$0xff]
        %v617 = vld [vmem:[%s373 + $0x418] sm:$0xff]
        %v618 = vld [vmem:[%s373 + $0x420] sm:$0xff]
        %v619 = vld [vmem:[%s373 + $0x428] sm:$0xff]
        %v620 = vld [vmem:[%s373 + $0x430] sm:$0xff]
        %v621 = vld [vmem:[%s373 + $0x438] sm:$0xff]
        %v622 = vld [vmem:[%s373 + $0x440] sm:$0xff]
        %v623 = vld [vmem:[%s373 + $0x448] sm:$0xff]
        %v624 = vld [vmem:[%s373 + $0x450] sm:$0xff]
        %v625 = vld [vmem:[%s373 + $0x458] sm:$0xff]
        %v626 = vld [vmem:[%s373 + $0x460] sm:$0xff]
        %v627 = vld [vmem:[%s373 + $0x468] sm:$0xff]
        %v628 = vld [vmem:[%s373 + $0x470] sm:$0xff]
        %v629 = vld [vmem:[%s373 + $0x478] sm:$0xff]
        %v630 = vld [vmem:[%s373 + $0x480] sm:$0xff]
        %v631 = vld [vmem:[%s373 + $0x488] sm:$0xff]
        %v632 = vld [vmem:[%s373 + $0x490] sm:$0xff]
        %v633 = vld [vmem:[%s373 + $0x498] sm:$0xff]
        %v634 = vld [vmem:[%s373 + $0x4a0] sm:$0xff]
        %v635 = vld [vmem:[%s373 + $0x4a8] sm:$0xff]
        %v636 = vld [vmem:[%s373 + $0x4b0] sm:$0xff]
        %v637 = vld [vmem:[%s373 + $0x4b8] sm:$0xff]
        %v638 = vld [vmem:[%s373 + $0x4c0] sm:$0xff]
        %v639 = vld [vmem:[%s373 + $0x4c8] sm:$0xff]
        %v640 = vld [vmem:[%s373 + $0x4d0] sm:$0xff]
        %v641 = vld [vmem:[%s373 + $0x4d8] sm:$0xff]
        %v642 = vld [vmem:[%s373 + $0x4e0] sm:$0xff]
        %v643 = vld [vmem:[%s373 + $0x4e8] sm:$0xff]
        %v644 = vld [vmem:[%s373 + $0x4f0] sm:$0xff]
        %v645 = vld [vmem:[%s373 + $0x4f8] sm:$0xff]
        %v676 = vunpack.c.l.b16 %v456
        %v677 = vunpack.c.h.b16 %v456
        %v678 = vunpack.c.l.b16 %v457
        %v679 = vunpack.c.h.b16 %v457
        %v680 = vunpack.c.l.b16 %v458
        %v681 = vunpack.c.h.b16 %v458
        %v682 = vunpack.c.l.b16 %v459
        %v683 = vunpack.c.h.b16 %v459
        %v684 = vunpack.c.l.b16 %v460
        %v685 = vunpack.c.h.b16 %v460
        %v686 = vunpack.c.l.b16 %v461
        %v687 = vunpack.c.h.b16 %v461
        %v688 = vunpack.c.l.b16 %v462
        %v689 = vunpack.c.h.b16 %v462
        %v690 = vunpack.c.l.b16 %v463
        %v691 = vunpack.c.h.b16 %v463
        %v692 = vunpack.c.l.b16 %v464
        %v693 = vunpack.c.h.b16 %v464
        %v694 = vunpack.c.l.b16 %v465
        %v695 = vunpack.c.h.b16 %v465
        %v696 = vunpack.c.l.b16 %v466
        %v697 = vunpack.c.h.b16 %v466
        %v698 = vunpack.c.l.b16 %v467
        %v699 = vunpack.c.h.b16 %v467
        %v700 = vunpack.c.l.b16 %v468
        %v701 = vunpack.c.h.b16 %v468
        %v702 = vunpack.c.l.b16 %v469
        %v703 = vunpack.c.h.b16 %v469
        %v704 = vunpack.c.l.b16 %v470
        %v705 = vunpack.c.h.b16 %v470
        %v706 = vunpack.c.l.b16 %v471
        %v707 = vunpack.c.h.b16 %v471
        %v708 = vunpack.c.l.b16 %v472
        %v709 = vunpack.c.h.b16 %v472
        %v710 = vunpack.c.l.b16 %v473
        %v711 = vunpack.c.h.b16 %v473
        %v712 = vunpack.c.l.b16 %v474
        %v713 = vunpack.c.h.b16 %v474
        %v714 = vunpack.c.l.b16 %v475
        %v715 = vunpack.c.h.b16 %v475
        %v716 = vunpack.c.l.b16 %v476
        %v717 = vunpack.c.h.b16 %v476
        %v718 = vunpack.c.l.b16 %v477
        %v719 = vunpack.c.h.b16 %v477
        %v720 = vunpack.c.l.b16 %v478
        %v721 = vunpack.c.h.b16 %v478
        %v722 = vunpack.c.l.b16 %v479
        %v723 = vunpack.c.h.b16 %v479
        %v724 = vunpack.c.l.b16 %v480
        %v725 = vunpack.c.h.b16 %v480
        %v726 = vunpack.c.l.b16 %v481
        %v727 = vunpack.c.h.b16 %v481
        %v728 = vunpack.c.l.b16 %v482
        %v729 = vunpack.c.h.b16 %v482
        %v730 = vunpack.c.l.b16 %v483
        %v731 = vunpack.c.h.b16 %v483
        %v732 = vunpack.c.l.b16 %v484
        %v733 = vunpack.c.h.b16 %v484
        %v734 = vunpack.c.l.b16 %v485
        %v735 = vunpack.c.h.b16 %v485
        %v736 = vpack.c.b16 %v686, %v676
        %v737 = vpack.c.b16 %v687, %v677
        %v738 = vpack.c.b16 %v688, %v678
        %v739 = vpack.c.b16 %v689, %v679
        %v740 = vpack.c.b16 %v690, %v680
        %v741 = vpack.c.b16 %v691, %v681
        %v742 = vpack.c.b16 %v692, %v682
        %v743 = vpack.c.b16 %v693, %v683
        %v744 = vpack.c.b16 %v694, %v684
        %v745 = vpack.c.b16 %v695, %v685
        %v746 = vpack.c.b16 %v706, %v696
        %v747 = vpack.c.b16 %v707, %v697
        %v748 = vpack.c.b16 %v708, %v698
        %v749 = vpack.c.b16 %v709, %v699
        %v750 = vpack.c.b16 %v710, %v700
        %v751 = vpack.c.b16 %v711, %v701
        %v752 = vpack.c.b16 %v712, %v702
        %v753 = vpack.c.b16 %v713, %v703
        %v754 = vpack.c.b16 %v714, %v704
        %v755 = vpack.c.b16 %v715, %v705
        %v756 = vpack.c.b16 %v726, %v716
        %v757 = vpack.c.b16 %v727, %v717
        %v758 = vpack.c.b16 %v728, %v718
        %v759 = vpack.c.b16 %v729, %v719
        %v760 = vpack.c.b16 %v730, %v720
        %v761 = vpack.c.b16 %v731, %v721
        %v762 = vpack.c.b16 %v732, %v722
        %v763 = vpack.c.b16 %v733, %v723
        %v764 = vpack.c.b16 %v734, %v724
        %v765 = vpack.c.b16 %v735, %v725
        %v956 = vunpack.c.l.b16 %v486
        %v957 = vunpack.c.h.b16 %v486
        %v958 = vunpack.c.l.b16 %v487
        %v959 = vunpack.c.h.b16 %v487
        %v960 = vunpack.c.l.b16 %v488
        %v961 = vunpack.c.h.b16 %v488
        %v962 = vunpack.c.l.b16 %v489
        %v963 = vunpack.c.h.b16 %v489
        %v964 = vunpack.c.l.b16 %v490
        %v965 = vunpack.c.h.b16 %v490
        %v966 = vunpack.c.l.b16 %v491
        %v967 = vunpack.c.h.b16 %v491
        %v968 = vunpack.c.l.b16 %v492
        %v969 = vunpack.c.h.b16 %v492
        %v970 = vunpack.c.l.b16 %v493
        %v971 = vunpack.c.h.b16 %v493
        %v972 = vunpack.c.l.b16 %v494
        %v973 = vunpack.c.h.b16 %v494
        %v974 = vunpack.c.l.b16 %v495
        %v975 = vunpack.c.h.b16 %v495
        %v976 = vunpack.c.l.b16 %v496
        %v977 = vunpack.c.h.b16 %v496
        %v978 = vunpack.c.l.b16 %v497
        %v979 = vunpack.c.h.b16 %v497
        %v980 = vunpack.c.l.b16 %v498
        %v981 = vunpack.c.h.b16 %v498
        %v982 = vunpack.c.l.b16 %v499
        %v983 = vunpack.c.h.b16 %v499
        %v984 = vunpack.c.l.b16 %v500
        %v985 = vunpack.c.h.b16 %v500
        %v986 = vunpack.c.l.b16 %v501
        %v987 = vunpack.c.h.b16 %v501
        %v988 = vunpack.c.l.b16 %v502
        %v989 = vunpack.c.h.b16 %v502
        %v990 = vunpack.c.l.b16 %v503
        %v991 = vunpack.c.h.b16 %v503
        %v992 = vunpack.c.l.b16 %v504
        %v993 = vunpack.c.h.b16 %v504
        %v994 = vunpack.c.l.b16 %v505
        %v995 = vunpack.c.h.b16 %v505
        %v996 = vunpack.c.l.b16 %v506
        %v997 = vunpack.c.h.b16 %v506
        %v998 = vunpack.c.l.b16 %v507
        %v999 = vunpack.c.h.b16 %v507
        %v1000 = vunpack.c.l.b16 %v508
        %v1001 = vunpack.c.h.b16 %v508
        %v1002 = vunpack.c.l.b16 %v509
        %v1003 = vunpack.c.h.b16 %v509
        %v1004 = vunpack.c.l.b16 %v510
        %v1005 = vunpack.c.h.b16 %v510
        %v1006 = vunpack.c.l.b16 %v511
        %v1007 = vunpack.c.h.b16 %v511
        %v1008 = vunpack.c.l.b16 %v512
        %v1009 = vunpack.c.h.b16 %v512
        %v1010 = vunpack.c.l.b16 %v513
        %v1011 = vunpack.c.h.b16 %v513
        %v1012 = vunpack.c.l.b16 %v514
        %v1013 = vunpack.c.h.b16 %v514
        %v1014 = vunpack.c.l.b16 %v515
        %v1015 = vunpack.c.h.b16 %v515
        %v1016 = vunpack.c.l.b16 %v516
        %v1017 = vunpack.c.h.b16 %v516
        %v1018 = vunpack.c.l.b16 %v517
        %v1019 = vunpack.c.h.b16 %v517
        %v1020 = vunpack.c.l.b16 %v518
        %v1021 = vunpack.c.h.b16 %v518
        %v1022 = vunpack.c.l.b16 %v519
        %v1023 = vunpack.c.h.b16 %v519
        %v1024 = vunpack.c.l.b16 %v520
        %v1025 = vunpack.c.h.b16 %v520
        %v1026 = vunpack.c.l.b16 %v521
        %v1027 = vunpack.c.h.b16 %v521
        %v1028 = vunpack.c.l.b16 %v522
        %v1029 = vunpack.c.h.b16 %v522
        %v1030 = vunpack.c.l.b16 %v523
        %v1031 = vunpack.c.h.b16 %v523
        %v1032 = vunpack.c.l.b16 %v524
        %v1033 = vunpack.c.h.b16 %v524
        %v1034 = vunpack.c.l.b16 %v525
        %v1035 = vunpack.c.h.b16 %v525
        %v1036 = vunpack.c.l.b16 %v526
        %v1037 = vunpack.c.h.b16 %v526
        %v1038 = vunpack.c.l.b16 %v527
        %v1039 = vunpack.c.h.b16 %v527
        %v1040 = vunpack.c.l.b16 %v528
        %v1041 = vunpack.c.h.b16 %v528
        %v1042 = vunpack.c.l.b16 %v529
        %v1043 = vunpack.c.h.b16 %v529
        %v1044 = vunpack.c.l.b16 %v530
        %v1045 = vunpack.c.h.b16 %v530
        %v1046 = vunpack.c.l.b16 %v531
        %v1047 = vunpack.c.h.b16 %v531
        %v1048 = vunpack.c.l.b16 %v532
        %v1049 = vunpack.c.h.b16 %v532
        %v1050 = vunpack.c.l.b16 %v533
        %v1051 = vunpack.c.h.b16 %v533
        %v1052 = vunpack.c.l.b16 %v534
        %v1053 = vunpack.c.h.b16 %v534
        %v1054 = vunpack.c.l.b16 %v535
        %v1055 = vunpack.c.h.b16 %v535
        %v1056 = vunpack.c.l.b16 %v536
        %v1057 = vunpack.c.h.b16 %v536
        %v1058 = vunpack.c.l.b16 %v537
        %v1059 = vunpack.c.h.b16 %v537
        %v1060 = vunpack.c.l.b16 %v538
        %v1061 = vunpack.c.h.b16 %v538
        %v1062 = vunpack.c.l.b16 %v539
        %v1063 = vunpack.c.h.b16 %v539
        %v1064 = vunpack.c.l.b16 %v540
        %v1065 = vunpack.c.h.b16 %v540
        %v1066 = vunpack.c.l.b16 %v541
        %v1067 = vunpack.c.h.b16 %v541
        %v1068 = vunpack.c.l.b16 %v542
        %v1069 = vunpack.c.h.b16 %v542
        %v1070 = vunpack.c.l.b16 %v543
        %v1071 = vunpack.c.h.b16 %v543
        %v1072 = vunpack.c.l.b16 %v544
        %v1073 = vunpack.c.h.b16 %v544
        %v1074 = vunpack.c.l.b16 %v545
        %v1075 = vunpack.c.h.b16 %v545
        %v1076 = vunpack.c.l.b16 %v546
        %v1077 = vunpack.c.h.b16 %v546
        %v1078 = vunpack.c.l.b16 %v547
        %v1079 = vunpack.c.h.b16 %v547
        %v1080 = vunpack.c.l.b16 %v548
        %v1081 = vunpack.c.h.b16 %v548
        %v1082 = vunpack.c.l.b16 %v549
        %v1083 = vunpack.c.h.b16 %v549
        %v1084 = vunpack.c.l.b16 %v550
        %v1085 = vunpack.c.h.b16 %v550
        %v1086 = vunpack.c.l.b16 %v551
        %v1087 = vunpack.c.h.b16 %v551
        %v1088 = vunpack.c.l.b16 %v552
        %v1089 = vunpack.c.h.b16 %v552
        %v1090 = vunpack.c.l.b16 %v553
        %v1091 = vunpack.c.h.b16 %v553
        %v1092 = vunpack.c.l.b16 %v554
        %v1093 = vunpack.c.h.b16 %v554
        %v1094 = vunpack.c.l.b16 %v555
        %v1095 = vunpack.c.h.b16 %v555
        %v1096 = vunpack.c.l.b16 %v556
        %v1097 = vunpack.c.h.b16 %v556
        %v1098 = vunpack.c.l.b16 %v557
        %v1099 = vunpack.c.h.b16 %v557
        %v1100 = vunpack.c.l.b16 %v558
        %v1101 = vunpack.c.h.b16 %v558
        %v1102 = vunpack.c.l.b16 %v559
        %v1103 = vunpack.c.h.b16 %v559
        %v1104 = vunpack.c.l.b16 %v560
        %v1105 = vunpack.c.h.b16 %v560
        %v1106 = vunpack.c.l.b16 %v561
        %v1107 = vunpack.c.h.b16 %v561
        %v1108 = vunpack.c.l.b16 %v562
        %v1109 = vunpack.c.h.b16 %v562
        %v1110 = vunpack.c.l.b16 %v563
        %v1111 = vunpack.c.h.b16 %v563
        %v1112 = vunpack.c.l.b16 %v564
        %v1113 = vunpack.c.h.b16 %v564
        %v1114 = vunpack.c.l.b16 %v565
        %v1115 = vunpack.c.h.b16 %v565
        %v1116 = vunpack.c.l.b16 %v566
        %v1117 = vunpack.c.h.b16 %v566
        %v1118 = vunpack.c.l.b16 %v567
        %v1119 = vunpack.c.h.b16 %v567
        %v1120 = vunpack.c.l.b16 %v568
        %v1121 = vunpack.c.h.b16 %v568
        %v1122 = vunpack.c.l.b16 %v569
        %v1123 = vunpack.c.h.b16 %v569
        %v1124 = vunpack.c.l.b16 %v570
        %v1125 = vunpack.c.h.b16 %v570
        %v1126 = vunpack.c.l.b16 %v571
        %v1127 = vunpack.c.h.b16 %v571
        %v1128 = vunpack.c.l.b16 %v572
        %v1129 = vunpack.c.h.b16 %v572
        %v1130 = vunpack.c.l.b16 %v573
        %v1131 = vunpack.c.h.b16 %v573
        %v1132 = vunpack.c.l.b16 %v574
        %v1133 = vunpack.c.h.b16 %v574
        %v1134 = vunpack.c.l.b16 %v575
        %v1135 = vunpack.c.h.b16 %v575
        %v1136 = vunpack.c.l.b16 %v576
        %v1137 = vunpack.c.h.b16 %v576
        %v1138 = vunpack.c.l.b16 %v577
        %v1139 = vunpack.c.h.b16 %v577
        %v1140 = vunpack.c.l.b16 %v578
        %v1141 = vunpack.c.h.b16 %v578
        %v1142 = vunpack.c.l.b16 %v579
        %v1143 = vunpack.c.h.b16 %v579
        %v1144 = vunpack.c.l.b16 %v580
        %v1145 = vunpack.c.h.b16 %v580
        %v1146 = vunpack.c.l.b16 %v581
        %v1147 = vunpack.c.h.b16 %v581
        %v1148 = vunpack.c.l.b16 %v582
        %v1149 = vunpack.c.h.b16 %v582
        %v1150 = vunpack.c.l.b16 %v583
        %v1151 = vunpack.c.h.b16 %v583
        %v1152 = vunpack.c.l.b16 %v584
        %v1153 = vunpack.c.h.b16 %v584
        %v1154 = vunpack.c.l.b16 %v585
        %v1155 = vunpack.c.h.b16 %v585
        %v1156 = vunpack.c.l.b16 %v586
        %v1157 = vunpack.c.h.b16 %v586
        %v1158 = vunpack.c.l.b16 %v587
        %v1159 = vunpack.c.h.b16 %v587
        %v1160 = vunpack.c.l.b16 %v588
        %v1161 = vunpack.c.h.b16 %v588
        %v1162 = vunpack.c.l.b16 %v589
        %v1163 = vunpack.c.h.b16 %v589
        %v1164 = vunpack.c.l.b16 %v590
        %v1165 = vunpack.c.h.b16 %v590
        %v1166 = vunpack.c.l.b16 %v591
        %v1167 = vunpack.c.h.b16 %v591
        %v1168 = vunpack.c.l.b16 %v592
        %v1169 = vunpack.c.h.b16 %v592
        %v1170 = vunpack.c.l.b16 %v593
        %v1171 = vunpack.c.h.b16 %v593
        %v1172 = vunpack.c.l.b16 %v594
        %v1173 = vunpack.c.h.b16 %v594
        %v1174 = vunpack.c.l.b16 %v595
        %v1175 = vunpack.c.h.b16 %v595
        %v1176 = vunpack.c.l.b16 %v596
        %v1177 = vunpack.c.h.b16 %v596
        %v1178 = vunpack.c.l.b16 %v597
        %v1179 = vunpack.c.h.b16 %v597
        %v1180 = vunpack.c.l.b16 %v598
        %v1181 = vunpack.c.h.b16 %v598
        %v1182 = vunpack.c.l.b16 %v599
        %v1183 = vunpack.c.h.b16 %v599
        %v1184 = vunpack.c.l.b16 %v600
        %v1185 = vunpack.c.h.b16 %v600
        %v1186 = vunpack.c.l.b16 %v601
        %v1187 = vunpack.c.h.b16 %v601
        %v1188 = vunpack.c.l.b16 %v602
        %v1189 = vunpack.c.h.b16 %v602
        %v1190 = vunpack.c.l.b16 %v603
        %v1191 = vunpack.c.h.b16 %v603
        %v1192 = vunpack.c.l.b16 %v604
        %v1193 = vunpack.c.h.b16 %v604
        %v1194 = vunpack.c.l.b16 %v605
        %v1195 = vunpack.c.h.b16 %v605
        %v1196 = vunpack.c.l.b16 %v606
        %v1197 = vunpack.c.h.b16 %v606
        %v1198 = vunpack.c.l.b16 %v607
        %v1199 = vunpack.c.h.b16 %v607
        %v1200 = vunpack.c.l.b16 %v608
        %v1201 = vunpack.c.h.b16 %v608
        %v1202 = vunpack.c.l.b16 %v609
        %v1203 = vunpack.c.h.b16 %v609
        %v1204 = vunpack.c.l.b16 %v610
        %v1205 = vunpack.c.h.b16 %v610
        %v1206 = vunpack.c.l.b16 %v611
        %v1207 = vunpack.c.h.b16 %v611
        %v1208 = vunpack.c.l.b16 %v612
        %v1209 = vunpack.c.h.b16 %v612
        %v1210 = vunpack.c.l.b16 %v613
        %v1211 = vunpack.c.h.b16 %v613
        %v1212 = vunpack.c.l.b16 %v614
        %v1213 = vunpack.c.h.b16 %v614
        %v1214 = vunpack.c.l.b16 %v615
        %v1215 = vunpack.c.h.b16 %v615
        %v1216 = vunpack.c.l.b16 %v616
        %v1217 = vunpack.c.h.b16 %v616
        %v1218 = vunpack.c.l.b16 %v617
        %v1219 = vunpack.c.h.b16 %v617
        %v1220 = vunpack.c.l.b16 %v618
        %v1221 = vunpack.c.h.b16 %v618
        %v1222 = vunpack.c.l.b16 %v619
        %v1223 = vunpack.c.h.b16 %v619
        %v1224 = vunpack.c.l.b16 %v620
        %v1225 = vunpack.c.h.b16 %v620
        %v1226 = vunpack.c.l.b16 %v621
        %v1227 = vunpack.c.h.b16 %v621
        %v1228 = vunpack.c.l.b16 %v622
        %v1229 = vunpack.c.h.b16 %v622
        %v1230 = vunpack.c.l.b16 %v623
        %v1231 = vunpack.c.h.b16 %v623
        %v1232 = vunpack.c.l.b16 %v624
        %v1233 = vunpack.c.h.b16 %v624
        %v1234 = vunpack.c.l.b16 %v625
        %v1235 = vunpack.c.h.b16 %v625
        %v1236 = vunpack.c.l.b16 %v626
        %v1237 = vunpack.c.h.b16 %v626
        %v1238 = vunpack.c.l.b16 %v627
        %v1239 = vunpack.c.h.b16 %v627
        %v1240 = vunpack.c.l.b16 %v628
        %v1241 = vunpack.c.h.b16 %v628
        %v1242 = vunpack.c.l.b16 %v629
        %v1243 = vunpack.c.h.b16 %v629
        %v1244 = vunpack.c.l.b16 %v630
        %v1245 = vunpack.c.h.b16 %v630
        %v1246 = vunpack.c.l.b16 %v631
        %v1247 = vunpack.c.h.b16 %v631
        %v1248 = vunpack.c.l.b16 %v632
        %v1249 = vunpack.c.h.b16 %v632
        %v1250 = vunpack.c.l.b16 %v633
        %v1251 = vunpack.c.h.b16 %v633
        %v1252 = vunpack.c.l.b16 %v634
        %v1253 = vunpack.c.h.b16 %v634
        %v1254 = vunpack.c.l.b16 %v635
        %v1255 = vunpack.c.h.b16 %v635
        %v1256 = vunpack.c.l.b16 %v636
        %v1257 = vunpack.c.h.b16 %v636
        %v1258 = vunpack.c.l.b16 %v637
        %v1259 = vunpack.c.h.b16 %v637
        %v1260 = vunpack.c.l.b16 %v638
        %v1261 = vunpack.c.h.b16 %v638
        %v1262 = vunpack.c.l.b16 %v639
        %v1263 = vunpack.c.h.b16 %v639
        %v1264 = vunpack.c.l.b16 %v640
        %v1265 = vunpack.c.h.b16 %v640
        %v1266 = vunpack.c.l.b16 %v641
        %v1267 = vunpack.c.h.b16 %v641
        %v1268 = vunpack.c.l.b16 %v642
        %v1269 = vunpack.c.h.b16 %v642
        %v1270 = vunpack.c.l.b16 %v643
        %v1271 = vunpack.c.h.b16 %v643
        %v1272 = vunpack.c.l.b16 %v644
        %v1273 = vunpack.c.h.b16 %v644
        %v1274 = vunpack.c.l.b16 %v645
        %v1275 = vunpack.c.h.b16 %v645
        %v1276 = vpack.c.b16 %v958, %v956
        %v1277 = vpack.c.b16 %v959, %v957
        %v1278 = vpack.c.b16 %v962, %v960
        %v1279 = vpack.c.b16 %v963, %v961
        %v1280 = vpack.c.b16 %v966, %v964
        %v1281 = vpack.c.b16 %v967, %v965
        %v1282 = vpack.c.b16 %v970, %v968
        %v1283 = vpack.c.b16 %v971, %v969
        %v1284 = vpack.c.b16 %v974, %v972
        %v1285 = vpack.c.b16 %v975, %v973
        %v1286 = vpack.c.b16 %v978, %v976
        %v1287 = vpack.c.b16 %v979, %v977
        %v1288 = vpack.c.b16 %v982, %v980
        %v1289 = vpack.c.b16 %v983, %v981
        %v1290 = vpack.c.b16 %v986, %v984
        %v1291 = vpack.c.b16 %v987, %v985
        %v1292 = vpack.c.b16 %v990, %v988
        %v1293 = vpack.c.b16 %v991, %v989
        %v1294 = vpack.c.b16 %v994, %v992
        %v1295 = vpack.c.b16 %v995, %v993
        %v1296 = vpack.c.b16 %v998, %v996
        %v1297 = vpack.c.b16 %v999, %v997
        %v1298 = vpack.c.b16 %v1002, %v1000
        %v1299 = vpack.c.b16 %v1003, %v1001
        %v1300 = vpack.c.b16 %v1006, %v1004
        %v1301 = vpack.c.b16 %v1007, %v1005
        %v1302 = vpack.c.b16 %v1010, %v1008
        %v1303 = vpack.c.b16 %v1011, %v1009
        %v1304 = vpack.c.b16 %v1014, %v1012
        %v1305 = vpack.c.b16 %v1015, %v1013
        %v1306 = vpack.c.b16 %v1018, %v1016
        %v1307 = vpack.c.b16 %v1019, %v1017
        %v1308 = vpack.c.b16 %v1022, %v1020
        %v1309 = vpack.c.b16 %v1023, %v1021
        %v1310 = vpack.c.b16 %v1026, %v1024
        %v1311 = vpack.c.b16 %v1027, %v1025
        %v1312 = vpack.c.b16 %v1030, %v1028
        %v1313 = vpack.c.b16 %v1031, %v1029
        %v1314 = vpack.c.b16 %v1034, %v1032
        %v1315 = vpack.c.b16 %v1035, %v1033
        %v1316 = vpack.c.b16 %v1038, %v1036
        %v1317 = vpack.c.b16 %v1039, %v1037
        %v1318 = vpack.c.b16 %v1042, %v1040
        %v1319 = vpack.c.b16 %v1043, %v1041
        %v1320 = vpack.c.b16 %v1046, %v1044
        %v1321 = vpack.c.b16 %v1047, %v1045
        %v1322 = vpack.c.b16 %v1050, %v1048
        %v1323 = vpack.c.b16 %v1051, %v1049
        %v1324 = vpack.c.b16 %v1054, %v1052
        %v1325 = vpack.c.b16 %v1055, %v1053
        %v1326 = vpack.c.b16 %v1058, %v1056
        %v1327 = vpack.c.b16 %v1059, %v1057
        %v1328 = vpack.c.b16 %v1062, %v1060
        %v1329 = vpack.c.b16 %v1063, %v1061
        %v1330 = vpack.c.b16 %v1066, %v1064
        %v1331 = vpack.c.b16 %v1067, %v1065
        %v1332 = vpack.c.b16 %v1070, %v1068
        %v1333 = vpack.c.b16 %v1071, %v1069
        %v1334 = vpack.c.b16 %v1074, %v1072
        %v1335 = vpack.c.b16 %v1075, %v1073
        %v1336 = vpack.c.b16 %v1078, %v1076
        %v1337 = vpack.c.b16 %v1079, %v1077
        %v1338 = vpack.c.b16 %v1082, %v1080
        %v1339 = vpack.c.b16 %v1083, %v1081
        %v1340 = vpack.c.b16 %v1086, %v1084
        %v1341 = vpack.c.b16 %v1087, %v1085
        %v1342 = vpack.c.b16 %v1090, %v1088
        %v1343 = vpack.c.b16 %v1091, %v1089
        %v1344 = vpack.c.b16 %v1094, %v1092
        %v1345 = vpack.c.b16 %v1095, %v1093
        %v1346 = vpack.c.b16 %v1098, %v1096
        %v1347 = vpack.c.b16 %v1099, %v1097
        %v1348 = vpack.c.b16 %v1102, %v1100
        %v1349 = vpack.c.b16 %v1103, %v1101
        %v1350 = vpack.c.b16 %v1106, %v1104
        %v1351 = vpack.c.b16 %v1107, %v1105
        %v1352 = vpack.c.b16 %v1110, %v1108
        %v1353 = vpack.c.b16 %v1111, %v1109
        %v1354 = vpack.c.b16 %v1114, %v1112
        %v1355 = vpack.c.b16 %v1115, %v1113
        %v1356 = vpack.c.b16 %v1118, %v1116
        %v1357 = vpack.c.b16 %v1119, %v1117
        %v1358 = vpack.c.b16 %v1122, %v1120
        %v1359 = vpack.c.b16 %v1123, %v1121
        %v1360 = vpack.c.b16 %v1126, %v1124
        %v1361 = vpack.c.b16 %v1127, %v1125
        %v1362 = vpack.c.b16 %v1130, %v1128
        %v1363 = vpack.c.b16 %v1131, %v1129
        %v1364 = vpack.c.b16 %v1134, %v1132
        %v1365 = vpack.c.b16 %v1135, %v1133
        %v1366 = vpack.c.b16 %v1138, %v1136
        %v1367 = vpack.c.b16 %v1139, %v1137
        %v1368 = vpack.c.b16 %v1142, %v1140
        %v1369 = vpack.c.b16 %v1143, %v1141
        %v1370 = vpack.c.b16 %v1146, %v1144
        %v1371 = vpack.c.b16 %v1147, %v1145
        %v1372 = vpack.c.b16 %v1150, %v1148
        %v1373 = vpack.c.b16 %v1151, %v1149
        %v1374 = vpack.c.b16 %v1154, %v1152
        %v1375 = vpack.c.b16 %v1155, %v1153
        %v1376 = vpack.c.b16 %v1158, %v1156
        %v1377 = vpack.c.b16 %v1159, %v1157
        %v1378 = vpack.c.b16 %v1162, %v1160
        %v1379 = vpack.c.b16 %v1163, %v1161
        %v1380 = vpack.c.b16 %v1166, %v1164
        %v1381 = vpack.c.b16 %v1167, %v1165
        %v1382 = vpack.c.b16 %v1170, %v1168
        %v1383 = vpack.c.b16 %v1171, %v1169
        %v1384 = vpack.c.b16 %v1174, %v1172
        %v1385 = vpack.c.b16 %v1175, %v1173
        %v1386 = vpack.c.b16 %v1178, %v1176
        %v1387 = vpack.c.b16 %v1179, %v1177
        %v1388 = vpack.c.b16 %v1182, %v1180
        %v1389 = vpack.c.b16 %v1183, %v1181
        %v1390 = vpack.c.b16 %v1186, %v1184
        %v1391 = vpack.c.b16 %v1187, %v1185
        %v1392 = vpack.c.b16 %v1190, %v1188
        %v1393 = vpack.c.b16 %v1191, %v1189
        %v1394 = vpack.c.b16 %v1194, %v1192
        %v1395 = vpack.c.b16 %v1195, %v1193
        %v1396 = vpack.c.b16 %v1198, %v1196
        %v1397 = vpack.c.b16 %v1199, %v1197
        %v1398 = vpack.c.b16 %v1202, %v1200
        %v1399 = vpack.c.b16 %v1203, %v1201
        %v1400 = vpack.c.b16 %v1206, %v1204
        %v1401 = vpack.c.b16 %v1207, %v1205
        %v1402 = vpack.c.b16 %v1210, %v1208
        %v1403 = vpack.c.b16 %v1211, %v1209
        %v1404 = vpack.c.b16 %v1214, %v1212
        %v1405 = vpack.c.b16 %v1215, %v1213
        %v1406 = vpack.c.b16 %v1218, %v1216
        %v1407 = vpack.c.b16 %v1219, %v1217
        %v1408 = vpack.c.b16 %v1222, %v1220
        %v1409 = vpack.c.b16 %v1223, %v1221
        %v1410 = vpack.c.b16 %v1226, %v1224
        %v1411 = vpack.c.b16 %v1227, %v1225
        %v1412 = vpack.c.b16 %v1230, %v1228
        %v1413 = vpack.c.b16 %v1231, %v1229
        %v1414 = vpack.c.b16 %v1234, %v1232
        %v1415 = vpack.c.b16 %v1235, %v1233
        %v1416 = vpack.c.b16 %v1238, %v1236
        %v1417 = vpack.c.b16 %v1239, %v1237
        %v1418 = vpack.c.b16 %v1242, %v1240
        %v1419 = vpack.c.b16 %v1243, %v1241
        %v1420 = vpack.c.b16 %v1246, %v1244
        %v1421 = vpack.c.b16 %v1247, %v1245
        %v1422 = vpack.c.b16 %v1250, %v1248
        %v1423 = vpack.c.b16 %v1251, %v1249
        %v1424 = vpack.c.b16 %v1254, %v1252
        %v1425 = vpack.c.b16 %v1255, %v1253
        %v1426 = vpack.c.b16 %v1258, %v1256
        %v1427 = vpack.c.b16 %v1259, %v1257
        %v1428 = vpack.c.b16 %v1262, %v1260
        %v1429 = vpack.c.b16 %v1263, %v1261
        %v1430 = vpack.c.b16 %v1266, %v1264
        %v1431 = vpack.c.b16 %v1267, %v1265
        %v1432 = vpack.c.b16 %v1270, %v1268
        %v1433 = vpack.c.b16 %v1271, %v1269
        %v1434 = vpack.c.b16 %v1274, %v1272
        %v1435 = vpack.c.b16 %v1275, %v1273
        %1596 = vmatprep.subr.bf16.mxu0 %v1291
        %1597 = vmatpush1.bf16.msra.mxu0 %v1290
        %1598 = vmatprep.subr.bf16.mxu0 %v1289
        %1599 = vmatpush1.bf16.msra.mxu0 %v1288
        %1600 = vmatprep.subr.bf16.mxu0 %v1287
        %1601 = vmatpush1.bf16.msra.mxu0 %v1286
        %1602 = vmatprep.subr.bf16.mxu0 %v1285
        %1603 = vmatpush1.bf16.msra.mxu0 %v1284
        %1604 = vmatprep.subr.bf16.mxu0 %v1283
        %1605 = vmatpush1.bf16.msra.mxu0 %v1282
        %1606 = vmatprep.subr.bf16.mxu0 %v1281
        %1607 = vmatpush1.bf16.msra.mxu0 %v1280
        %1608 = vmatprep.subr.bf16.mxu0 %v1279
        %1609 = vmatpush1.bf16.msra.mxu0 %v1278
        %1610 = vmatprep.subr.bf16.mxu0 %v1277
        %1611 = vmatpush1.bf16.msra.mxu0 %v1276
        %1612 = vmatprep.subr.bf16.mxu0 %v1307
        %1613 = vmatpush2.bf16.msra.mxu0 %v1306
        %1614 = vmatprep.subr.bf16.mxu0 %v1305
        %1615 = vmatpush2.bf16.msra.mxu0 %v1304
        %1616 = vmatprep.subr.bf16.mxu0 %v1303
        %1617 = vmatpush2.bf16.msra.mxu0 %v1302
        %1618 = vmatprep.subr.bf16.mxu0 %v1301
        %1619 = vmatpush2.bf16.msra.mxu0 %v1300
        %1620 = vmatprep.subr.bf16.mxu0 %v1299
        %1621 = vmatpush2.bf16.msra.mxu0 %v1298
        %1622 = vmatprep.subr.bf16.mxu0 %v1297
        %1623 = vmatpush2.bf16.msra.mxu0 %v1296
        %1624 = vmatprep.subr.bf16.mxu0 %v1295
        %1625 = vmatpush2.bf16.msra.mxu0 %v1294
        %1626 = vmatprep.subr.bf16.mxu0 %v1293
        %1627 = vmatpush2.bf16.msra.mxu0 %v1292
        %1628 = vmatprep.mubr.bf16.mxu0 %v737
        %1629 = vmatmul.mubr.bf16.gmra.mxu0 %v736
        %v1630 = vpop.f32.mrf.mxu0
        %v1631 = vadd.f32 0.0, %v1630
        %v1632 = vpop.f32.mrf.mxu0
        %v1633 = vadd.f32 0.0, %v1632
        %v1634 = vpop.f32.mrf.mxu0
        %v1635 = vadd.f32 0.0, %v1634
        %v1636 = vpop.f32.mrf.mxu0
        %v1637 = vadd.f32 0.0, %v1636
        %1638 = vmatprep.mubr.bf16.mxu0 %v747
        %1639 = vmatmul.mubr.bf16.gmra.mxu0 %v746
        %v1640 = vpop.f32.mrf.mxu0
        %v1641 = vadd.f32 0.0, %v1640
        %v1642 = vpop.f32.mrf.mxu0
        %v1643 = vadd.f32 0.0, %v1642
        %v1644 = vpop.f32.mrf.mxu0
        %v1645 = vadd.f32 0.0, %v1644
        %v1646 = vpop.f32.mrf.mxu0
        %v1647 = vadd.f32 0.0, %v1646
        %1648 = vmatprep.mubr.bf16.mxu0 %v757
        %1649 = vmatmul.mubr.bf16.gmra.mxu0 %v756
        %v1650 = vpop.f32.mrf.mxu0
        %v1651 = vadd.f32 0.0, %v1650
        %v1652 = vpop.f32.mrf.mxu0
        %v1653 = vadd.f32 0.0, %v1652
        %v1654 = vpop.f32.mrf.mxu0
        %v1655 = vadd.f32 0.0, %v1654
        %v1656 = vpop.f32.mrf.mxu0
        %v1657 = vadd.f32 0.0, %v1656
        %1658 = vdwg.mxu0
        %1659 = vmatprep.subr.bf16.mxu0 %v1323
        %1660 = vmatpush1.bf16.msra.mxu0 %v1322
        %1661 = vmatprep.subr.bf16.mxu0 %v1321
        %1662 = vmatpush1.bf16.msra.mxu0 %v1320
        %1663 = vmatprep.subr.bf16.mxu0 %v1319
        %1664 = vmatpush1.bf16.msra.mxu0 %v1318
        %1665 = vmatprep.subr.bf16.mxu0 %v1317
        %1666 = vmatpush1.bf16.msra.mxu0 %v1316
        %1667 = vmatprep.subr.bf16.mxu0 %v1315
        %1668 = vmatpush1.bf16.msra.mxu0 %v1314
        %1669 = vmatprep.subr.bf16.mxu0 %v1313
        %1670 = vmatpush1.bf16.msra.mxu0 %v1312
        %1671 = vmatprep.subr.bf16.mxu0 %v1311
        %1672 = vmatpush1.bf16.msra.mxu0 %v1310
        %1673 = vmatprep.subr.bf16.mxu0 %v1309
        %1674 = vmatpush1.bf16.msra.mxu0 %v1308
        %1675 = vmatprep.subr.bf16.mxu0 %v1339
        %1676 = vmatpush2.bf16.msra.mxu0 %v1338
        %1677 = vmatprep.subr.bf16.mxu0 %v1337
        %1678 = vmatpush2.bf16.msra.mxu0 %v1336
        %1679 = vmatprep.subr.bf16.mxu0 %v1335
        %1680 = vmatpush2.bf16.msra.mxu0 %v1334
        %1681 = vmatprep.subr.bf16.mxu0 %v1333
        %1682 = vmatpush2.bf16.msra.mxu0 %v1332
        %1683 = vmatprep.subr.bf16.mxu0 %v1331
        %1684 = vmatpush2.bf16.msra.mxu0 %v1330
        %1685 = vmatprep.subr.bf16.mxu0 %v1329
        %1686 = vmatpush2.bf16.msra.mxu0 %v1328
        %1687 = vmatprep.subr.bf16.mxu0 %v1327
        %1688 = vmatpush2.bf16.msra.mxu0 %v1326
        %1689 = vmatprep.subr.bf16.mxu0 %v1325
        %1690 = vmatpush2.bf16.msra.mxu0 %v1324
        %1691 = vmatprep.mubr.bf16.mxu0 %v739
        %1692 = vmatmul.mubr.bf16.gmra.mxu0 %v738
        %v1693 = vpop.f32.mrf.mxu0
        %v1694 = vadd.f32 %v1631, %v1693
        %v1695 = vpop.f32.mrf.mxu0
        %v1696 = vadd.f32 %v1633, %v1695
        %v1697 = vpop.f32.mrf.mxu0
        %v1698 = vadd.f32 %v1635, %v1697
        %v1699 = vpop.f32.mrf.mxu0
        %v1700 = vadd.f32 %v1637, %v1699
        %1701 = vmatprep.mubr.bf16.mxu0 %v749
        %1702 = vmatmul.mubr.bf16.gmra.mxu0 %v748
        %v1703 = vpop.f32.mrf.mxu0
        %v1704 = vadd.f32 %v1641, %v1703
        %v1705 = vpop.f32.mrf.mxu0
        %v1706 = vadd.f32 %v1643, %v1705
        %v1707 = vpop.f32.mrf.mxu0
        %v1708 = vadd.f32 %v1645, %v1707
        %v1709 = vpop.f32.mrf.mxu0
        %v1710 = vadd.f32 %v1647, %v1709
        %1711 = vmatprep.mubr.bf16.mxu0 %v759
        %1712 = vmatmul.mubr.bf16.gmra.mxu0 %v758
        %v1713 = vpop.f32.mrf.mxu0
        %v1714 = vadd.f32 %v1651, %v1713
        %v1715 = vpop.f32.mrf.mxu0
        %v1716 = vadd.f32 %v1653, %v1715
        %v1717 = vpop.f32.mrf.mxu0
        %v1718 = vadd.f32 %v1655, %v1717
        %v1719 = vpop.f32.mrf.mxu0
        %v1720 = vadd.f32 %v1657, %v1719
        %1721 = vdwg.mxu0
        %1722 = vmatprep.subr.bf16.mxu0 %v1355
        %1723 = vmatpush1.bf16.msra.mxu0 %v1354
        %1724 = vmatprep.subr.bf16.mxu0 %v1353
        %1725 = vmatpush1.bf16.msra.mxu0 %v1352
        %1726 = vmatprep.subr.bf16.mxu0 %v1351
        %1727 = vmatpush1.bf16.msra.mxu0 %v1350
        %1728 = vmatprep.subr.bf16.mxu0 %v1349
        %1729 = vmatpush1.bf16.msra.mxu0 %v1348
        %1730 = vmatprep.subr.bf16.mxu0 %v1347
        %1731 = vmatpush1.bf16.msra.mxu0 %v1346
        %1732 = vmatprep.subr.bf16.mxu0 %v1345
        %1733 = vmatpush1.bf16.msra.mxu0 %v1344
        %1734 = vmatprep.subr.bf16.mxu0 %v1343
        %1735 = vmatpush1.bf16.msra.mxu0 %v1342
        %1736 = vmatprep.subr.bf16.mxu0 %v1341
        %1737 = vmatpush1.bf16.msra.mxu0 %v1340
        %1738 = vmatprep.subr.bf16.mxu0 %v1371
        %1739 = vmatpush2.bf16.msra.mxu0 %v1370
        %1740 = vmatprep.subr.bf16.mxu0 %v1369
        %1741 = vmatpush2.bf16.msra.mxu0 %v1368
        %1742 = vmatprep.subr.bf16.mxu0 %v1367
        %1743 = vmatpush2.bf16.msra.mxu0 %v1366
        %1744 = vmatprep.subr.bf16.mxu0 %v1365
        %1745 = vmatpush2.bf16.msra.mxu0 %v1364
        %1746 = vmatprep.subr.bf16.mxu0 %v1363
        %1747 = vmatpush2.bf16.msra.mxu0 %v1362
        %1748 = vmatprep.subr.bf16.mxu0 %v1361
        %1749 = vmatpush2.bf16.msra.mxu0 %v1360
        %1750 = vmatprep.subr.bf16.mxu0 %v1359
        %1751 = vmatpush2.bf16.msra.mxu0 %v1358
        %1752 = vmatprep.subr.bf16.mxu0 %v1357
        %1753 = vmatpush2.bf16.msra.mxu0 %v1356
        %1754 = vmatprep.mubr.bf16.mxu0 %v741
        %1755 = vmatmul.mubr.bf16.gmra.mxu0 %v740
        %v1756 = vpop.f32.mrf.mxu0
        %v1757 = vadd.f32 %v1694, %v1756
        %v1758 = vpop.f32.mrf.mxu0
        %v1759 = vadd.f32 %v1696, %v1758
        %v1760 = vpop.f32.mrf.mxu0
        %v1761 = vadd.f32 %v1698, %v1760
        %v1762 = vpop.f32.mrf.mxu0
        %v1763 = vadd.f32 %v1700, %v1762
        %1764 = vmatprep.mubr.bf16.mxu0 %v751
        %1765 = vmatmul.mubr.bf16.gmra.mxu0 %v750
        %v1766 = vpop.f32.mrf.mxu0
        %v1767 = vadd.f32 %v1704, %v1766
        %v1768 = vpop.f32.mrf.mxu0
        %v1769 = vadd.f32 %v1706, %v1768
        %v1770 = vpop.f32.mrf.mxu0
        %v1771 = vadd.f32 %v1708, %v1770
        %v1772 = vpop.f32.mrf.mxu0
        %v1773 = vadd.f32 %v1710, %v1772
        %1774 = vmatprep.mubr.bf16.mxu0 %v761
        %1775 = vmatmul.mubr.bf16.gmra.mxu0 %v760
        %v1776 = vpop.f32.mrf.mxu0
        %v1777 = vadd.f32 %v1714, %v1776
        %v1778 = vpop.f32.mrf.mxu0
        %v1779 = vadd.f32 %v1716, %v1778
        %v1780 = vpop.f32.mrf.mxu0
        %v1781 = vadd.f32 %v1718, %v1780
        %v1782 = vpop.f32.mrf.mxu0
        %v1783 = vadd.f32 %v1720, %v1782
        %1784 = vdwg.mxu0
        %1785 = vmatprep.subr.bf16.mxu0 %v1387
        %1786 = vmatpush1.bf16.msra.mxu0 %v1386
        %1787 = vmatprep.subr.bf16.mxu0 %v1385
        %1788 = vmatpush1.bf16.msra.mxu0 %v1384
        %1789 = vmatprep.subr.bf16.mxu0 %v1383
        %1790 = vmatpush1.bf16.msra.mxu0 %v1382
        %1791 = vmatprep.subr.bf16.mxu0 %v1381
        %1792 = vmatpush1.bf16.msra.mxu0 %v1380
        %1793 = vmatprep.subr.bf16.mxu0 %v1379
        %1794 = vmatpush1.bf16.msra.mxu0 %v1378
        %1795 = vmatprep.subr.bf16.mxu0 %v1377
        %1796 = vmatpush1.bf16.msra.mxu0 %v1376
        %1797 = vmatprep.subr.bf16.mxu0 %v1375
        %1798 = vmatpush1.bf16.msra.mxu0 %v1374
        %1799 = vmatprep.subr.bf16.mxu0 %v1373
        %1800 = vmatpush1.bf16.msra.mxu0 %v1372
        %1801 = vmatprep.subr.bf16.mxu0 %v1403
        %1802 = vmatpush2.bf16.msra.mxu0 %v1402
        %1803 = vmatprep.subr.bf16.mxu0 %v1401
        %1804 = vmatpush2.bf16.msra.mxu0 %v1400
        %1805 = vmatprep.subr.bf16.mxu0 %v1399
        %1806 = vmatpush2.bf16.msra.mxu0 %v1398
        %1807 = vmatprep.subr.bf16.mxu0 %v1397
        %1808 = vmatpush2.bf16.msra.mxu0 %v1396
        %1809 = vmatprep.subr.bf16.mxu0 %v1395
        %1810 = vmatpush2.bf16.msra.mxu0 %v1394
        %1811 = vmatprep.subr.bf16.mxu0 %v1393
        %1812 = vmatpush2.bf16.msra.mxu0 %v1392
        %1813 = vmatprep.subr.bf16.mxu0 %v1391
        %1814 = vmatpush2.bf16.msra.mxu0 %v1390
        %1815 = vmatprep.subr.bf16.mxu0 %v1389
        %1816 = vmatpush2.bf16.msra.mxu0 %v1388
        %1817 = vmatprep.mubr.bf16.mxu0 %v743
        %1818 = vmatmul.mubr.bf16.gmra.mxu0 %v742
        %v1819 = vpop.f32.mrf.mxu0
        %v1820 = vadd.f32 %v1757, %v1819
        %v1821 = vpop.f32.mrf.mxu0
        %v1822 = vadd.f32 %v1759, %v1821
        %v1823 = vpop.f32.mrf.mxu0
        %v1824 = vadd.f32 %v1761, %v1823
        %v1825 = vpop.f32.mrf.mxu0
        %v1826 = vadd.f32 %v1763, %v1825
        %1827 = vmatprep.mubr.bf16.mxu0 %v753
        %1828 = vmatmul.mubr.bf16.gmra.mxu0 %v752
        %v1829 = vpop.f32.mrf.mxu0
        %v1830 = vadd.f32 %v1767, %v1829
        %v1831 = vpop.f32.mrf.mxu0
        %v1832 = vadd.f32 %v1769, %v1831
        %v1833 = vpop.f32.mrf.mxu0
        %v1834 = vadd.f32 %v1771, %v1833
        %v1835 = vpop.f32.mrf.mxu0
        %v1836 = vadd.f32 %v1773, %v1835
        %1837 = vmatprep.mubr.bf16.mxu0 %v763
        %1838 = vmatmul.mubr.bf16.gmra.mxu0 %v762
        %v1839 = vpop.f32.mrf.mxu0
        %v1840 = vadd.f32 %v1777, %v1839
        %v1841 = vpop.f32.mrf.mxu0
        %v1842 = vadd.f32 %v1779, %v1841
        %v1843 = vpop.f32.mrf.mxu0
        %v1844 = vadd.f32 %v1781, %v1843
        %v1845 = vpop.f32.mrf.mxu0
        %v1846 = vadd.f32 %v1783, %v1845
        %1847 = vdwg.mxu0
        %1848 = vmatprep.subr.bf16.mxu0 %v1419
        %1849 = vmatpush1.bf16.msra.mxu0 %v1418
        %1850 = vmatprep.subr.bf16.mxu0 %v1417
        %1851 = vmatpush1.bf16.msra.mxu0 %v1416
        %1852 = vmatprep.subr.bf16.mxu0 %v1415
        %1853 = vmatpush1.bf16.msra.mxu0 %v1414
        %1854 = vmatprep.subr.bf16.mxu0 %v1413
        %1855 = vmatpush1.bf16.msra.mxu0 %v1412
        %1856 = vmatprep.subr.bf16.mxu0 %v1411
        %1857 = vmatpush1.bf16.msra.mxu0 %v1410
        %1858 = vmatprep.subr.bf16.mxu0 %v1409
        %1859 = vmatpush1.bf16.msra.mxu0 %v1408
        %1860 = vmatprep.subr.bf16.mxu0 %v1407
        %1861 = vmatpush1.bf16.msra.mxu0 %v1406
        %1862 = vmatprep.subr.bf16.mxu0 %v1405
        %1863 = vmatpush1.bf16.msra.mxu0 %v1404
        %1864 = vmatprep.subr.bf16.mxu0 %v1435
        %1865 = vmatpush2.bf16.msra.mxu0 %v1434
        %1866 = vmatprep.subr.bf16.mxu0 %v1433
        %1867 = vmatpush2.bf16.msra.mxu0 %v1432
        %1868 = vmatprep.subr.bf16.mxu0 %v1431
        %1869 = vmatpush2.bf16.msra.mxu0 %v1430
        %1870 = vmatprep.subr.bf16.mxu0 %v1429
        %1871 = vmatpush2.bf16.msra.mxu0 %v1428
        %1872 = vmatprep.subr.bf16.mxu0 %v1427
        %1873 = vmatpush2.bf16.msra.mxu0 %v1426
        %1874 = vmatprep.subr.bf16.mxu0 %v1425
        %1875 = vmatpush2.bf16.msra.mxu0 %v1424
        %1876 = vmatprep.subr.bf16.mxu0 %v1423
        %1877 = vmatpush2.bf16.msra.mxu0 %v1422
        %1878 = vmatprep.subr.bf16.mxu0 %v1421
        %1879 = vmatpush2.bf16.msra.mxu0 %v1420
        %1880 = vmatprep.mubr.bf16.mxu0 %v745
        %1881 = vmatmul.mubr.bf16.gmra.mxu0 %v744
        %v1882 = vpop.f32.mrf.mxu0
        %v1883 = vadd.f32 %v1820, %v1882
        %v1884 = vpop.f32.mrf.mxu0
        %v1885 = vadd.f32 %v1822, %v1884
        %v1886 = vpop.f32.mrf.mxu0
        %v1887 = vadd.f32 %v1824, %v1886
        %v1888 = vpop.f32.mrf.mxu0
        %v1889 = vadd.f32 %v1826, %v1888
        %1890 = vmatprep.mubr.bf16.mxu0 %v755
        %1891 = vmatmul.mubr.bf16.gmra.mxu0 %v754
        %v1892 = vpop.f32.mrf.mxu0
        %v1893 = vadd.f32 %v1830, %v1892
        %v1894 = vpop.f32.mrf.mxu0
        %v1895 = vadd.f32 %v1832, %v1894
        %v1896 = vpop.f32.mrf.mxu0
        %v1897 = vadd.f32 %v1834, %v1896
        %v1898 = vpop.f32.mrf.mxu0
        %v1899 = vadd.f32 %v1836, %v1898
        %1900 = vmatprep.mubr.bf16.mxu0 %v765
        %1901 = vmatmul.mubr.bf16.gmra.mxu0 %v764
        %v1902 = vpop.f32.mrf.mxu0
        %v1903 = vadd.f32 %v1840, %v1902
        %v1904 = vpop.f32.mrf.mxu0
        %v1905 = vadd.f32 %v1842, %v1904
        %v1906 = vpop.f32.mrf.mxu0
        %v1907 = vadd.f32 %v1844, %v1906
        %v1908 = vpop.f32.mrf.mxu0
        %v1909 = vadd.f32 %v1846, %v1908
        %1910 = vdwg.mxu0
        %v1911 = vlaneseq
        %v1912 = vshrl.u32 %v1911, 7
        %v1913 = vadd.s32 %v1912, 8
        %v1914 = vadd.s32 %v1912, 16
        %v1915 = vld [vmem:[%s391] sm:$0x3]
        %v1916 = vlaneseq
        %v1917 = vshrl.u32 %v1916, 7
        %v1918 = vsub.s32 0, %v1917
        %v1919 = vrot.slane %v1915, %v1918
        %v1920 = vlaneseq
        %v1921 = vshrl.u32 %v1920, 7
        %v1922 = vsub.s32 1, %v1921
        %v1923 = vrot.slane %v1915, %v1922
        %vm1924 = vcmp.le.s32.totalorder %v1912, %v1919
        %vm1925 = vcmp.le.s32.totalorder %v1912, %v1923
        %vm1926 = vcmp.le.s32.totalorder %v1913, %v1919
        %vm1927 = vcmp.le.s32.totalorder %v1913, %v1923
        %vm1928 = vcmp.le.s32.totalorder %v1914, %v1919
        %vm1929 = vcmp.le.s32.totalorder %v1914, %v1923
        %v1930 = vsel %vm1924, 1, 0
        %v1931 = vsel %vm1925, 1, 0
        %v1932 = vsel %vm1926, 1, 0
        %v1933 = vsel %vm1927, 1, 0
        %v1934 = vsel %vm1928, 1, 0
        %v1935 = vsel %vm1929, 1, 0
        %vm1936 = vcmp.eq.s32.totalorder %v1930, 1
        %vm1937 = vcmp.eq.s32.totalorder %v1931, 1
        %vm1938 = vcmp.eq.s32.totalorder %v1932, 1
        %vm1939 = vcmp.eq.s32.totalorder %v1933, 1
        %vm1940 = vcmp.eq.s32.totalorder %v1934, 1
        %vm1941 = vcmp.eq.s32.totalorder %v1935, 1
        %v1942 = vsel %vm1936, %v1883, -inf
        %v1943 = vsel %vm1937, %v1885, -inf
        %v1944 = vsel %vm1938, %v1887, -inf
        %v1945 = vsel %vm1939, %v1889, -inf
        %v1946 = vsel %vm1940, %v1893, -inf
        %v1947 = vsel %vm1941, %v1895, -inf
        %v1948 = vsel %vm1936, %v1897, -inf
        %v1949 = vsel %vm1937, %v1899, -inf
        %v1950 = vsel %vm1938, %v1903, -inf
        %v1951 = vsel %vm1939, %v1905, -inf
        %v1952 = vsel %vm1940, %v1907, -inf
        %v1953 = vsel %vm1941, %v1909, -inf
        %v1954 = vmax.f32 %v1942, %v1944
        %v1955 = vmax.f32 %v1954, %v1946
        %v1956 = vrot.slane %v1955, 4
        %v1957 = vmax.f32 %v1955, %v1956
        %v1958 = vrot.slane %v1957, 2
        %v1959 = vmax.f32 %v1957, %v1958
        %v1960 = vrot.slane %v1959, 1
        %v1961 = vmax.f32 %v1959, %v1960
        %v1962 = vmax.f32 %v1943, %v1945
        %v1963 = vmax.f32 %v1962, %v1947
        %v1964 = vrot.slane %v1963, 4
        %v1965 = vmax.f32 %v1963, %v1964
        %v1966 = vrot.slane %v1965, 2
        %v1967 = vmax.f32 %v1965, %v1966
        %v1968 = vrot.slane %v1967, 1
        %v1969 = vmax.f32 %v1967, %v1968
        %v1970 = vmax.f32 %v1948, %v1950
        %v1971 = vmax.f32 %v1970, %v1952
        %v1972 = vrot.slane %v1971, 4
        %v1973 = vmax.f32 %v1971, %v1972
        %v1974 = vrot.slane %v1973, 2
        %v1975 = vmax.f32 %v1973, %v1974
        %v1976 = vrot.slane %v1975, 1
        %v1977 = vmax.f32 %v1975, %v1976
        %v1978 = vmax.f32 %v1949, %v1951
        %v1979 = vmax.f32 %v1978, %v1953
        %v1980 = vrot.slane %v1979, 4
        %v1981 = vmax.f32 %v1979, %v1980
        %v1982 = vrot.slane %v1981, 2
        %v1983 = vmax.f32 %v1981, %v1982
        %v1984 = vrot.slane %v1983, 1
        %v1985 = vmax.f32 %v1983, %v1984
        %v1986 = vld [vmem:[%s382] sm:$0x3]
        %v1988 = vlaneseq
        %v1989 = vshrl.u32 %v1988, 7
        %v1990 = vsub.s32 0, %v1989
        %v1991 = vrot.slane %v1986, %v1990
        %v1992 = vlaneseq
        %v1993 = vshrl.u32 %v1992, 7
        %v1994 = vsub.s32 1, %v1993
        %v1995 = vrot.slane %v1986, %v1994
        %v1998 = vadd.f32 %v1961, %v1991
        %v1999 = vadd.f32 %v1969, %v1995
        %v2000 = vadd.f32 %v1977, %v1991
        %v2001 = vadd.f32 %v1985, %v1995
        %v2002 = vmax.f32 %v1998, 0.0
        %v2003 = vmax.f32 %v1999, 0.0
        %v2004 = vmax.f32 %v2000, 0.0
        %v2005 = vmax.f32 %v2001, 0.0
        %v2010 = vcombine.low %v2002, %v2003
        %v2012 = vunpack.c.l.s4 1983009808
        %v2013 = vunpack.c.0.s8 %v2012
        %v2014 = vlaneseq
        %v2015 = vshrl.u32 %v2014, 7
        %v2016 = vsub.s32 %v2013, %v2015
        %v2017 = vrot.slane %v2010, %v2016
        %v2018 = vcombine.low %v2004, %v2005
        %v2020 = vunpack.c.l.s4 1983009808
        %v2021 = vunpack.c.0.s8 %v2020
        %v2022 = vlaneseq
        %v2023 = vshrl.u32 %v2022, 7
        %v2024 = vsub.s32 %v2021, %v2023
        %v2025 = vrot.slane %v2018, %v2024
        %vm2026 = vcmask 1044484
        %v2027 = vsel %vm2026, %v2017, %v2017
        %vm2028 = vcmask 1046534
        %v2029 = vsel %vm2028, %v2017, %v2027
        %v2030 = vrot.slane %v2025, 7
        %vm2031 = vcmask 1041409
        %v2032 = vsel %vm2031, %v2030, %v2029
        %vm2033 = vcmask 1043459
        %v2034 = vsel %vm2033, %v2030, %v2032
        %vm2035 = vcmask 1045509
        %v2036 = vsel %vm2035, %v2030, %v2034
        %vm2037 = vcmask 1047559
        %v2038 = vsel %vm2037, %v2030, %v2036
        %s2040 = smul.u32 %s30, 2
        %s2041 = smul.addr %s2040, 2
        %s2042 = scalar_lea.vmem [#allocation2], %s2041
        %2043 = vst [vmem:[%s2042] sm:$0xf] %v2038
        %p2044 = scmp.eq.s32.totalorder %s30, 0
        // Predicated region
        $region77: #{recover_cnn_forward.1} parent=51 // pred_check
          %p2045 = pneg %p2044
        $region78: #{recover_cnn_forward.1} parent=51 // pred_check_branch
          %2047 = sbr.rel (%p2045) target = $region80
        $region79: #{recover_cnn_forward.1} parent=51 // pred_region
          %2048 = vst [vmem:[#allocation3] sm:$0xff] 0.0
          %2049 = vst [vmem:[#allocation3 + $0x8] sm:$0xff] 0.0
          %2050 = vst [vmem:[#allocation3 + $0x10] sm:$0xff] 0.0
          %2051 = vst [vmem:[#allocation3 + $0x18] sm:$0xf] 0.0
        $region80: #{recover_cnn_forward.1} parent=51 // pred_fallthru
          _
        %v2052 = vld [vmem:[#allocation3] sm:$0xff]
        %v2053 = vld [vmem:[#allocation3 + $0x8] sm:$0xff]
        %v2054 = vld [vmem:[#allocation3 + $0x10] sm:$0xff]
        %v2055 = vld [vmem:[#allocation3 + $0x18] sm:$0xf]
        %v2056 = vpack.c.bf16 %v2002, %v2002
        %v2057 = vpack.c.bf16 %v2003, %v2003
        %v2058 = vpack.c.bf16 %v2004, %v2004
        %v2059 = vpack.c.bf16 %v2005, %v2005
        %v2060 = vld [vmem:[%s400] sm:$0xff]
        %v2061 = vld [vmem:[%s400 + $0x8] sm:$0xff]
        %v2062 = vld [vmem:[%s400 + $0x10] sm:$0xff]
        %v2063 = vld [vmem:[%s400 + $0x18] sm:$0xff]
        %v2064 = vld [vmem:[%s400 + $0x20] sm:$0xff]
        %v2065 = vld [vmem:[%s400 + $0x28] sm:$0xff]
        %v2066 = vld [vmem:[%s400 + $0x30] sm:$0xff]
        %v2067 = vld [vmem:[%s400 + $0x38] sm:$0xff]
        %v2068 = vld [vmem:[%s400 + $0x40] sm:$0xff]
        %v2069 = vld [vmem:[%s400 + $0x48] sm:$0xff]
        %v2070 = vld [vmem:[%s400 + $0x50] sm:$0xff]
        %v2071 = vld [vmem:[%s400 + $0x58] sm:$0xff]
        %v2072 = vld [vmem:[%s400 + $0x60] sm:$0xff]
        %v2073 = vld [vmem:[%s400 + $0x68] sm:$0xff]
        %v2074 = vld [vmem:[%s400 + $0x70] sm:$0xff]
        %v2075 = vld [vmem:[%s400 + $0x78] sm:$0xff]
        %v2076 = vld [vmem:[%s400 + $0x80] sm:$0xff]
        %v2077 = vld [vmem:[%s400 + $0x88] sm:$0xff]
        %v2078 = vld [vmem:[%s400 + $0x90] sm:$0xff]
        %v2079 = vld [vmem:[%s400 + $0x98] sm:$0xff]
        %v2080 = vld [vmem:[%s400 + $0xa0] sm:$0xff]
        %v2081 = vld [vmem:[%s400 + $0xa8] sm:$0xff]
        %v2082 = vld [vmem:[%s400 + $0xb0] sm:$0xff]
        %v2083 = vld [vmem:[%s400 + $0xb8] sm:$0xff]
        %v2084 = vld [vmem:[%s400 + $0xc0] sm:$0xff]
        %v2085 = vld [vmem:[%s400 + $0xc8] sm:$0xff]
        %v2086 = vld [vmem:[%s400 + $0xd0] sm:$0xff]
        %v2087 = vld [vmem:[%s400 + $0xd8] sm:$0xff]
        %v2088 = vld [vmem:[%s400 + $0xe0] sm:$0xff]
        %v2089 = vld [vmem:[%s400 + $0xe8] sm:$0xff]
        %v2090 = vld [vmem:[%s400 + $0xf0] sm:$0xff]
        %v2091 = vld [vmem:[%s400 + $0xf8] sm:$0xff]
        %v2092 = vld [vmem:[%s400 + $0x100] sm:$0xff]
        %v2093 = vld [vmem:[%s400 + $0x108] sm:$0xff]
        %v2094 = vld [vmem:[%s400 + $0x110] sm:$0xff]
        %v2095 = vld [vmem:[%s400 + $0x118] sm:$0xff]
        %v2096 = vld [vmem:[%s400 + $0x120] sm:$0xff]
        %v2097 = vld [vmem:[%s400 + $0x128] sm:$0xff]
        %v2098 = vld [vmem:[%s400 + $0x130] sm:$0xff]
        %v2099 = vld [vmem:[%s400 + $0x138] sm:$0xff]
        %v2100 = vld [vmem:[%s400 + $0x140] sm:$0xff]
        %v2101 = vld [vmem:[%s400 + $0x148] sm:$0xff]
        %v2102 = vld [vmem:[%s400 + $0x150] sm:$0xff]
        %v2103 = vld [vmem:[%s400 + $0x158] sm:$0xff]
        %v2104 = vld [vmem:[%s400 + $0x160] sm:$0xff]
        %v2105 = vld [vmem:[%s400 + $0x168] sm:$0xff]
        %v2106 = vld [vmem:[%s400 + $0x170] sm:$0xff]
        %v2107 = vld [vmem:[%s400 + $0x178] sm:$0xff]
        %v2108 = vld [vmem:[%s400 + $0x180] sm:$0xff]
        %v2109 = vld [vmem:[%s400 + $0x188] sm:$0xff]
        %v2110 = vld [vmem:[%s400 + $0x190] sm:$0xff]
        %v2111 = vld [vmem:[%s400 + $0x198] sm:$0xff]
        %v2112 = vld [vmem:[%s400 + $0x1a0] sm:$0xff]
        %v2113 = vld [vmem:[%s400 + $0x1a8] sm:$0xff]
        %v2114 = vld [vmem:[%s400 + $0x1b0] sm:$0xff]
        %v2115 = vld [vmem:[%s400 + $0x1b8] sm:$0xff]
        %v2116 = vld [vmem:[%s400 + $0x1c0] sm:$0xff]
        %v2117 = vld [vmem:[%s400 + $0x1c8] sm:$0xff]
        %v2118 = vld [vmem:[%s400 + $0x1d0] sm:$0xff]
        %v2119 = vld [vmem:[%s400 + $0x1d8] sm:$0xff]
        %v2120 = vld [vmem:[%s400 + $0x1e0] sm:$0xff]
        %v2121 = vld [vmem:[%s400 + $0x1e8] sm:$0xff]
        %v2122 = vld [vmem:[%s400 + $0x1f0] sm:$0xff]
        %v2123 = vld [vmem:[%s400 + $0x1f8] sm:$0xff]
        %v2124 = vld [vmem:[%s400 + $0x200] sm:$0xff]
        %v2125 = vld [vmem:[%s400 + $0x208] sm:$0xff]
        %v2126 = vld [vmem:[%s400 + $0x210] sm:$0xff]
        %v2127 = vld [vmem:[%s400 + $0x218] sm:$0xff]
        %v2128 = vld [vmem:[%s400 + $0x220] sm:$0xff]
        %v2129 = vld [vmem:[%s400 + $0x228] sm:$0xff]
        %v2130 = vld [vmem:[%s400 + $0x230] sm:$0xff]
        %v2131 = vld [vmem:[%s400 + $0x238] sm:$0xff]
        %v2132 = vld [vmem:[%s400 + $0x240] sm:$0xff]
        %v2133 = vld [vmem:[%s400 + $0x248] sm:$0xff]
        %v2134 = vld [vmem:[%s400 + $0x250] sm:$0xff]
        %v2135 = vld [vmem:[%s400 + $0x258] sm:$0xff]
        %v2136 = vld [vmem:[%s400 + $0x260] sm:$0xff]
        %v2137 = vld [vmem:[%s400 + $0x268] sm:$0xff]
        %v2138 = vld [vmem:[%s400 + $0x270] sm:$0xff]
        %v2139 = vld [vmem:[%s400 + $0x278] sm:$0xff]
        %v2140 = vld [vmem:[%s400 + $0x280] sm:$0xff]
        %v2141 = vld [vmem:[%s400 + $0x288] sm:$0xff]
        %v2142 = vld [vmem:[%s400 + $0x290] sm:$0xff]
        %v2143 = vld [vmem:[%s400 + $0x298] sm:$0xff]
        %v2144 = vld [vmem:[%s400 + $0x2a0] sm:$0xff]
        %v2145 = vld [vmem:[%s400 + $0x2a8] sm:$0xff]
        %v2146 = vld [vmem:[%s400 + $0x2b0] sm:$0xff]
        %v2147 = vld [vmem:[%s400 + $0x2b8] sm:$0xff]
        %v2148 = vld [vmem:[%s400 + $0x2c0] sm:$0xff]
        %v2149 = vld [vmem:[%s400 + $0x2c8] sm:$0xff]
        %v2150 = vld [vmem:[%s400 + $0x2d0] sm:$0xff]
        %v2151 = vld [vmem:[%s400 + $0x2d8] sm:$0xff]
        %v2152 = vld [vmem:[%s400 + $0x2e0] sm:$0xff]
        %v2153 = vld [vmem:[%s400 + $0x2e8] sm:$0xff]
        %v2154 = vld [vmem:[%s400 + $0x2f0] sm:$0xff]
        %v2155 = vld [vmem:[%s400 + $0x2f8] sm:$0xff]
        %v2156 = vld [vmem:[%s400 + $0x300] sm:$0xff]
        %v2157 = vld [vmem:[%s400 + $0x308] sm:$0xff]
        %v2158 = vld [vmem:[%s400 + $0x310] sm:$0xff]
        %v2159 = vld [vmem:[%s400 + $0x318] sm:$0xff]
        %v2160 = vld [vmem:[%s400 + $0x320] sm:$0xff]
        %v2161 = vld [vmem:[%s400 + $0x328] sm:$0xff]
        %v2162 = vld [vmem:[%s400 + $0x330] sm:$0xff]
        %v2163 = vld [vmem:[%s400 + $0x338] sm:$0xff]
        %v2164 = vld [vmem:[%s400 + $0x340] sm:$0xff]
        %v2165 = vld [vmem:[%s400 + $0x348] sm:$0xff]
        %v2166 = vld [vmem:[%s400 + $0x350] sm:$0xff]
        %v2167 = vld [vmem:[%s400 + $0x358] sm:$0xff]
        %v2168 = vld [vmem:[%s400 + $0x360] sm:$0xff]
        %v2169 = vld [vmem:[%s400 + $0x368] sm:$0xff]
        %v2170 = vld [vmem:[%s400 + $0x370] sm:$0xff]
        %v2171 = vld [vmem:[%s400 + $0x378] sm:$0xff]
        %v2172 = vld [vmem:[%s400 + $0x380] sm:$0xff]
        %v2173 = vld [vmem:[%s400 + $0x388] sm:$0xff]
        %v2174 = vld [vmem:[%s400 + $0x390] sm:$0xff]
        %v2175 = vld [vmem:[%s400 + $0x398] sm:$0xff]
        %v2176 = vld [vmem:[%s400 + $0x3a0] sm:$0xff]
        %v2177 = vld [vmem:[%s400 + $0x3a8] sm:$0xff]
        %v2178 = vld [vmem:[%s400 + $0x3b0] sm:$0xff]
        %v2179 = vld [vmem:[%s400 + $0x3b8] sm:$0xff]
        %v2180 = vld [vmem:[%s400 + $0x3c0] sm:$0xff]
        %v2181 = vld [vmem:[%s400 + $0x3c8] sm:$0xff]
        %v2182 = vld [vmem:[%s400 + $0x3d0] sm:$0xff]
        %v2183 = vld [vmem:[%s400 + $0x3d8] sm:$0xff]
        %v2184 = vld [vmem:[%s400 + $0x3e0] sm:$0xff]
        %v2185 = vld [vmem:[%s400 + $0x3e8] sm:$0xff]
        %v2186 = vld [vmem:[%s400 + $0x3f0] sm:$0xff]
        %v2187 = vld [vmem:[%s400 + $0x3f8] sm:$0xff]
        %v2188 = vld [vmem:[%s400 + $0x400] sm:$0xff]
        %v2189 = vld [vmem:[%s400 + $0x408] sm:$0xff]
        %v2190 = vld [vmem:[%s400 + $0x410] sm:$0xff]
        %v2191 = vld [vmem:[%s400 + $0x418] sm:$0xff]
        %v2192 = vld [vmem:[%s400 + $0x420] sm:$0xff]
        %v2193 = vld [vmem:[%s400 + $0x428] sm:$0xff]
        %v2194 = vld [vmem:[%s400 + $0x430] sm:$0xff]
        %v2195 = vld [vmem:[%s400 + $0x438] sm:$0xff]
        %v2196 = vld [vmem:[%s400 + $0x440] sm:$0xff]
        %v2197 = vld [vmem:[%s400 + $0x448] sm:$0xff]
        %v2198 = vld [vmem:[%s400 + $0x450] sm:$0xff]
        %v2199 = vld [vmem:[%s400 + $0x458] sm:$0xff]
        %v2200 = vld [vmem:[%s400 + $0x460] sm:$0xff]
        %v2201 = vld [vmem:[%s400 + $0x468] sm:$0xff]
        %v2202 = vld [vmem:[%s400 + $0x470] sm:$0xff]
        %v2203 = vld [vmem:[%s400 + $0x478] sm:$0xff]
        %v2204 = vld [vmem:[%s400 + $0x480] sm:$0xff]
        %v2205 = vld [vmem:[%s400 + $0x488] sm:$0xff]
        %v2206 = vld [vmem:[%s400 + $0x490] sm:$0xff]
        %v2207 = vld [vmem:[%s400 + $0x498] sm:$0xff]
        %v2208 = vld [vmem:[%s400 + $0x4a0] sm:$0xff]
        %v2209 = vld [vmem:[%s400 + $0x4a8] sm:$0xff]
        %v2210 = vld [vmem:[%s400 + $0x4b0] sm:$0xff]
        %v2211 = vld [vmem:[%s400 + $0x4b8] sm:$0xff]
        %v2212 = vld [vmem:[%s400 + $0x4c0] sm:$0xff]
        %v2213 = vld [vmem:[%s400 + $0x4c8] sm:$0xff]
        %v2214 = vld [vmem:[%s400 + $0x4d0] sm:$0xff]
        %v2215 = vld [vmem:[%s400 + $0x4d8] sm:$0xff]
        %v2216 = vld [vmem:[%s400 + $0x4e0] sm:$0xff]
        %v2217 = vld [vmem:[%s400 + $0x4e8] sm:$0xff]
        %v2218 = vld [vmem:[%s400 + $0x4f0] sm:$0xff]
        %v2219 = vld [vmem:[%s400 + $0x4f8] sm:$0xff]
        %v2220 = vld [vmem:[%s400 + $0x500] sm:$0xff]
        %v2221 = vld [vmem:[%s400 + $0x508] sm:$0xff]
        %v2222 = vld [vmem:[%s400 + $0x510] sm:$0xff]
        %v2223 = vld [vmem:[%s400 + $0x518] sm:$0xff]
        %v2224 = vld [vmem:[%s400 + $0x520] sm:$0xff]
        %v2225 = vld [vmem:[%s400 + $0x528] sm:$0xff]
        %v2226 = vld [vmem:[%s400 + $0x530] sm:$0xff]
        %v2227 = vld [vmem:[%s400 + $0x538] sm:$0xff]
        %v2228 = vld [vmem:[%s400 + $0x540] sm:$0xff]
        %v2229 = vld [vmem:[%s400 + $0x548] sm:$0xff]
        %v2230 = vld [vmem:[%s400 + $0x550] sm:$0xff]
        %v2231 = vld [vmem:[%s400 + $0x558] sm:$0xff]
        %v2232 = vld [vmem:[%s400 + $0x560] sm:$0xff]
        %v2233 = vld [vmem:[%s400 + $0x568] sm:$0xff]
        %v2234 = vld [vmem:[%s400 + $0x570] sm:$0xff]
        %v2235 = vld [vmem:[%s400 + $0x578] sm:$0xff]
        %v2236 = vld [vmem:[%s400 + $0x580] sm:$0xff]
        %v2237 = vld [vmem:[%s400 + $0x588] sm:$0xff]
        %v2238 = vld [vmem:[%s400 + $0x590] sm:$0xff]
        %v2239 = vld [vmem:[%s400 + $0x598] sm:$0xff]
        %v2240 = vld [vmem:[%s400 + $0x5a0] sm:$0xff]
        %v2241 = vld [vmem:[%s400 + $0x5a8] sm:$0xff]
        %v2242 = vld [vmem:[%s400 + $0x5b0] sm:$0xff]
        %v2243 = vld [vmem:[%s400 + $0x5b8] sm:$0xff]
        %v2244 = vld [vmem:[%s400 + $0x5c0] sm:$0xff]
        %v2245 = vld [vmem:[%s400 + $0x5c8] sm:$0xff]
        %v2246 = vld [vmem:[%s400 + $0x5d0] sm:$0xff]
        %v2247 = vld [vmem:[%s400 + $0x5d8] sm:$0xff]
        %v2248 = vld [vmem:[%s400 + $0x5e0] sm:$0xff]
        %v2249 = vld [vmem:[%s400 + $0x5e8] sm:$0xff]
        %v2250 = vld [vmem:[%s400 + $0x5f0] sm:$0xff]
        %v2251 = vld [vmem:[%s400 + $0x5f8] sm:$0xff]
        %v2252 = vld [vmem:[%s400 + $0x600] sm:$0xff]
        %v2253 = vld [vmem:[%s400 + $0x608] sm:$0xff]
        %v2254 = vld [vmem:[%s400 + $0x610] sm:$0xff]
        %v2255 = vld [vmem:[%s400 + $0x618] sm:$0xff]
        %v2256 = vld [vmem:[%s400 + $0x620] sm:$0xff]
        %v2257 = vld [vmem:[%s400 + $0x628] sm:$0xff]
        %v2258 = vld [vmem:[%s400 + $0x630] sm:$0xff]
        %v2259 = vld [vmem:[%s400 + $0x638] sm:$0xff]
        %v2260 = vld [vmem:[%s400 + $0x640] sm:$0xff]
        %v2261 = vld [vmem:[%s400 + $0x648] sm:$0xff]
        %v2262 = vld [vmem:[%s400 + $0x650] sm:$0xff]
        %v2263 = vld [vmem:[%s400 + $0x658] sm:$0xff]
        %v2264 = vld [vmem:[%s400 + $0x660] sm:$0xff]
        %v2265 = vld [vmem:[%s400 + $0x668] sm:$0xff]
        %v2266 = vld [vmem:[%s400 + $0x670] sm:$0xff]
        %v2267 = vld [vmem:[%s400 + $0x678] sm:$0xff]
        %v2268 = vld [vmem:[%s400 + $0x680] sm:$0xff]
        %v2269 = vld [vmem:[%s400 + $0x688] sm:$0xff]
        %v2270 = vld [vmem:[%s400 + $0x690] sm:$0xff]
        %v2271 = vld [vmem:[%s400 + $0x698] sm:$0xff]
        %v2272 = vld [vmem:[%s400 + $0x6a0] sm:$0xff]
        %v2273 = vld [vmem:[%s400 + $0x6a8] sm:$0xff]
        %v2274 = vld [vmem:[%s400 + $0x6b0] sm:$0xff]
        %v2275 = vld [vmem:[%s400 + $0x6b8] sm:$0xff]
        %v2276 = vld [vmem:[%s400 + $0x6c0] sm:$0xff]
        %v2277 = vld [vmem:[%s400 + $0x6c8] sm:$0xff]
        %v2278 = vld [vmem:[%s400 + $0x6d0] sm:$0xff]
        %v2279 = vld [vmem:[%s400 + $0x6d8] sm:$0xff]
        %v2280 = vld [vmem:[%s400 + $0x6e0] sm:$0xff]
        %v2281 = vld [vmem:[%s400 + $0x6e8] sm:$0xff]
        %v2282 = vld [vmem:[%s400 + $0x6f0] sm:$0xff]
        %v2283 = vld [vmem:[%s400 + $0x6f8] sm:$0xff]
        %v2288 = vunpack.c.l.b16 %v2056
        %v2289 = vunpack.c.l.b16 %v2057
        %v2290 = vunpack.c.l.b16 %v2058
        %v2291 = vunpack.c.l.b16 %v2059
        %v2292 = vrot.slane %v2290, 7
        %v2293 = vsel %vm2031, %v2292, %v2288
        %v2294 = vrot.slane %v2291, 7
        %v2295 = vsel %vm2031, %v2294, %v2289
        %v2296 = vpack.c.b16 %v2293, %v2293
        %v2297 = vpack.c.b16 %v2295, %v2295
        %v2524 = vunpack.c.l.b16 %v2060
        %v2525 = vunpack.c.h.b16 %v2060
        %v2526 = vunpack.c.l.b16 %v2061
        %v2527 = vunpack.c.h.b16 %v2061
        %v2528 = vunpack.c.l.b16 %v2062
        %v2529 = vunpack.c.h.b16 %v2062
        %v2530 = vunpack.c.l.b16 %v2063
        %v2531 = vunpack.c.h.b16 %v2063
        %v2532 = vunpack.c.l.b16 %v2064
        %v2533 = vunpack.c.h.b16 %v2064
        %v2534 = vunpack.c.l.b16 %v2065
        %v2535 = vunpack.c.h.b16 %v2065
        %v2536 = vunpack.c.l.b16 %v2066
        %v2537 = vunpack.c.h.b16 %v2066
        %v2538 = vunpack.c.l.b16 %v2067
        %v2539 = vunpack.c.h.b16 %v2067
        %v2540 = vunpack.c.l.b16 %v2068
        %v2541 = vunpack.c.h.b16 %v2068
        %v2542 = vunpack.c.l.b16 %v2069
        %v2543 = vunpack.c.h.b16 %v2069
        %v2544 = vunpack.c.l.b16 %v2070
        %v2545 = vunpack.c.h.b16 %v2070
        %v2546 = vunpack.c.l.b16 %v2071
        %v2547 = vunpack.c.h.b16 %v2071
        %v2548 = vunpack.c.l.b16 %v2072
        %v2549 = vunpack.c.h.b16 %v2072
        %v2550 = vunpack.c.l.b16 %v2073
        %v2551 = vunpack.c.h.b16 %v2073
        %v2552 = vunpack.c.l.b16 %v2074
        %v2553 = vunpack.c.h.b16 %v2074
        %v2554 = vunpack.c.l.b16 %v2075
        %v2555 = vunpack.c.h.b16 %v2075
        %v2556 = vunpack.c.l.b16 %v2076
        %v2557 = vunpack.c.h.b16 %v2076
        %v2558 = vunpack.c.l.b16 %v2077
        %v2559 = vunpack.c.h.b16 %v2077
        %v2560 = vunpack.c.l.b16 %v2078
        %v2561 = vunpack.c.h.b16 %v2078
        %v2562 = vunpack.c.l.b16 %v2079
        %v2563 = vunpack.c.h.b16 %v2079
        %v2564 = vunpack.c.l.b16 %v2080
        %v2565 = vunpack.c.h.b16 %v2080
        %v2566 = vunpack.c.l.b16 %v2081
        %v2567 = vunpack.c.h.b16 %v2081
        %v2568 = vunpack.c.l.b16 %v2082
        %v2569 = vunpack.c.h.b16 %v2082
        %v2570 = vunpack.c.l.b16 %v2083
        %v2571 = vunpack.c.h.b16 %v2083
        %v2572 = vunpack.c.l.b16 %v2084
        %v2573 = vunpack.c.h.b16 %v2084
        %v2574 = vunpack.c.l.b16 %v2085
        %v2575 = vunpack.c.h.b16 %v2085
        %v2576 = vunpack.c.l.b16 %v2086
        %v2577 = vunpack.c.h.b16 %v2086
        %v2578 = vunpack.c.l.b16 %v2087
        %v2579 = vunpack.c.h.b16 %v2087
        %v2580 = vunpack.c.l.b16 %v2088
        %v2581 = vunpack.c.h.b16 %v2088
        %v2582 = vunpack.c.l.b16 %v2089
        %v2583 = vunpack.c.h.b16 %v2089
        %v2584 = vunpack.c.l.b16 %v2090
        %v2585 = vunpack.c.h.b16 %v2090
        %v2586 = vunpack.c.l.b16 %v2091
        %v2587 = vunpack.c.h.b16 %v2091
        %v2588 = vunpack.c.l.b16 %v2092
        %v2589 = vunpack.c.h.b16 %v2092
        %v2590 = vunpack.c.l.b16 %v2093
        %v2591 = vunpack.c.h.b16 %v2093
        %v2592 = vunpack.c.l.b16 %v2094
        %v2593 = vunpack.c.h.b16 %v2094
        %v2594 = vunpack.c.l.b16 %v2095
        %v2595 = vunpack.c.h.b16 %v2095
        %v2596 = vunpack.c.l.b16 %v2096
        %v2597 = vunpack.c.h.b16 %v2096
        %v2598 = vunpack.c.l.b16 %v2097
        %v2599 = vunpack.c.h.b16 %v2097
        %v2600 = vunpack.c.l.b16 %v2098
        %v2601 = vunpack.c.h.b16 %v2098
        %v2602 = vunpack.c.l.b16 %v2099
        %v2603 = vunpack.c.h.b16 %v2099
        %v2604 = vunpack.c.l.b16 %v2100
        %v2605 = vunpack.c.h.b16 %v2100
        %v2606 = vunpack.c.l.b16 %v2101
        %v2607 = vunpack.c.h.b16 %v2101
        %v2608 = vunpack.c.l.b16 %v2102
        %v2609 = vunpack.c.h.b16 %v2102
        %v2610 = vunpack.c.l.b16 %v2103
        %v2611 = vunpack.c.h.b16 %v2103
        %v2612 = vunpack.c.l.b16 %v2104
        %v2613 = vunpack.c.h.b16 %v2104
        %v2614 = vunpack.c.l.b16 %v2105
        %v2615 = vunpack.c.h.b16 %v2105
        %v2616 = vunpack.c.l.b16 %v2106
        %v2617 = vunpack.c.h.b16 %v2106
        %v2618 = vunpack.c.l.b16 %v2107
        %v2619 = vunpack.c.h.b16 %v2107
        %v2620 = vunpack.c.l.b16 %v2108
        %v2621 = vunpack.c.h.b16 %v2108
        %v2622 = vunpack.c.l.b16 %v2109
        %v2623 = vunpack.c.h.b16 %v2109
        %v2624 = vunpack.c.l.b16 %v2110
        %v2625 = vunpack.c.h.b16 %v2110
        %v2626 = vunpack.c.l.b16 %v2111
        %v2627 = vunpack.c.h.b16 %v2111
        %v2628 = vunpack.c.l.b16 %v2112
        %v2629 = vunpack.c.h.b16 %v2112
        %v2630 = vunpack.c.l.b16 %v2113
        %v2631 = vunpack.c.h.b16 %v2113
        %v2632 = vunpack.c.l.b16 %v2114
        %v2633 = vunpack.c.h.b16 %v2114
        %v2634 = vunpack.c.l.b16 %v2115
        %v2635 = vunpack.c.h.b16 %v2115
        %v2636 = vunpack.c.l.b16 %v2116
        %v2637 = vunpack.c.h.b16 %v2116
        %v2638 = vunpack.c.l.b16 %v2117
        %v2639 = vunpack.c.h.b16 %v2117
        %v2640 = vunpack.c.l.b16 %v2118
        %v2641 = vunpack.c.h.b16 %v2118
        %v2642 = vunpack.c.l.b16 %v2119
        %v2643 = vunpack.c.h.b16 %v2119
        %v2644 = vunpack.c.l.b16 %v2120
        %v2645 = vunpack.c.h.b16 %v2120
        %v2646 = vunpack.c.l.b16 %v2121
        %v2647 = vunpack.c.h.b16 %v2121
        %v2648 = vunpack.c.l.b16 %v2122
        %v2649 = vunpack.c.h.b16 %v2122
        %v2650 = vunpack.c.l.b16 %v2123
        %v2651 = vunpack.c.h.b16 %v2123
        %v2652 = vunpack.c.l.b16 %v2124
        %v2653 = vunpack.c.h.b16 %v2124
        %v2654 = vunpack.c.l.b16 %v2125
        %v2655 = vunpack.c.h.b16 %v2125
        %v2656 = vunpack.c.l.b16 %v2126
        %v2657 = vunpack.c.h.b16 %v2126
        %v2658 = vunpack.c.l.b16 %v2127
        %v2659 = vunpack.c.h.b16 %v2127
        %v2660 = vunpack.c.l.b16 %v2128
        %v2661 = vunpack.c.h.b16 %v2128
        %v2662 = vunpack.c.l.b16 %v2129
        %v2663 = vunpack.c.h.b16 %v2129
        %v2664 = vunpack.c.l.b16 %v2130
        %v2665 = vunpack.c.h.b16 %v2130
        %v2666 = vunpack.c.l.b16 %v2131
        %v2667 = vunpack.c.h.b16 %v2131
        %v2668 = vunpack.c.l.b16 %v2132
        %v2669 = vunpack.c.h.b16 %v2132
        %v2670 = vunpack.c.l.b16 %v2133
        %v2671 = vunpack.c.h.b16 %v2133
        %v2672 = vunpack.c.l.b16 %v2134
        %v2673 = vunpack.c.h.b16 %v2134
        %v2674 = vunpack.c.l.b16 %v2135
        %v2675 = vunpack.c.h.b16 %v2135
        %v2676 = vunpack.c.l.b16 %v2136
        %v2677 = vunpack.c.h.b16 %v2136
        %v2678 = vunpack.c.l.b16 %v2137
        %v2679 = vunpack.c.h.b16 %v2137
        %v2680 = vunpack.c.l.b16 %v2138
        %v2681 = vunpack.c.h.b16 %v2138
        %v2682 = vunpack.c.l.b16 %v2139
        %v2683 = vunpack.c.h.b16 %v2139
        %v2684 = vunpack.c.l.b16 %v2140
        %v2685 = vunpack.c.h.b16 %v2140
        %v2686 = vunpack.c.l.b16 %v2141
        %v2687 = vunpack.c.h.b16 %v2141
        %v2688 = vunpack.c.l.b16 %v2142
        %v2689 = vunpack.c.h.b16 %v2142
        %v2690 = vunpack.c.l.b16 %v2143
        %v2691 = vunpack.c.h.b16 %v2143
        %v2692 = vunpack.c.l.b16 %v2144
        %v2693 = vunpack.c.h.b16 %v2144
        %v2694 = vunpack.c.l.b16 %v2145
        %v2695 = vunpack.c.h.b16 %v2145
        %v2696 = vunpack.c.l.b16 %v2146
        %v2697 = vunpack.c.h.b16 %v2146
        %v2698 = vunpack.c.l.b16 %v2147
        %v2699 = vunpack.c.h.b16 %v2147
        %v2700 = vunpack.c.l.b16 %v2148
        %v2701 = vunpack.c.h.b16 %v2148
        %v2702 = vunpack.c.l.b16 %v2149
        %v2703 = vunpack.c.h.b16 %v2149
        %v2704 = vunpack.c.l.b16 %v2150
        %v2705 = vunpack.c.h.b16 %v2150
        %v2706 = vunpack.c.l.b16 %v2151
        %v2707 = vunpack.c.h.b16 %v2151
        %v2708 = vunpack.c.l.b16 %v2152
        %v2709 = vunpack.c.h.b16 %v2152
        %v2710 = vunpack.c.l.b16 %v2153
        %v2711 = vunpack.c.h.b16 %v2153
        %v2712 = vunpack.c.l.b16 %v2154
        %v2713 = vunpack.c.h.b16 %v2154
        %v2714 = vunpack.c.l.b16 %v2155
        %v2715 = vunpack.c.h.b16 %v2155
        %v2716 = vunpack.c.l.b16 %v2156
        %v2717 = vunpack.c.h.b16 %v2156
        %v2718 = vunpack.c.l.b16 %v2157
        %v2719 = vunpack.c.h.b16 %v2157
        %v2720 = vunpack.c.l.b16 %v2158
        %v2721 = vunpack.c.h.b16 %v2158
        %v2722 = vunpack.c.l.b16 %v2159
        %v2723 = vunpack.c.h.b16 %v2159
        %v2724 = vunpack.c.l.b16 %v2160
        %v2725 = vunpack.c.h.b16 %v2160
        %v2726 = vunpack.c.l.b16 %v2161
        %v2727 = vunpack.c.h.b16 %v2161
        %v2728 = vunpack.c.l.b16 %v2162
        %v2729 = vunpack.c.h.b16 %v2162
        %v2730 = vunpack.c.l.b16 %v2163
        %v2731 = vunpack.c.h.b16 %v2163
        %v2732 = vunpack.c.l.b16 %v2164
        %v2733 = vunpack.c.h.b16 %v2164
        %v2734 = vunpack.c.l.b16 %v2165
        %v2735 = vunpack.c.h.b16 %v2165
        %v2736 = vunpack.c.l.b16 %v2166
        %v2737 = vunpack.c.h.b16 %v2166
        %v2738 = vunpack.c.l.b16 %v2167
        %v2739 = vunpack.c.h.b16 %v2167
        %v2740 = vunpack.c.l.b16 %v2168
        %v2741 = vunpack.c.h.b16 %v2168
        %v2742 = vunpack.c.l.b16 %v2169
        %v2743 = vunpack.c.h.b16 %v2169
        %v2744 = vunpack.c.l.b16 %v2170
        %v2745 = vunpack.c.h.b16 %v2170
        %v2746 = vunpack.c.l.b16 %v2171
        %v2747 = vunpack.c.h.b16 %v2171
        %v2748 = vunpack.c.l.b16 %v2172
        %v2749 = vunpack.c.h.b16 %v2172
        %v2750 = vunpack.c.l.b16 %v2173
        %v2751 = vunpack.c.h.b16 %v2173
        %v2752 = vunpack.c.l.b16 %v2174
        %v2753 = vunpack.c.h.b16 %v2174
        %v2754 = vunpack.c.l.b16 %v2175
        %v2755 = vunpack.c.h.b16 %v2175
        %v2756 = vunpack.c.l.b16 %v2176
        %v2757 = vunpack.c.h.b16 %v2176
        %v2758 = vunpack.c.l.b16 %v2177
        %v2759 = vunpack.c.h.b16 %v2177
        %v2760 = vunpack.c.l.b16 %v2178
        %v2761 = vunpack.c.h.b16 %v2178
        %v2762 = vunpack.c.l.b16 %v2179
        %v2763 = vunpack.c.h.b16 %v2179
        %v2764 = vunpack.c.l.b16 %v2180
        %v2765 = vunpack.c.h.b16 %v2180
        %v2766 = vunpack.c.l.b16 %v2181
        %v2767 = vunpack.c.h.b16 %v2181
        %v2768 = vunpack.c.l.b16 %v2182
        %v2769 = vunpack.c.h.b16 %v2182
        %v2770 = vunpack.c.l.b16 %v2183
        %v2771 = vunpack.c.h.b16 %v2183
        %v2772 = vunpack.c.l.b16 %v2184
        %v2773 = vunpack.c.h.b16 %v2184
        %v2774 = vunpack.c.l.b16 %v2185
        %v2775 = vunpack.c.h.b16 %v2185
        %v2776 = vunpack.c.l.b16 %v2186
        %v2777 = vunpack.c.h.b16 %v2186
        %v2778 = vunpack.c.l.b16 %v2187
        %v2779 = vunpack.c.h.b16 %v2187
        %v2780 = vunpack.c.l.b16 %v2188
        %v2781 = vunpack.c.h.b16 %v2188
        %v2782 = vunpack.c.l.b16 %v2189
        %v2783 = vunpack.c.h.b16 %v2189
        %v2784 = vunpack.c.l.b16 %v2190
        %v2785 = vunpack.c.h.b16 %v2190
        %v2786 = vunpack.c.l.b16 %v2191
        %v2787 = vunpack.c.h.b16 %v2191
        %v2788 = vunpack.c.l.b16 %v2192
        %v2789 = vunpack.c.h.b16 %v2192
        %v2790 = vunpack.c.l.b16 %v2193
        %v2791 = vunpack.c.h.b16 %v2193
        %v2792 = vunpack.c.l.b16 %v2194
        %v2793 = vunpack.c.h.b16 %v2194
        %v2794 = vunpack.c.l.b16 %v2195
        %v2795 = vunpack.c.h.b16 %v2195
        %v2796 = vunpack.c.l.b16 %v2196
        %v2797 = vunpack.c.h.b16 %v2196
        %v2798 = vunpack.c.l.b16 %v2197
        %v2799 = vunpack.c.h.b16 %v2197
        %v2800 = vunpack.c.l.b16 %v2198
        %v2801 = vunpack.c.h.b16 %v2198
        %v2802 = vunpack.c.l.b16 %v2199
        %v2803 = vunpack.c.h.b16 %v2199
        %v2804 = vunpack.c.l.b16 %v2200
        %v2805 = vunpack.c.h.b16 %v2200
        %v2806 = vunpack.c.l.b16 %v2201
        %v2807 = vunpack.c.h.b16 %v2201
        %v2808 = vunpack.c.l.b16 %v2202
        %v2809 = vunpack.c.h.b16 %v2202
        %v2810 = vunpack.c.l.b16 %v2203
        %v2811 = vunpack.c.h.b16 %v2203
        %v2812 = vunpack.c.l.b16 %v2204
        %v2813 = vunpack.c.h.b16 %v2204
        %v2814 = vunpack.c.l.b16 %v2205
        %v2815 = vunpack.c.h.b16 %v2205
        %v2816 = vunpack.c.l.b16 %v2206
        %v2817 = vunpack.c.h.b16 %v2206
        %v2818 = vunpack.c.l.b16 %v2207
        %v2819 = vunpack.c.h.b16 %v2207
        %v2820 = vunpack.c.l.b16 %v2208
        %v2821 = vunpack.c.h.b16 %v2208
        %v2822 = vunpack.c.l.b16 %v2209
        %v2823 = vunpack.c.h.b16 %v2209
        %v2824 = vunpack.c.l.b16 %v2210
        %v2825 = vunpack.c.h.b16 %v2210
        %v2826 = vunpack.c.l.b16 %v2211
        %v2827 = vunpack.c.h.b16 %v2211
        %v2828 = vunpack.c.l.b16 %v2212
        %v2829 = vunpack.c.h.b16 %v2212
        %v2830 = vunpack.c.l.b16 %v2213
        %v2831 = vunpack.c.h.b16 %v2213
        %v2832 = vunpack.c.l.b16 %v2214
        %v2833 = vunpack.c.h.b16 %v2214
        %v2834 = vunpack.c.l.b16 %v2215
        %v2835 = vunpack.c.h.b16 %v2215
        %v2836 = vunpack.c.l.b16 %v2216
        %v2837 = vunpack.c.h.b16 %v2216
        %v2838 = vunpack.c.l.b16 %v2217
        %v2839 = vunpack.c.h.b16 %v2217
        %v2840 = vunpack.c.l.b16 %v2218
        %v2841 = vunpack.c.h.b16 %v2218
        %v2842 = vunpack.c.l.b16 %v2219
        %v2843 = vunpack.c.h.b16 %v2219
        %v2844 = vunpack.c.l.b16 %v2220
        %v2845 = vunpack.c.h.b16 %v2220
        %v2846 = vunpack.c.l.b16 %v2221
        %v2847 = vunpack.c.h.b16 %v2221
        %v2848 = vunpack.c.l.b16 %v2222
        %v2849 = vunpack.c.h.b16 %v2222
        %v2850 = vunpack.c.l.b16 %v2223
        %v2851 = vunpack.c.h.b16 %v2223
        %v2852 = vunpack.c.l.b16 %v2224
        %v2853 = vunpack.c.h.b16 %v2224
        %v2854 = vunpack.c.l.b16 %v2225
        %v2855 = vunpack.c.h.b16 %v2225
        %v2856 = vunpack.c.l.b16 %v2226
        %v2857 = vunpack.c.h.b16 %v2226
        %v2858 = vunpack.c.l.b16 %v2227
        %v2859 = vunpack.c.h.b16 %v2227
        %v2860 = vunpack.c.l.b16 %v2228
        %v2861 = vunpack.c.h.b16 %v2228
        %v2862 = vunpack.c.l.b16 %v2229
        %v2863 = vunpack.c.h.b16 %v2229
        %v2864 = vunpack.c.l.b16 %v2230
        %v2865 = vunpack.c.h.b16 %v2230
        %v2866 = vunpack.c.l.b16 %v2231
        %v2867 = vunpack.c.h.b16 %v2231
        %v2868 = vunpack.c.l.b16 %v2232
        %v2869 = vunpack.c.h.b16 %v2232
        %v2870 = vunpack.c.l.b16 %v2233
        %v2871 = vunpack.c.h.b16 %v2233
        %v2872 = vunpack.c.l.b16 %v2234
        %v2873 = vunpack.c.h.b16 %v2234
        %v2874 = vunpack.c.l.b16 %v2235
        %v2875 = vunpack.c.h.b16 %v2235
        %v2876 = vunpack.c.l.b16 %v2236
        %v2877 = vunpack.c.h.b16 %v2236
        %v2878 = vunpack.c.l.b16 %v2237
        %v2879 = vunpack.c.h.b16 %v2237
        %v2880 = vunpack.c.l.b16 %v2238
        %v2881 = vunpack.c.h.b16 %v2238
        %v2882 = vunpack.c.l.b16 %v2239
        %v2883 = vunpack.c.h.b16 %v2239
        %v2884 = vunpack.c.l.b16 %v2240
        %v2885 = vunpack.c.h.b16 %v2240
        %v2886 = vunpack.c.l.b16 %v2241
        %v2887 = vunpack.c.h.b16 %v2241
        %v2888 = vunpack.c.l.b16 %v2242
        %v2889 = vunpack.c.h.b16 %v2242
        %v2890 = vunpack.c.l.b16 %v2243
        %v2891 = vunpack.c.h.b16 %v2243
        %v2892 = vunpack.c.l.b16 %v2244
        %v2893 = vunpack.c.h.b16 %v2244
        %v2894 = vunpack.c.l.b16 %v2245
        %v2895 = vunpack.c.h.b16 %v2245
        %v2896 = vunpack.c.l.b16 %v2246
        %v2897 = vunpack.c.h.b16 %v2246
        %v2898 = vunpack.c.l.b16 %v2247
        %v2899 = vunpack.c.h.b16 %v2247
        %v2900 = vunpack.c.l.b16 %v2248
        %v2901 = vunpack.c.h.b16 %v2248
        %v2902 = vunpack.c.l.b16 %v2249
        %v2903 = vunpack.c.h.b16 %v2249
        %v2904 = vunpack.c.l.b16 %v2250
        %v2905 = vunpack.c.h.b16 %v2250
        %v2906 = vunpack.c.l.b16 %v2251
        %v2907 = vunpack.c.h.b16 %v2251
        %v2908 = vunpack.c.l.b16 %v2252
        %v2909 = vunpack.c.h.b16 %v2252
        %v2910 = vunpack.c.l.b16 %v2253
        %v2911 = vunpack.c.h.b16 %v2253
        %v2912 = vunpack.c.l.b16 %v2254
        %v2913 = vunpack.c.h.b16 %v2254
        %v2914 = vunpack.c.l.b16 %v2255
        %v2915 = vunpack.c.h.b16 %v2255
        %v2916 = vunpack.c.l.b16 %v2256
        %v2917 = vunpack.c.h.b16 %v2256
        %v2918 = vunpack.c.l.b16 %v2257
        %v2919 = vunpack.c.h.b16 %v2257
        %v2920 = vunpack.c.l.b16 %v2258
        %v2921 = vunpack.c.h.b16 %v2258
        %v2922 = vunpack.c.l.b16 %v2259
        %v2923 = vunpack.c.h.b16 %v2259
        %v2924 = vunpack.c.l.b16 %v2260
        %v2925 = vunpack.c.h.b16 %v2260
        %v2926 = vunpack.c.l.b16 %v2261
        %v2927 = vunpack.c.h.b16 %v2261
        %v2928 = vunpack.c.l.b16 %v2262
        %v2929 = vunpack.c.h.b16 %v2262
        %v2930 = vunpack.c.l.b16 %v2263
        %v2931 = vunpack.c.h.b16 %v2263
        %v2932 = vunpack.c.l.b16 %v2264
        %v2933 = vunpack.c.h.b16 %v2264
        %v2934 = vunpack.c.l.b16 %v2265
        %v2935 = vunpack.c.h.b16 %v2265
        %v2936 = vunpack.c.l.b16 %v2266
        %v2937 = vunpack.c.h.b16 %v2266
        %v2938 = vunpack.c.l.b16 %v2267
        %v2939 = vunpack.c.h.b16 %v2267
        %v2940 = vunpack.c.l.b16 %v2268
        %v2941 = vunpack.c.h.b16 %v2268
        %v2942 = vunpack.c.l.b16 %v2269
        %v2943 = vunpack.c.h.b16 %v2269
        %v2944 = vunpack.c.l.b16 %v2270
        %v2945 = vunpack.c.h.b16 %v2270
        %v2946 = vunpack.c.l.b16 %v2271
        %v2947 = vunpack.c.h.b16 %v2271
        %v2948 = vunpack.c.l.b16 %v2272
        %v2949 = vunpack.c.h.b16 %v2272
        %v2950 = vunpack.c.l.b16 %v2273
        %v2951 = vunpack.c.h.b16 %v2273
        %v2952 = vunpack.c.l.b16 %v2274
        %v2953 = vunpack.c.h.b16 %v2274
        %v2954 = vunpack.c.l.b16 %v2275
        %v2955 = vunpack.c.h.b16 %v2275
        %v2956 = vunpack.c.l.b16 %v2276
        %v2957 = vunpack.c.h.b16 %v2276
        %v2958 = vunpack.c.l.b16 %v2277
        %v2959 = vunpack.c.h.b16 %v2277
        %v2960 = vunpack.c.l.b16 %v2278
        %v2961 = vunpack.c.h.b16 %v2278
        %v2962 = vunpack.c.l.b16 %v2279
        %v2963 = vunpack.c.h.b16 %v2279
        %v2964 = vunpack.c.l.b16 %v2280
        %v2965 = vunpack.c.h.b16 %v2280
        %v2966 = vunpack.c.l.b16 %v2281
        %v2967 = vunpack.c.h.b16 %v2281
        %v2968 = vunpack.c.l.b16 %v2282
        %v2969 = vunpack.c.h.b16 %v2282
        %v2970 = vunpack.c.l.b16 %v2283
        %v2971 = vunpack.c.h.b16 %v2283
        %v2972 = vpack.c.b16 %v2538, %v2524
        %v2973 = vpack.c.b16 %v2539, %v2525
        %v2974 = vpack.c.b16 %v2540, %v2526
        %v2975 = vpack.c.b16 %v2541, %v2527
        %v2976 = vpack.c.b16 %v2542, %v2528
        %v2977 = vpack.c.b16 %v2543, %v2529
        %v2978 = vpack.c.b16 %v2544, %v2530
        %v2979 = vpack.c.b16 %v2545, %v2531
        %v2980 = vpack.c.b16 %v2546, %v2532
        %v2981 = vpack.c.b16 %v2547, %v2533
        %v2982 = vpack.c.b16 %v2548, %v2534
        %v2983 = vpack.c.b16 %v2549, %v2535
        %v2984 = vpack.c.b16 %v2550, %v2536
        %v2985 = vpack.c.b16 %v2551, %v2537
        %v2986 = vpack.c.b16 %v2566, %v2552
        %v2987 = vpack.c.b16 %v2567, %v2553
        %v2988 = vpack.c.b16 %v2568, %v2554
        %v2989 = vpack.c.b16 %v2569, %v2555
        %v2990 = vpack.c.b16 %v2570, %v2556
        %v2991 = vpack.c.b16 %v2571, %v2557
        %v2992 = vpack.c.b16 %v2572, %v2558
        %v2993 = vpack.c.b16 %v2573, %v2559
        %v2994 = vpack.c.b16 %v2574, %v2560
        %v2995 = vpack.c.b16 %v2575, %v2561
        %v2996 = vpack.c.b16 %v2576, %v2562
        %v2997 = vpack.c.b16 %v2577, %v2563
        %v2998 = vpack.c.b16 %v2578, %v2564
        %v2999 = vpack.c.b16 %v2579, %v2565
        %v3000 = vpack.c.b16 %v2594, %v2580
        %v3001 = vpack.c.b16 %v2595, %v2581
        %v3002 = vpack.c.b16 %v2596, %v2582
        %v3003 = vpack.c.b16 %v2597, %v2583
        %v3004 = vpack.c.b16 %v2598, %v2584
        %v3005 = vpack.c.b16 %v2599, %v2585
        %v3006 = vpack.c.b16 %v2600, %v2586
        %v3007 = vpack.c.b16 %v2601, %v2587
        %v3008 = vpack.c.b16 %v2602, %v2588
        %v3009 = vpack.c.b16 %v2603, %v2589
        %v3010 = vpack.c.b16 %v2604, %v2590
        %v3011 = vpack.c.b16 %v2605, %v2591
        %v3012 = vpack.c.b16 %v2606, %v2592
        %v3013 = vpack.c.b16 %v2607, %v2593
        %v3014 = vpack.c.b16 %v2622, %v2608
        %v3015 = vpack.c.b16 %v2623, %v2609
        %v3016 = vpack.c.b16 %v2624, %v2610
        %v3017 = vpack.c.b16 %v2625, %v2611
        %v3018 = vpack.c.b16 %v2626, %v2612
        %v3019 = vpack.c.b16 %v2627, %v2613
        %v3020 = vpack.c.b16 %v2628, %v2614
        %v3021 = vpack.c.b16 %v2629, %v2615
        %v3022 = vpack.c.b16 %v2630, %v2616
        %v3023 = vpack.c.b16 %v2631, %v2617
        %v3024 = vpack.c.b16 %v2632, %v2618
        %v3025 = vpack.c.b16 %v2633, %v2619
        %v3026 = vpack.c.b16 %v2634, %v2620
        %v3027 = vpack.c.b16 %v2635, %v2621
        %v3028 = vpack.c.b16 %v2650, %v2636
        %v3029 = vpack.c.b16 %v2651, %v2637
        %v3030 = vpack.c.b16 %v2652, %v2638
        %v3031 = vpack.c.b16 %v2653, %v2639
        %v3032 = vpack.c.b16 %v2654, %v2640
        %v3033 = vpack.c.b16 %v2655, %v2641
        %v3034 = vpack.c.b16 %v2656, %v2642
        %v3035 = vpack.c.b16 %v2657, %v2643
        %v3036 = vpack.c.b16 %v2658, %v2644
        %v3037 = vpack.c.b16 %v2659, %v2645
        %v3038 = vpack.c.b16 %v2660, %v2646
        %v3039 = vpack.c.b16 %v2661, %v2647
        %v3040 = vpack.c.b16 %v2662, %v2648
        %v3041 = vpack.c.b16 %v2663, %v2649
        %v3042 = vpack.c.b16 %v2678, %v2664
        %v3043 = vpack.c.b16 %v2679, %v2665
        %v3044 = vpack.c.b16 %v2680, %v2666
        %v3045 = vpack.c.b16 %v2681, %v2667
        %v3046 = vpack.c.b16 %v2682, %v2668
        %v3047 = vpack.c.b16 %v2683, %v2669
        %v3048 = vpack.c.b16 %v2684, %v2670
        %v3049 = vpack.c.b16 %v2685, %v2671
        %v3050 = vpack.c.b16 %v2686, %v2672
        %v3051 = vpack.c.b16 %v2687, %v2673
        %v3052 = vpack.c.b16 %v2688, %v2674
        %v3053 = vpack.c.b16 %v2689, %v2675
        %v3054 = vpack.c.b16 %v2690, %v2676
        %v3055 = vpack.c.b16 %v2691, %v2677
        %v3056 = vpack.c.b16 %v2706, %v2692
        %v3057 = vpack.c.b16 %v2707, %v2693
        %v3058 = vpack.c.b16 %v2708, %v2694
        %v3059 = vpack.c.b16 %v2709, %v2695
        %v3060 = vpack.c.b16 %v2710, %v2696
        %v3061 = vpack.c.b16 %v2711, %v2697
        %v3062 = vpack.c.b16 %v2712, %v2698
        %v3063 = vpack.c.b16 %v2713, %v2699
        %v3064 = vpack.c.b16 %v2714, %v2700
        %v3065 = vpack.c.b16 %v2715, %v2701
        %v3066 = vpack.c.b16 %v2716, %v2702
        %v3067 = vpack.c.b16 %v2717, %v2703
        %v3068 = vpack.c.b16 %v2718, %v2704
        %v3069 = vpack.c.b16 %v2719, %v2705
        %v3070 = vpack.c.b16 %v2734, %v2720
        %v3071 = vpack.c.b16 %v2735, %v2721
        %v3072 = vpack.c.b16 %v2736, %v2722
        %v3073 = vpack.c.b16 %v2737, %v2723
        %v3074 = vpack.c.b16 %v2738, %v2724
        %v3075 = vpack.c.b16 %v2739, %v2725
        %v3076 = vpack.c.b16 %v2740, %v2726
        %v3077 = vpack.c.b16 %v2741, %v2727
        %v3078 = vpack.c.b16 %v2742, %v2728
        %v3079 = vpack.c.b16 %v2743, %v2729
        %v3080 = vpack.c.b16 %v2744, %v2730
        %v3081 = vpack.c.b16 %v2745, %v2731
        %v3082 = vpack.c.b16 %v2746, %v2732
        %v3083 = vpack.c.b16 %v2747, %v2733
        %v3084 = vpack.c.b16 %v2762, %v2748
        %v3085 = vpack.c.b16 %v2763, %v2749
        %v3086 = vpack.c.b16 %v2764, %v2750
        %v3087 = vpack.c.b16 %v2765, %v2751
        %v3088 = vpack.c.b16 %v2766, %v2752
        %v3089 = vpack.c.b16 %v2767, %v2753
        %v3090 = vpack.c.b16 %v2768, %v2754
        %v3091 = vpack.c.b16 %v2769, %v2755
        %v3092 = vpack.c.b16 %v2770, %v2756
        %v3093 = vpack.c.b16 %v2771, %v2757
        %v3094 = vpack.c.b16 %v2772, %v2758
        %v3095 = vpack.c.b16 %v2773, %v2759
        %v3096 = vpack.c.b16 %v2774, %v2760
        %v3097 = vpack.c.b16 %v2775, %v2761
        %v3098 = vpack.c.b16 %v2790, %v2776
        %v3099 = vpack.c.b16 %v2791, %v2777
        %v3100 = vpack.c.b16 %v2792, %v2778
        %v3101 = vpack.c.b16 %v2793, %v2779
        %v3102 = vpack.c.b16 %v2794, %v2780
        %v3103 = vpack.c.b16 %v2795, %v2781
        %v3104 = vpack.c.b16 %v2796, %v2782
        %v3105 = vpack.c.b16 %v2797, %v2783
        %v3106 = vpack.c.b16 %v2798, %v2784
        %v3107 = vpack.c.b16 %v2799, %v2785
        %v3108 = vpack.c.b16 %v2800, %v2786
        %v3109 = vpack.c.b16 %v2801, %v2787
        %v3110 = vpack.c.b16 %v2802, %v2788
        %v3111 = vpack.c.b16 %v2803, %v2789
        %v3112 = vpack.c.b16 %v2818, %v2804
        %v3113 = vpack.c.b16 %v2819, %v2805
        %v3114 = vpack.c.b16 %v2820, %v2806
        %v3115 = vpack.c.b16 %v2821, %v2807
        %v3116 = vpack.c.b16 %v2822, %v2808
        %v3117 = vpack.c.b16 %v2823, %v2809
        %v3118 = vpack.c.b16 %v2824, %v2810
        %v3119 = vpack.c.b16 %v2825, %v2811
        %v3120 = vpack.c.b16 %v2826, %v2812
        %v3121 = vpack.c.b16 %v2827, %v2813
        %v3122 = vpack.c.b16 %v2828, %v2814
        %v3123 = vpack.c.b16 %v2829, %v2815
        %v3124 = vpack.c.b16 %v2830, %v2816
        %v3125 = vpack.c.b16 %v2831, %v2817
        %v3126 = vpack.c.b16 %v2846, %v2832
        %v3127 = vpack.c.b16 %v2847, %v2833
        %v3128 = vpack.c.b16 %v2848, %v2834
        %v3129 = vpack.c.b16 %v2849, %v2835
        %v3130 = vpack.c.b16 %v2850, %v2836
        %v3131 = vpack.c.b16 %v2851, %v2837
        %v3132 = vpack.c.b16 %v2852, %v2838
        %v3133 = vpack.c.b16 %v2853, %v2839
        %v3134 = vpack.c.b16 %v2854, %v2840
        %v3135 = vpack.c.b16 %v2855, %v2841
        %v3136 = vpack.c.b16 %v2856, %v2842
        %v3137 = vpack.c.b16 %v2857, %v2843
        %v3138 = vpack.c.b16 %v2858, %v2844
        %v3139 = vpack.c.b16 %v2859, %v2845
        %v3140 = vpack.c.b16 %v2874, %v2860
        %v3141 = vpack.c.b16 %v2875, %v2861
        %v3142 = vpack.c.b16 %v2876, %v2862
        %v3143 = vpack.c.b16 %v2877, %v2863
        %v3144 = vpack.c.b16 %v2878, %v2864
        %v3145 = vpack.c.b16 %v2879, %v2865
        %v3146 = vpack.c.b16 %v2880, %v2866
        %v3147 = vpack.c.b16 %v2881, %v2867
        %v3148 = vpack.c.b16 %v2882, %v2868
        %v3149 = vpack.c.b16 %v2883, %v2869
        %v3150 = vpack.c.b16 %v2884, %v2870
        %v3151 = vpack.c.b16 %v2885, %v2871
        %v3152 = vpack.c.b16 %v2886, %v2872
        %v3153 = vpack.c.b16 %v2887, %v2873
        %v3154 = vpack.c.b16 %v2902, %v2888
        %v3155 = vpack.c.b16 %v2903, %v2889
        %v3156 = vpack.c.b16 %v2904, %v2890
        %v3157 = vpack.c.b16 %v2905, %v2891
        %v3158 = vpack.c.b16 %v2906, %v2892
        %v3159 = vpack.c.b16 %v2907, %v2893
        %v3160 = vpack.c.b16 %v2908, %v2894
        %v3161 = vpack.c.b16 %v2909, %v2895
        %v3162 = vpack.c.b16 %v2910, %v2896
        %v3163 = vpack.c.b16 %v2911, %v2897
        %v3164 = vpack.c.b16 %v2912, %v2898
        %v3165 = vpack.c.b16 %v2913, %v2899
        %v3166 = vpack.c.b16 %v2914, %v2900
        %v3167 = vpack.c.b16 %v2915, %v2901
        %v3168 = vpack.c.b16 %v2930, %v2916
        %v3169 = vpack.c.b16 %v2931, %v2917
        %v3170 = vpack.c.b16 %v2932, %v2918
        %v3171 = vpack.c.b16 %v2933, %v2919
        %v3172 = vpack.c.b16 %v2934, %v2920
        %v3173 = vpack.c.b16 %v2935, %v2921
        %v3174 = vpack.c.b16 %v2936, %v2922
        %v3175 = vpack.c.b16 %v2937, %v2923
        %v3176 = vpack.c.b16 %v2938, %v2924
        %v3177 = vpack.c.b16 %v2939, %v2925
        %v3178 = vpack.c.b16 %v2940, %v2926
        %v3179 = vpack.c.b16 %v2941, %v2927
        %v3180 = vpack.c.b16 %v2942, %v2928
        %v3181 = vpack.c.b16 %v2943, %v2929
        %v3182 = vpack.c.b16 %v2958, %v2944
        %v3183 = vpack.c.b16 %v2959, %v2945
        %v3184 = vpack.c.b16 %v2960, %v2946
        %v3185 = vpack.c.b16 %v2961, %v2947
        %v3186 = vpack.c.b16 %v2962, %v2948
        %v3187 = vpack.c.b16 %v2963, %v2949
        %v3188 = vpack.c.b16 %v2964, %v2950
        %v3189 = vpack.c.b16 %v2965, %v2951
        %v3190 = vpack.c.b16 %v2966, %v2952
        %v3191 = vpack.c.b16 %v2967, %v2953
        %v3192 = vpack.c.b16 %v2968, %v2954
        %v3193 = vpack.c.b16 %v2969, %v2955
        %v3194 = vpack.c.b16 %v2970, %v2956
        %v3195 = vpack.c.b16 %v2971, %v2957
        %3420 = vmatprep.subr.bf16.mxu0 %v3071
        %3421 = vmatpush1.bf16.msra.mxu0 %v3070
        %3422 = vmatprep.subr.bf16.mxu0 %v3057
        %3423 = vmatpush1.bf16.msra.mxu0 %v3056
        %3424 = vmatprep.subr.bf16.mxu0 %v3043
        %3425 = vmatpush1.bf16.msra.mxu0 %v3042
        %3426 = vmatprep.subr.bf16.mxu0 %v3029
        %3427 = vmatpush1.bf16.msra.mxu0 %v3028
        %3428 = vmatprep.subr.bf16.mxu0 %v3015
        %3429 = vmatpush1.bf16.msra.mxu0 %v3014
        %3430 = vmatprep.subr.bf16.mxu0 %v3001
        %3431 = vmatpush1.bf16.msra.mxu0 %v3000
        %3432 = vmatprep.subr.bf16.mxu0 %v2987
        %3433 = vmatpush1.bf16.msra.mxu0 %v2986
        %3434 = vmatprep.subr.bf16.mxu0 %v2973
        %3435 = vmatpush1.bf16.msra.mxu0 %v2972
        %3436 = vmatprep.subr.bf16.mxu0 %v3183
        %3437 = vmatpush2.bf16.msra.mxu0 %v3182
        %3438 = vmatprep.subr.bf16.mxu0 %v3169
        %3439 = vmatpush2.bf16.msra.mxu0 %v3168
        %3440 = vmatprep.subr.bf16.mxu0 %v3155
        %3441 = vmatpush2.bf16.msra.mxu0 %v3154
        %3442 = vmatprep.subr.bf16.mxu0 %v3141
        %3443 = vmatpush2.bf16.msra.mxu0 %v3140
        %3444 = vmatprep.subr.bf16.mxu0 %v3127
        %3445 = vmatpush2.bf16.msra.mxu0 %v3126
        %3446 = vmatprep.subr.bf16.mxu0 %v3113
        %3447 = vmatpush2.bf16.msra.mxu0 %v3112
        %3448 = vmatprep.subr.bf16.mxu0 %v3099
        %3449 = vmatpush2.bf16.msra.mxu0 %v3098
        %3450 = vmatprep.subr.bf16.mxu0 %v3085
        %3451 = vmatpush2.bf16.msra.mxu0 %v3084
        %3452 = vmatprep.mubr.bf16.mxu0 %v2297
        %3453 = vmatmul.mubr.bf16.gmra.mxu0 %v2296
        %v3454 = vpop.f32.mrf.mxu0
        %v3455 = vadd.f32 0.0, %v3454
        %v3456 = vpop.f32.mrf.mxu0
        %v3457 = vadd.f32 0.0, %v3456
        %v3458 = vpop.f32.mrf.mxu0
        %v3459 = vpop.f32.mrf.mxu0
        %3460 = vdwg.mxu0
        %3461 = vmatprep.subr.bf16.mxu0 %v3073
        %3462 = vmatpush1.bf16.msra.mxu0 %v3072
        %3463 = vmatprep.subr.bf16.mxu0 %v3059
        %3464 = vmatpush1.bf16.msra.mxu0 %v3058
        %3465 = vmatprep.subr.bf16.mxu0 %v3045
        %3466 = vmatpush1.bf16.msra.mxu0 %v3044
        %3467 = vmatprep.subr.bf16.mxu0 %v3031
        %3468 = vmatpush1.bf16.msra.mxu0 %v3030
        %3469 = vmatprep.subr.bf16.mxu0 %v3017
        %3470 = vmatpush1.bf16.msra.mxu0 %v3016
        %3471 = vmatprep.subr.bf16.mxu0 %v3003
        %3472 = vmatpush1.bf16.msra.mxu0 %v3002
        %3473 = vmatprep.subr.bf16.mxu0 %v2989
        %3474 = vmatpush1.bf16.msra.mxu0 %v2988
        %3475 = vmatprep.subr.bf16.mxu0 %v2975
        %3476 = vmatpush1.bf16.msra.mxu0 %v2974
        %3477 = vmatprep.subr.bf16.mxu0 %v3185
        %3478 = vmatpush2.bf16.msra.mxu0 %v3184
        %3479 = vmatprep.subr.bf16.mxu0 %v3171
        %3480 = vmatpush2.bf16.msra.mxu0 %v3170
        %3481 = vmatprep.subr.bf16.mxu0 %v3157
        %3482 = vmatpush2.bf16.msra.mxu0 %v3156
        %3483 = vmatprep.subr.bf16.mxu0 %v3143
        %3484 = vmatpush2.bf16.msra.mxu0 %v3142
        %3485 = vmatprep.subr.bf16.mxu0 %v3129
        %3486 = vmatpush2.bf16.msra.mxu0 %v3128
        %3487 = vmatprep.subr.bf16.mxu0 %v3115
        %3488 = vmatpush2.bf16.msra.mxu0 %v3114
        %3489 = vmatprep.subr.bf16.mxu0 %v3101
        %3490 = vmatpush2.bf16.msra.mxu0 %v3100
        %3491 = vmatprep.subr.bf16.mxu0 %v3087
        %3492 = vmatpush2.bf16.msra.mxu0 %v3086
        %3493 = vmatprep.mubr.bf16.mxu0 %v2297
        %3494 = vmatmul.mubr.bf16.gmra.mxu0 %v2296
        %v3495 = vpop.f32.mrf.mxu0
        %v3496 = vadd.f32 0.0, %v3495
        %v3497 = vpop.f32.mrf.mxu0
        %v3498 = vadd.f32 0.0, %v3497
        %v3499 = vpop.f32.mrf.mxu0
        %v3500 = vpop.f32.mrf.mxu0
        %3501 = vdwg.mxu0
        %3502 = vmatprep.subr.bf16.mxu0 %v3075
        %3503 = vmatpush1.bf16.msra.mxu0 %v3074
        %3504 = vmatprep.subr.bf16.mxu0 %v3061
        %3505 = vmatpush1.bf16.msra.mxu0 %v3060
        %3506 = vmatprep.subr.bf16.mxu0 %v3047
        %3507 = vmatpush1.bf16.msra.mxu0 %v3046
        %3508 = vmatprep.subr.bf16.mxu0 %v3033
        %3509 = vmatpush1.bf16.msra.mxu0 %v3032
        %3510 = vmatprep.subr.bf16.mxu0 %v3019
        %3511 = vmatpush1.bf16.msra.mxu0 %v3018
        %3512 = vmatprep.subr.bf16.mxu0 %v3005
        %3513 = vmatpush1.bf16.msra.mxu0 %v3004
        %3514 = vmatprep.subr.bf16.mxu0 %v2991
        %3515 = vmatpush1.bf16.msra.mxu0 %v2990
        %3516 = vmatprep.subr.bf16.mxu0 %v2977
        %3517 = vmatpush1.bf16.msra.mxu0 %v2976
        %3518 = vmatprep.subr.bf16.mxu0 %v3187
        %3519 = vmatpush2.bf16.msra.mxu0 %v3186
        %3520 = vmatprep.subr.bf16.mxu0 %v3173
        %3521 = vmatpush2.bf16.msra.mxu0 %v3172
        %3522 = vmatprep.subr.bf16.mxu0 %v3159
        %3523 = vmatpush2.bf16.msra.mxu0 %v3158
        %3524 = vmatprep.subr.bf16.mxu0 %v3145
        %3525 = vmatpush2.bf16.msra.mxu0 %v3144
        %3526 = vmatprep.subr.bf16.mxu0 %v3131
        %3527 = vmatpush2.bf16.msra.mxu0 %v3130
        %3528 = vmatprep.subr.bf16.mxu0 %v3117
        %3529 = vmatpush2.bf16.msra.mxu0 %v3116
        %3530 = vmatprep.subr.bf16.mxu0 %v3103
        %3531 = vmatpush2.bf16.msra.mxu0 %v3102
        %3532 = vmatprep.subr.bf16.mxu0 %v3089
        %3533 = vmatpush2.bf16.msra.mxu0 %v3088
        %3534 = vmatprep.mubr.bf16.mxu0 %v2297
        %3535 = vmatmul.mubr.bf16.gmra.mxu0 %v2296
        %v3536 = vpop.f32.mrf.mxu0
        %v3537 = vadd.f32 0.0, %v3536
        %v3538 = vpop.f32.mrf.mxu0
        %v3539 = vadd.f32 0.0, %v3538
        %v3540 = vpop.f32.mrf.mxu0
        %v3541 = vpop.f32.mrf.mxu0
        %3542 = vdwg.mxu0
        %3543 = vmatprep.subr.bf16.mxu0 %v3077
        %3544 = vmatpush1.bf16.msra.mxu0 %v3076
        %3545 = vmatprep.subr.bf16.mxu0 %v3063
        %3546 = vmatpush1.bf16.msra.mxu0 %v3062
        %3547 = vmatprep.subr.bf16.mxu0 %v3049
        %3548 = vmatpush1.bf16.msra.mxu0 %v3048
        %3549 = vmatprep.subr.bf16.mxu0 %v3035
        %3550 = vmatpush1.bf16.msra.mxu0 %v3034
        %3551 = vmatprep.subr.bf16.mxu0 %v3021
        %3552 = vmatpush1.bf16.msra.mxu0 %v3020
        %3553 = vmatprep.subr.bf16.mxu0 %v3007
        %3554 = vmatpush1.bf16.msra.mxu0 %v3006
        %3555 = vmatprep.subr.bf16.mxu0 %v2993
        %3556 = vmatpush1.bf16.msra.mxu0 %v2992
        %3557 = vmatprep.subr.bf16.mxu0 %v2979
        %3558 = vmatpush1.bf16.msra.mxu0 %v2978
        %3559 = vmatprep.subr.bf16.mxu0 %v3189
        %3560 = vmatpush2.bf16.msra.mxu0 %v3188
        %3561 = vmatprep.subr.bf16.mxu0 %v3175
        %3562 = vmatpush2.bf16.msra.mxu0 %v3174
        %3563 = vmatprep.subr.bf16.mxu0 %v3161
        %3564 = vmatpush2.bf16.msra.mxu0 %v3160
        %3565 = vmatprep.subr.bf16.mxu0 %v3147
        %3566 = vmatpush2.bf16.msra.mxu0 %v3146
        %3567 = vmatprep.subr.bf16.mxu0 %v3133
        %3568 = vmatpush2.bf16.msra.mxu0 %v3132
        %3569 = vmatprep.subr.bf16.mxu0 %v3119
        %3570 = vmatpush2.bf16.msra.mxu0 %v3118
        %3571 = vmatprep.subr.bf16.mxu0 %v3105
        %3572 = vmatpush2.bf16.msra.mxu0 %v3104
        %3573 = vmatprep.subr.bf16.mxu0 %v3091
        %3574 = vmatpush2.bf16.msra.mxu0 %v3090
        %3575 = vmatprep.mubr.bf16.mxu0 %v2297
        %3576 = vmatmul.mubr.bf16.gmra.mxu0 %v2296
        %v3577 = vpop.f32.mrf.mxu0
        %v3578 = vadd.f32 0.0, %v3577
        %v3579 = vpop.f32.mrf.mxu0
        %v3580 = vadd.f32 0.0, %v3579
        %v3581 = vpop.f32.mrf.mxu0
        %v3582 = vpop.f32.mrf.mxu0
        %3583 = vdwg.mxu0
        %3584 = vmatprep.subr.bf16.mxu0 %v3079
        %3585 = vmatpush1.bf16.msra.mxu0 %v3078
        %3586 = vmatprep.subr.bf16.mxu0 %v3065
        %3587 = vmatpush1.bf16.msra.mxu0 %v3064
        %3588 = vmatprep.subr.bf16.mxu0 %v3051
        %3589 = vmatpush1.bf16.msra.mxu0 %v3050
        %3590 = vmatprep.subr.bf16.mxu0 %v3037
        %3591 = vmatpush1.bf16.msra.mxu0 %v3036
        %3592 = vmatprep.subr.bf16.mxu0 %v3023
        %3593 = vmatpush1.bf16.msra.mxu0 %v3022
        %3594 = vmatprep.subr.bf16.mxu0 %v3009
        %3595 = vmatpush1.bf16.msra.mxu0 %v3008
        %3596 = vmatprep.subr.bf16.mxu0 %v2995
        %3597 = vmatpush1.bf16.msra.mxu0 %v2994
        %3598 = vmatprep.subr.bf16.mxu0 %v2981
        %3599 = vmatpush1.bf16.msra.mxu0 %v2980
        %3600 = vmatprep.subr.bf16.mxu0 %v3191
        %3601 = vmatpush2.bf16.msra.mxu0 %v3190
        %3602 = vmatprep.subr.bf16.mxu0 %v3177
        %3603 = vmatpush2.bf16.msra.mxu0 %v3176
        %3604 = vmatprep.subr.bf16.mxu0 %v3163
        %3605 = vmatpush2.bf16.msra.mxu0 %v3162
        %3606 = vmatprep.subr.bf16.mxu0 %v3149
        %3607 = vmatpush2.bf16.msra.mxu0 %v3148
        %3608 = vmatprep.subr.bf16.mxu0 %v3135
        %3609 = vmatpush2.bf16.msra.mxu0 %v3134
        %3610 = vmatprep.subr.bf16.mxu0 %v3121
        %3611 = vmatpush2.bf16.msra.mxu0 %v3120
        %3612 = vmatprep.subr.bf16.mxu0 %v3107
        %3613 = vmatpush2.bf16.msra.mxu0 %v3106
        %3614 = vmatprep.subr.bf16.mxu0 %v3093
        %3615 = vmatpush2.bf16.msra.mxu0 %v3092
        %3616 = vmatprep.mubr.bf16.mxu0 %v2297
        %3617 = vmatmul.mubr.bf16.gmra.mxu0 %v2296
        %v3618 = vpop.f32.mrf.mxu0
        %v3619 = vadd.f32 0.0, %v3618
        %v3620 = vpop.f32.mrf.mxu0
        %v3621 = vadd.f32 0.0, %v3620
        %v3622 = vpop.f32.mrf.mxu0
        %v3623 = vpop.f32.mrf.mxu0
        %3624 = vdwg.mxu0
        %3625 = vmatprep.subr.bf16.mxu0 %v3081
        %3626 = vmatpush1.bf16.msra.mxu0 %v3080
        %3627 = vmatprep.subr.bf16.mxu0 %v3067
        %3628 = vmatpush1.bf16.msra.mxu0 %v3066
        %3629 = vmatprep.subr.bf16.mxu0 %v3053
        %3630 = vmatpush1.bf16.msra.mxu0 %v3052
        %3631 = vmatprep.subr.bf16.mxu0 %v3039
        %3632 = vmatpush1.bf16.msra.mxu0 %v3038
        %3633 = vmatprep.subr.bf16.mxu0 %v3025
        %3634 = vmatpush1.bf16.msra.mxu0 %v3024
        %3635 = vmatprep.subr.bf16.mxu0 %v3011
        %3636 = vmatpush1.bf16.msra.mxu0 %v3010
        %3637 = vmatprep.subr.bf16.mxu0 %v2997
        %3638 = vmatpush1.bf16.msra.mxu0 %v2996
        %3639 = vmatprep.subr.bf16.mxu0 %v2983
        %3640 = vmatpush1.bf16.msra.mxu0 %v2982
        %3641 = vmatprep.subr.bf16.mxu0 %v3193
        %3642 = vmatpush2.bf16.msra.mxu0 %v3192
        %3643 = vmatprep.subr.bf16.mxu0 %v3179
        %3644 = vmatpush2.bf16.msra.mxu0 %v3178
        %3645 = vmatprep.subr.bf16.mxu0 %v3165
        %3646 = vmatpush2.bf16.msra.mxu0 %v3164
        %3647 = vmatprep.subr.bf16.mxu0 %v3151
        %3648 = vmatpush2.bf16.msra.mxu0 %v3150
        %3649 = vmatprep.subr.bf16.mxu0 %v3137
        %3650 = vmatpush2.bf16.msra.mxu0 %v3136
        %3651 = vmatprep.subr.bf16.mxu0 %v3123
        %3652 = vmatpush2.bf16.msra.mxu0 %v3122
        %3653 = vmatprep.subr.bf16.mxu0 %v3109
        %3654 = vmatpush2.bf16.msra.mxu0 %v3108
        %3655 = vmatprep.subr.bf16.mxu0 %v3095
        %3656 = vmatpush2.bf16.msra.mxu0 %v3094
        %3657 = vmatprep.mubr.bf16.mxu0 %v2297
        %3658 = vmatmul.mubr.bf16.gmra.mxu0 %v2296
        %v3659 = vpop.f32.mrf.mxu0
        %v3660 = vadd.f32 0.0, %v3659
        %v3661 = vpop.f32.mrf.mxu0
        %v3662 = vadd.f32 0.0, %v3661
        %v3663 = vpop.f32.mrf.mxu0
        %v3664 = vpop.f32.mrf.mxu0
        %3665 = vdwg.mxu0
        %3666 = vmatprep.subr.bf16.mxu0 %v3083
        %3667 = vmatpush1.bf16.msra.mxu0 %v3082
        %3668 = vmatprep.subr.bf16.mxu0 %v3069
        %3669 = vmatpush1.bf16.msra.mxu0 %v3068
        %3670 = vmatprep.subr.bf16.mxu0 %v3055
        %3671 = vmatpush1.bf16.msra.mxu0 %v3054
        %3672 = vmatprep.subr.bf16.mxu0 %v3041
        %3673 = vmatpush1.bf16.msra.mxu0 %v3040
        %3674 = vmatprep.subr.bf16.mxu0 %v3027
        %3675 = vmatpush1.bf16.msra.mxu0 %v3026
        %3676 = vmatprep.subr.bf16.mxu0 %v3013
        %3677 = vmatpush1.bf16.msra.mxu0 %v3012
        %3678 = vmatprep.subr.bf16.mxu0 %v2999
        %3679 = vmatpush1.bf16.msra.mxu0 %v2998
        %3680 = vmatprep.subr.bf16.mxu0 %v2985
        %3681 = vmatpush1.bf16.msra.mxu0 %v2984
        %3682 = vmatprep.subr.bf16.mxu0 %v3195
        %3683 = vmatpush2.bf16.msra.mxu0 %v3194
        %3684 = vmatprep.subr.bf16.mxu0 %v3181
        %3685 = vmatpush2.bf16.msra.mxu0 %v3180
        %3686 = vmatprep.subr.bf16.mxu0 %v3167
        %3687 = vmatpush2.bf16.msra.mxu0 %v3166
        %3688 = vmatprep.subr.bf16.mxu0 %v3153
        %3689 = vmatpush2.bf16.msra.mxu0 %v3152
        %3690 = vmatprep.subr.bf16.mxu0 %v3139
        %3691 = vmatpush2.bf16.msra.mxu0 %v3138
        %3692 = vmatprep.subr.bf16.mxu0 %v3125
        %3693 = vmatpush2.bf16.msra.mxu0 %v3124
        %3694 = vmatprep.subr.bf16.mxu0 %v3111
        %3695 = vmatpush2.bf16.msra.mxu0 %v3110
        %3696 = vmatprep.subr.bf16.mxu0 %v3097
        %3697 = vmatpush2.bf16.msra.mxu0 %v3096
        %3698 = vmatprep.mubr.bf16.mxu0 %v2297
        %3699 = vmatmul.mubr.bf16.gmra.mxu0 %v2296
        %v3700 = vpop.f32.mrf.mxu0
        %v3701 = vadd.f32 0.0, %v3700
        %v3702 = vpop.f32.mrf.mxu0
        %v3703 = vadd.f32 0.0, %v3702
        %v3704 = vpop.f32.mrf.mxu0
        %v3705 = vpop.f32.mrf.mxu0
        %3706 = vdwg.mxu0
        %v3721 = vcombine.low %v3455, %v3457
        %v3722 = vcombine.low %v3496, %v3498
        %v3724 = vunpack.c.l.s4 1983009808
        %v3725 = vunpack.c.0.s8 %v3724
        %v3726 = vlaneseq
        %v3727 = vshrl.u32 %v3726, 7
        %v3728 = vsub.s32 %v3725, %v3727
        %v3729 = vrot.slane %v3721, %v3728
        %v3731 = vunpack.c.l.s4 1983009808
        %v3732 = vunpack.c.0.s8 %v3731
        %v3733 = vlaneseq
        %v3734 = vshrl.u32 %v3733, 7
        %v3735 = vsub.s32 %v3732, %v3734
        %v3736 = vrot.slane %v3722, %v3735
        %v3737 = vcombine.low %v3729, %v3736
        %v3738 = vcombine.low %v3537, %v3539
        %v3739 = vcombine.low %v3578, %v3580
        %v3741 = vunpack.c.l.s4 1983009808
        %v3742 = vunpack.c.0.s8 %v3741
        %v3743 = vlaneseq
        %v3744 = vshrl.u32 %v3743, 7
        %v3745 = vsub.s32 %v3742, %v3744
        %v3746 = vrot.slane %v3738, %v3745
        %v3748 = vunpack.c.l.s4 1983009808
        %v3749 = vunpack.c.0.s8 %v3748
        %v3750 = vlaneseq
        %v3751 = vshrl.u32 %v3750, 7
        %v3752 = vsub.s32 %v3749, %v3751
        %v3753 = vrot.slane %v3739, %v3752
        %v3754 = vcombine.low %v3746, %v3753
        %v3755 = vcombine.low %v3619, %v3621
        %v3756 = vcombine.low %v3660, %v3662
        %v3758 = vunpack.c.l.s4 1983009808
        %v3759 = vunpack.c.0.s8 %v3758
        %v3760 = vlaneseq
        %v3761 = vshrl.u32 %v3760, 7
        %v3762 = vsub.s32 %v3759, %v3761
        %v3763 = vrot.slane %v3755, %v3762
        %v3765 = vunpack.c.l.s4 1983009808
        %v3766 = vunpack.c.0.s8 %v3765
        %v3767 = vlaneseq
        %v3768 = vshrl.u32 %v3767, 7
        %v3769 = vsub.s32 %v3766, %v3768
        %v3770 = vrot.slane %v3756, %v3769
        %v3771 = vcombine.low %v3763, %v3770
        %v3772 = vcombine.low %v3701, %v3703
        %v3774 = vunpack.c.l.s4 1983009808
        %v3775 = vunpack.c.0.s8 %v3774
        %v3776 = vlaneseq
        %v3777 = vshrl.u32 %v3776, 7
        %v3778 = vsub.s32 %v3775, %v3777
        %v3779 = vrot.slane %v3772, %v3778
        %v3784 = vadd.f32 %v2052, %v3737
        %v3785 = vadd.f32 %v2053, %v3754
        %v3786 = vadd.f32 %v2054, %v3771
        %v3787 = vadd.f32 %v2055, %v3779
        %3788 = vst [vmem:[#allocation3] sm:$0xff] %v3784
        %3789 = vst [vmem:[#allocation3 + $0x8] sm:$0xff] %v3785
        %3790 = vst [vmem:[#allocation3 + $0x10] sm:$0xff] %v3786
        %3791 = vst [vmem:[#allocation3 + $0x18] sm:$0xf] %v3787
        %p3792 = scmp.eq.s32.totalorder %s30, 6
        // Predicated region
        $region81: #{recover_cnn_forward.1} parent=51 // pred_check
          %p3793 = pneg %p3792
        $region82: #{recover_cnn_forward.1} parent=51 // pred_check_branch
          %3795 = sbr.rel (%p3793) target = $region84
        $region83: #{recover_cnn_forward.1} parent=51 // pred_region
          %v3796 = vld [vmem:[#allocation2] sm:$0xf]
          %s3797 = scalar_lea.vmem [#allocation2], 4
          %v3798 = vld [vmem:[%s3797] sm:$0xf]
          %s3799 = scalar_lea.vmem [#allocation2], 8
          %v3800 = vld [vmem:[%s3799] sm:$0xf]
          %s3801 = scalar_lea.vmem [#allocation2], 12
          %v3802 = vld [vmem:[%s3801] sm:$0xf]
          %s3803 = scalar_lea.vmem [#allocation2], 16
          %v3804 = vld [vmem:[%s3803] sm:$0xf]
          %s3805 = scalar_lea.vmem [#allocation2], 20
          %v3806 = vld [vmem:[%s3805] sm:$0xf]
          %s3807 = scalar_lea.vmem [#allocation2], 24
          %v3808 = vld [vmem:[%s3807] sm:$0xf]
          %v3811 = vunpack.c.l.s4 1983009808
          %v3812 = vunpack.c.0.s8 %v3811
          %v3813 = vlaneseq
          %v3814 = vshrl.u32 %v3813, 7
          %v3815 = vsub.s32 %v3812, %v3814
          %v3816 = vrot.slane %v3796, %v3815
          %v3817 = vcombine.high %v3816, %v3816
          %v3820 = vunpack.c.l.s4 1983009808
          %v3821 = vunpack.c.0.s8 %v3820
          %v3822 = vlaneseq
          %v3823 = vshrl.u32 %v3822, 7
          %v3824 = vsub.s32 %v3821, %v3823
          %v3825 = vrot.slane %v3798, %v3824
          %v3826 = vcombine.high %v3825, %v3825
          %v3829 = vunpack.c.l.s4 1983009808
          %v3830 = vunpack.c.0.s8 %v3829
          %v3831 = vlaneseq
          %v3832 = vshrl.u32 %v3831, 7
          %v3833 = vsub.s32 %v3830, %v3832
          %v3834 = vrot.slane %v3800, %v3833
          %v3835 = vcombine.high %v3834, %v3834
          %v3838 = vunpack.c.l.s4 1983009808
          %v3839 = vunpack.c.0.s8 %v3838
          %v3840 = vlaneseq
          %v3841 = vshrl.u32 %v3840, 7
          %v3842 = vsub.s32 %v3839, %v3841
          %v3843 = vrot.slane %v3802, %v3842
          %v3844 = vcombine.high %v3843, %v3843
          %v3847 = vunpack.c.l.s4 1983009808
          %v3848 = vunpack.c.0.s8 %v3847
          %v3849 = vlaneseq
          %v3850 = vshrl.u32 %v3849, 7
          %v3851 = vsub.s32 %v3848, %v3850
          %v3852 = vrot.slane %v3804, %v3851
          %v3853 = vcombine.high %v3852, %v3852
          %v3856 = vunpack.c.l.s4 1983009808
          %v3857 = vunpack.c.0.s8 %v3856
          %v3858 = vlaneseq
          %v3859 = vshrl.u32 %v3858, 7
          %v3860 = vsub.s32 %v3857, %v3859
          %v3861 = vrot.slane %v3806, %v3860
          %v3862 = vcombine.high %v3861, %v3861
          %v3865 = vunpack.c.l.s4 1983009808
          %v3866 = vunpack.c.0.s8 %v3865
          %v3867 = vlaneseq
          %v3868 = vshrl.u32 %v3867, 7
          %v3869 = vsub.s32 %v3866, %v3868
          %v3870 = vrot.slane %v3808, %v3869
          %v3871 = vcombine.high %v3870, %v3870
          %v3872 = vld [vmem:[#allocation3] sm:$0xff]
          %v3873 = vld [vmem:[#allocation3 + $0x8] sm:$0xff]
          %v3874 = vld [vmem:[#allocation3 + $0x10] sm:$0xff]
          %v3875 = vld [vmem:[#allocation3 + $0x18] sm:$0xf]
          %v3876 = vld [vmem:[#allocation12] sm:$0xff]
          %v3877 = vld [vmem:[#allocation12 + $0x8] sm:$0x3f]
          %v3880 = vlaneseq
          %v3881 = vshrl.u32 %v3880, 7
          %v3882 = vsub.s32 0, %v3881
          %v3883 = vrot.slane %v3876, %v3882
          %v3884 = vlaneseq
          %v3885 = vshrl.u32 %v3884, 7
          %v3886 = vsub.s32 1, %v3885
          %v3887 = vrot.slane %v3876, %v3886
          %v3888 = vlaneseq
          %v3889 = vshrl.u32 %v3888, 7
          %v3890 = vsub.s32 2, %v3889
          %v3891 = vrot.slane %v3876, %v3890
          %v3892 = vlaneseq
          %v3893 = vshrl.u32 %v3892, 7
          %v3894 = vsub.s32 3, %v3893
          %v3895 = vrot.slane %v3876, %v3894
          %v3896 = vlaneseq
          %v3897 = vshrl.u32 %v3896, 7
          %v3898 = vsub.s32 4, %v3897
          %v3899 = vrot.slane %v3876, %v3898
          %v3900 = vlaneseq
          %v3901 = vshrl.u32 %v3900, 7
          %v3902 = vsub.s32 5, %v3901
          %v3903 = vrot.slane %v3876, %v3902
          %v3904 = vlaneseq
          %v3905 = vshrl.u32 %v3904, 7
          %v3906 = vsub.s32 6, %v3905
          %v3907 = vrot.slane %v3876, %v3906
          %v3908 = vlaneseq
          %v3909 = vshrl.u32 %v3908, 7
          %v3910 = vsub.s32 7, %v3909
          %v3911 = vrot.slane %v3876, %v3910
          %v3912 = vlaneseq
          %v3913 = vshrl.u32 %v3912, 7
          %v3914 = vsub.s32 0, %v3913
          %v3915 = vrot.slane %v3877, %v3914
          %v3916 = vlaneseq
          %v3917 = vshrl.u32 %v3916, 7
          %v3918 = vsub.s32 1, %v3917
          %v3919 = vrot.slane %v3877, %v3918
          %v3920 = vlaneseq
          %v3921 = vshrl.u32 %v3920, 7
          %v3922 = vsub.s32 2, %v3921
          %v3923 = vrot.slane %v3877, %v3922
          %v3924 = vlaneseq
          %v3925 = vshrl.u32 %v3924, 7
          %v3926 = vsub.s32 3, %v3925
          %v3927 = vrot.slane %v3877, %v3926
          %v3928 = vlaneseq
          %v3929 = vshrl.u32 %v3928, 7
          %v3930 = vsub.s32 4, %v3929
          %v3931 = vrot.slane %v3877, %v3930
          %v3932 = vlaneseq
          %v3933 = vshrl.u32 %v3932, 7
          %v3934 = vsub.s32 5, %v3933
          %v3935 = vrot.slane %v3877, %v3934
          %v3936 = vcombine.low %v3883, %v3887
          %v3937 = vcombine.low %v3891, %v3895
          %v3939 = vunpack.c.l.s4 1983009808
          %v3940 = vunpack.c.0.s8 %v3939
          %v3941 = vlaneseq
          %v3942 = vshrl.u32 %v3941, 7
          %v3943 = vsub.s32 %v3940, %v3942
          %v3944 = vrot.slane %v3936, %v3943
          %v3946 = vunpack.c.l.s4 1983009808
          %v3947 = vunpack.c.0.s8 %v3946
          %v3948 = vlaneseq
          %v3949 = vshrl.u32 %v3948, 7
          %v3950 = vsub.s32 %v3947, %v3949
          %v3951 = vrot.slane %v3937, %v3950
          %v3952 = vcombine.low %v3944, %v3951
          %v3953 = vcombine.low %v3899, %v3903
          %v3954 = vcombine.low %v3907, %v3911
          %v3956 = vunpack.c.l.s4 1983009808
          %v3957 = vunpack.c.0.s8 %v3956
          %v3958 = vlaneseq
          %v3959 = vshrl.u32 %v3958, 7
          %v3960 = vsub.s32 %v3957, %v3959
          %v3961 = vrot.slane %v3953, %v3960
          %v3963 = vunpack.c.l.s4 1983009808
          %v3964 = vunpack.c.0.s8 %v3963
          %v3965 = vlaneseq
          %v3966 = vshrl.u32 %v3965, 7
          %v3967 = vsub.s32 %v3964, %v3966
          %v3968 = vrot.slane %v3954, %v3967
          %v3969 = vcombine.low %v3961, %v3968
          %v3970 = vcombine.low %v3915, %v3919
          %v3971 = vcombine.low %v3923, %v3927
          %v3973 = vunpack.c.l.s4 1983009808
          %v3974 = vunpack.c.0.s8 %v3973
          %v3975 = vlaneseq
          %v3976 = vshrl.u32 %v3975, 7
          %v3977 = vsub.s32 %v3974, %v3976
          %v3978 = vrot.slane %v3970, %v3977
          %v3980 = vunpack.c.l.s4 1983009808
          %v3981 = vunpack.c.0.s8 %v3980
          %v3982 = vlaneseq
          %v3983 = vshrl.u32 %v3982, 7
          %v3984 = vsub.s32 %v3981, %v3983
          %v3985 = vrot.slane %v3971, %v3984
          %v3986 = vcombine.low %v3978, %v3985
          %v3987 = vcombine.low %v3931, %v3935
          %v3989 = vunpack.c.l.s4 1983009808
          %v3990 = vunpack.c.0.s8 %v3989
          %v3991 = vlaneseq
          %v3992 = vshrl.u32 %v3991, 7
          %v3993 = vsub.s32 %v3990, %v3992
          %v3994 = vrot.slane %v3987, %v3993
          %v3999 = vadd.f32 %v3872, %v3952
          %v4000 = vadd.f32 %v3873, %v3969
          %v4001 = vadd.f32 %v3874, %v3986
          %v4002 = vadd.f32 %v3875, %v3994
          %v4003 = vxor.u32 %v3999, 2147483648
          %v4004 = vxor.u32 %v4000, 2147483648
          %v4005 = vxor.u32 %v4001, 2147483648
          %v4006 = vxor.u32 %v4002, 2147483648
          %v4007 = vmul.f32 %v4003, 1.442695
          %v4008 = vpow.pop %v4007
          %v4009 = vmul.f32 %v4004, 1.442695
          %v4010 = vpow.pop %v4009
          %v4011 = vmul.f32 %v4005, 1.442695
          %v4012 = vpow.pop %v4011
          %v4013 = vmul.f32 %v4006, 1.442695
          %v4014 = vpow.pop %v4013
          %v4015 = vadd.f32 %v4008, 1.0
          %v4016 = vadd.f32 %v4010, 1.0
          %v4017 = vadd.f32 %v4012, 1.0
          %v4018 = vadd.f32 %v4014, 1.0
          %v4019 = vrcp.pop %v4015
          %v4020 = vmul.f32 1.0, %v4019
          %v4021 = vrcp.pop %v4016
          %v4022 = vmul.f32 1.0, %v4021
          %v4023 = vrcp.pop %v4017
          %v4024 = vmul.f32 1.0, %v4023
          %v4025 = vrcp.pop %v4018
          %v4026 = vmul.f32 1.0, %v4025
          %v4027 = vmax.f32 %v3999, 0.0
          %v4028 = vmax.f32 %v4000, 0.0
          %v4029 = vmax.f32 %v4001, 0.0
          %v4030 = vmax.f32 %v4002, 0.0
          %v4031 = vmul.f32 %v4020, %v4027
          %v4032 = vmul.f32 %v4022, %v4028
          %v4033 = vmul.f32 %v4024, %v4029
          %v4034 = vmul.f32 %v4026, %v4030
          %v4035 = vsub.f32 1.0, %v4020
          %v4036 = vsub.f32 1.0, %v4022
          %v4037 = vsub.f32 1.0, %v4024
          %v4038 = vsub.f32 1.0, %v4026
          %v4039 = vcombine.low %v3816, %v3817
          %v4040 = vcombine.low %v3825, %v3826
          %v4042 = vunpack.c.l.s4 1983009808
          %v4043 = vunpack.c.0.s8 %v4042
          %v4044 = vlaneseq
          %v4045 = vshrl.u32 %v4044, 7
          %v4046 = vsub.s32 %v4043, %v4045
          %v4047 = vrot.slane %v4039, %v4046
          %v4049 = vunpack.c.l.s4 1983009808
          %v4050 = vunpack.c.0.s8 %v4049
          %v4051 = vlaneseq
          %v4052 = vshrl.u32 %v4051, 7
          %v4053 = vsub.s32 %v4050, %v4052
          %v4054 = vrot.slane %v4040, %v4053
          %v4055 = vcombine.low %v4047, %v4054
          %v4056 = vcombine.low %v3834, %v3835
          %v4057 = vcombine.low %v3843, %v3844
          %v4059 = vunpack.c.l.s4 1983009808
          %v4060 = vunpack.c.0.s8 %v4059
          %v4061 = vlaneseq
          %v4062 = vshrl.u32 %v4061, 7
          %v4063 = vsub.s32 %v4060, %v4062
          %v4064 = vrot.slane %v4056, %v4063
          %v4066 = vunpack.c.l.s4 1983009808
          %v4067 = vunpack.c.0.s8 %v4066
          %v4068 = vlaneseq
          %v4069 = vshrl.u32 %v4068, 7
          %v4070 = vsub.s32 %v4067, %v4069
          %v4071 = vrot.slane %v4057, %v4070
          %v4072 = vcombine.low %v4064, %v4071
          %v4073 = vcombine.low %v3852, %v3853
          %v4074 = vcombine.low %v3861, %v3862
          %v4076 = vunpack.c.l.s4 1983009808
          %v4077 = vunpack.c.0.s8 %v4076
          %v4078 = vlaneseq
          %v4079 = vshrl.u32 %v4078, 7
          %v4080 = vsub.s32 %v4077, %v4079
          %v4081 = vrot.slane %v4073, %v4080
          %v4083 = vunpack.c.l.s4 1983009808
          %v4084 = vunpack.c.0.s8 %v4083
          %v4085 = vlaneseq
          %v4086 = vshrl.u32 %v4085, 7
          %v4087 = vsub.s32 %v4084, %v4086
          %v4088 = vrot.slane %v4074, %v4087
          %v4089 = vcombine.low %v4081, %v4088
          %v4090 = vcombine.low %v3870, %v3871
          %v4092 = vunpack.c.l.s4 1983009808
          %v4093 = vunpack.c.0.s8 %v4092
          %v4094 = vlaneseq
          %v4095 = vshrl.u32 %v4094, 7
          %v4096 = vsub.s32 %v4093, %v4095
          %v4097 = vrot.slane %v4090, %v4096
          %v4102 = vmul.f32 %v4035, %v4055
          %v4103 = vmul.f32 %v4036, %v4072
          %v4104 = vmul.f32 %v4037, %v4089
          %v4105 = vmul.f32 %v4038, %v4097
          %v4106 = vadd.f32 %v4031, %v4102
          %v4107 = vadd.f32 %v4032, %v4103
          %v4108 = vadd.f32 %v4033, %v4104
          %v4109 = vadd.f32 %v4034, %v4105
          %v4114 = vcombine.high %v4106, %v4106
          %v4116 = vunpack.c.l.s4 1983009808
          %v4117 = vunpack.c.0.s8 %v4116
          %v4118 = vlaneseq
          %v4119 = vshrl.u32 %v4118, 7
          %v4120 = vsub.s32 %v4117, %v4119
          %v4121 = vrot.slane %v4106, %v4120
          %v4123 = vunpack.c.l.s4 1983009808
          %v4124 = vunpack.c.0.s8 %v4123
          %v4125 = vlaneseq
          %v4126 = vshrl.u32 %v4125, 7
          %v4127 = vsub.s32 %v4124, %v4126
          %v4128 = vrot.slane %v4114, %v4127
          %v4129 = vcombine.high %v4121, %v4121
          %v4130 = vcombine.high %v4128, %v4128
          %v4131 = vcombine.high %v4107, %v4107
          %v4133 = vunpack.c.l.s4 1983009808
          %v4134 = vunpack.c.0.s8 %v4133
          %v4135 = vlaneseq
          %v4136 = vshrl.u32 %v4135, 7
          %v4137 = vsub.s32 %v4134, %v4136
          %v4138 = vrot.slane %v4107, %v4137
          %v4140 = vunpack.c.l.s4 1983009808
          %v4141 = vunpack.c.0.s8 %v4140
          %v4142 = vlaneseq
          %v4143 = vshrl.u32 %v4142, 7
          %v4144 = vsub.s32 %v4141, %v4143
          %v4145 = vrot.slane %v4131, %v4144
          %v4146 = vcombine.high %v4138, %v4138
          %v4147 = vcombine.high %v4145, %v4145
          %v4148 = vcombine.high %v4108, %v4108
          %v4150 = vunpack.c.l.s4 1983009808
          %v4151 = vunpack.c.0.s8 %v4150
          %v4152 = vlaneseq
          %v4153 = vshrl.u32 %v4152, 7
          %v4154 = vsub.s32 %v4151, %v4153
          %v4155 = vrot.slane %v4108, %v4154
          %v4157 = vunpack.c.l.s4 1983009808
          %v4158 = vunpack.c.0.s8 %v4157
          %v4159 = vlaneseq
          %v4160 = vshrl.u32 %v4159, 7
          %v4161 = vsub.s32 %v4158, %v4160
          %v4162 = vrot.slane %v4148, %v4161
          %v4163 = vcombine.high %v4155, %v4155
          %v4164 = vcombine.high %v4162, %v4162
          %v4166 = vunpack.c.l.s4 1983009808
          %v4167 = vunpack.c.0.s8 %v4166
          %v4168 = vlaneseq
          %v4169 = vshrl.u32 %v4168, 7
          %v4170 = vsub.s32 %v4167, %v4169
          %v4171 = vrot.slane %v4109, %v4170
          %v4172 = vcombine.high %v4171, %v4171
          %v4187 = vpack.c.bf16 %v4121, %v4121
          %v4188 = vpack.c.bf16 %v4129, %v4129
          %v4189 = vpack.c.bf16 %v4128, %v4128
          %v4190 = vpack.c.bf16 %v4130, %v4130
          %v4191 = vpack.c.bf16 %v4138, %v4138
          %v4192 = vpack.c.bf16 %v4146, %v4146
          %v4193 = vpack.c.bf16 %v4145, %v4145
          %v4194 = vpack.c.bf16 %v4147, %v4147
          %v4195 = vpack.c.bf16 %v4155, %v4155
          %v4196 = vpack.c.bf16 %v4163, %v4163
          %v4197 = vpack.c.bf16 %v4162, %v4162
          %v4198 = vpack.c.bf16 %v4164, %v4164
          %v4199 = vpack.c.bf16 %v4171, %v4171
          %v4200 = vpack.c.bf16 %v4172, %v4172
          %v4201 = vld [vmem:[%s6] sm:$0xf]
          %v4202 = vld [vmem:[%s6 + $0x4] sm:$0xf]
          %v4203 = vld [vmem:[%s6 + $0x8] sm:$0xf]
          %v4204 = vld [vmem:[%s6 + $0xc] sm:$0xf]
          %v4205 = vld [vmem:[%s6 + $0x10] sm:$0xf]
          %v4206 = vld [vmem:[%s6 + $0x14] sm:$0xf]
          %v4207 = vld [vmem:[%s6 + $0x18] sm:$0xf]
          %v4208 = vld [vmem:[%s6 + $0x1c] sm:$0xf]
          %v4209 = vld [vmem:[%s6 + $0x20] sm:$0xf]
          %v4210 = vld [vmem:[%s6 + $0x24] sm:$0xf]
          %v4211 = vld [vmem:[%s6 + $0x28] sm:$0xf]
          %v4212 = vld [vmem:[%s6 + $0x2c] sm:$0xf]
          %v4213 = vld [vmem:[%s6 + $0x30] sm:$0xf]
          %v4214 = vld [vmem:[%s6 + $0x34] sm:$0xf]
          %v4215 = vld [vmem:[%s6 + $0x38] sm:$0xf]
          %v4216 = vld [vmem:[%s6 + $0x3c] sm:$0xf]
          %v4217 = vld [vmem:[%s6 + $0x40] sm:$0xf]
          %v4218 = vld [vmem:[%s6 + $0x44] sm:$0xf]
          %v4219 = vld [vmem:[%s6 + $0x48] sm:$0xf]
          %v4220 = vld [vmem:[%s6 + $0x4c] sm:$0xf]
          %v4221 = vld [vmem:[%s6 + $0x50] sm:$0xf]
          %v4222 = vld [vmem:[%s6 + $0x54] sm:$0xf]
          %v4223 = vld [vmem:[%s6 + $0x58] sm:$0xf]
          %v4224 = vld [vmem:[%s6 + $0x5c] sm:$0xf]
          %v4225 = vld [vmem:[%s6 + $0x60] sm:$0xf]
          %v4226 = vld [vmem:[%s6 + $0x64] sm:$0xf]
          %v4227 = vld [vmem:[%s6 + $0x68] sm:$0xf]
          %v4228 = vld [vmem:[%s6 + $0x6c] sm:$0xf]
          %v4229 = vld [vmem:[%s6 + $0x70] sm:$0xf]
          %v4230 = vld [vmem:[%s6 + $0x74] sm:$0xf]
          %v4231 = vld [vmem:[%s6 + $0x78] sm:$0xf]
          %v4232 = vld [vmem:[%s6 + $0x7c] sm:$0xf]
          %v4233 = vld [vmem:[%s6 + $0x80] sm:$0xf]
          %v4234 = vld [vmem:[%s6 + $0x84] sm:$0xf]
          %v4235 = vld [vmem:[%s6 + $0x88] sm:$0xf]
          %v4236 = vld [vmem:[%s6 + $0x8c] sm:$0xf]
          %v4237 = vld [vmem:[%s6 + $0x90] sm:$0xf]
          %v4238 = vld [vmem:[%s6 + $0x94] sm:$0xf]
          %v4239 = vld [vmem:[%s6 + $0x98] sm:$0xf]
          %v4240 = vld [vmem:[%s6 + $0x9c] sm:$0xf]
          %v4241 = vld [vmem:[%s6 + $0xa0] sm:$0xf]
          %v4242 = vld [vmem:[%s6 + $0xa4] sm:$0xf]
          %v4243 = vld [vmem:[%s6 + $0xa8] sm:$0xf]
          %v4244 = vld [vmem:[%s6 + $0xac] sm:$0xf]
          %v4245 = vld [vmem:[%s6 + $0xb0] sm:$0xf]
          %v4246 = vld [vmem:[%s6 + $0xb4] sm:$0xf]
          %v4247 = vld [vmem:[%s6 + $0xb8] sm:$0xf]
          %v4248 = vld [vmem:[%s6 + $0xbc] sm:$0xf]
          %v4249 = vld [vmem:[%s6 + $0xc0] sm:$0xf]
          %v4250 = vld [vmem:[%s6 + $0xc4] sm:$0xf]
          %v4251 = vld [vmem:[%s6 + $0xc8] sm:$0xf]
          %v4252 = vld [vmem:[%s6 + $0xcc] sm:$0xf]
          %v4253 = vld [vmem:[%s6 + $0xd0] sm:$0xf]
          %v4254 = vld [vmem:[%s6 + $0xd4] sm:$0xf]
          %v4255 = vld [vmem:[%s6 + $0xd8] sm:$0xf]
          %v4256 = vld [vmem:[%s6 + $0xdc] sm:$0xf]
          %v4257 = vld [vmem:[%s6 + $0xe0] sm:$0xf]
          %v4258 = vld [vmem:[%s6 + $0xe4] sm:$0xf]
          %v4259 = vld [vmem:[%s6 + $0xe8] sm:$0xf]
          %v4260 = vld [vmem:[%s6 + $0xec] sm:$0xf]
          %v4261 = vld [vmem:[%s6 + $0xf0] sm:$0xf]
          %v4262 = vld [vmem:[%s6 + $0xf4] sm:$0xf]
          %v4263 = vld [vmem:[%s6 + $0xf8] sm:$0xf]
          %v4264 = vld [vmem:[%s6 + $0xfc] sm:$0xf]
          %v4265 = vld [vmem:[%s6 + $0x100] sm:$0xf]
          %v4266 = vld [vmem:[%s6 + $0x104] sm:$0xf]
          %v4267 = vld [vmem:[%s6 + $0x108] sm:$0xf]
          %v4268 = vld [vmem:[%s6 + $0x10c] sm:$0xf]
          %v4269 = vld [vmem:[%s6 + $0x110] sm:$0xf]
          %v4270 = vld [vmem:[%s6 + $0x114] sm:$0xf]
          %v4271 = vld [vmem:[%s6 + $0x118] sm:$0xf]
          %v4272 = vld [vmem:[%s6 + $0x11c] sm:$0xf]
          %v4273 = vld [vmem:[%s6 + $0x120] sm:$0xf]
          %v4274 = vld [vmem:[%s6 + $0x124] sm:$0xf]
          %v4275 = vld [vmem:[%s6 + $0x128] sm:$0xf]
          %v4276 = vld [vmem:[%s6 + $0x12c] sm:$0xf]
          %v4277 = vld [vmem:[%s6 + $0x130] sm:$0xf]
          %v4278 = vld [vmem:[%s6 + $0x134] sm:$0xf]
          %v4279 = vld [vmem:[%s6 + $0x138] sm:$0xf]
          %v4280 = vld [vmem:[%s6 + $0x13c] sm:$0xf]
          %v4281 = vld [vmem:[%s6 + $0x140] sm:$0xf]
          %v4282 = vld [vmem:[%s6 + $0x144] sm:$0xf]
          %v4283 = vld [vmem:[%s6 + $0x148] sm:$0xf]
          %v4284 = vld [vmem:[%s6 + $0x14c] sm:$0xf]
          %v4285 = vld [vmem:[%s6 + $0x150] sm:$0xf]
          %v4286 = vld [vmem:[%s6 + $0x154] sm:$0xf]
          %v4287 = vld [vmem:[%s6 + $0x158] sm:$0xf]
          %v4288 = vld [vmem:[%s6 + $0x15c] sm:$0xf]
          %v4289 = vld [vmem:[%s6 + $0x160] sm:$0xf]
          %v4290 = vld [vmem:[%s6 + $0x164] sm:$0xf]
          %v4291 = vld [vmem:[%s6 + $0x168] sm:$0xf]
          %v4292 = vld [vmem:[%s6 + $0x16c] sm:$0xf]
          %v4293 = vld [vmem:[%s6 + $0x170] sm:$0xf]
          %v4294 = vld [vmem:[%s6 + $0x174] sm:$0xf]
          %v4295 = vld [vmem:[%s6 + $0x178] sm:$0xf]
          %v4296 = vld [vmem:[%s6 + $0x17c] sm:$0xf]
          %v4297 = vld [vmem:[%s6 + $0x180] sm:$0xf]
          %v4298 = vld [vmem:[%s6 + $0x184] sm:$0xf]
          %v4299 = vld [vmem:[%s6 + $0x188] sm:$0xf]
          %v4300 = vld [vmem:[%s6 + $0x18c] sm:$0xf]
          %v4301 = vld [vmem:[%s6 + $0x190] sm:$0xf]
          %v4302 = vld [vmem:[%s6 + $0x194] sm:$0xf]
          %v4303 = vld [vmem:[%s6 + $0x198] sm:$0xf]
          %v4304 = vld [vmem:[%s6 + $0x19c] sm:$0xf]
          %v4305 = vld [vmem:[%s6 + $0x1a0] sm:$0xf]
          %v4306 = vld [vmem:[%s6 + $0x1a4] sm:$0xf]
          %v4307 = vld [vmem:[%s6 + $0x1a8] sm:$0xf]
          %v4308 = vld [vmem:[%s6 + $0x1ac] sm:$0xf]
          %v4309 = vld [vmem:[%s6 + $0x1b0] sm:$0xf]
          %v4310 = vld [vmem:[%s6 + $0x1b4] sm:$0xf]
          %v4311 = vld [vmem:[%s6 + $0x1b8] sm:$0xf]
          %v4312 = vld [vmem:[%s6 + $0x1bc] sm:$0xf]
          %v4313 = vld [vmem:[%s6 + $0x1c0] sm:$0xf]
          %v4314 = vld [vmem:[%s6 + $0x1c4] sm:$0xf]
          %v4315 = vld [vmem:[%s6 + $0x1c8] sm:$0xf]
          %v4316 = vld [vmem:[%s6 + $0x1cc] sm:$0xf]
          %v4317 = vld [vmem:[%s6 + $0x1d0] sm:$0xf]
          %v4318 = vld [vmem:[%s6 + $0x1d4] sm:$0xf]
          %v4319 = vld [vmem:[%s6 + $0x1d8] sm:$0xf]
          %v4320 = vld [vmem:[%s6 + $0x1dc] sm:$0xf]
          %v4321 = vld [vmem:[%s6 + $0x1e0] sm:$0xf]
          %v4322 = vld [vmem:[%s6 + $0x1e4] sm:$0xf]
          %v4323 = vld [vmem:[%s6 + $0x1e8] sm:$0xf]
          %v4324 = vld [vmem:[%s6 + $0x1ec] sm:$0xf]
          %v4325 = vld [vmem:[%s6 + $0x1f0] sm:$0xf]
          %v4326 = vld [vmem:[%s6 + $0x1f4] sm:$0xf]
          %v4327 = vld [vmem:[%s6 + $0x1f8] sm:$0xf]
          %v4328 = vld [vmem:[%s6 + $0x1fc] sm:$0xf]
          %v4329 = vld [vmem:[%s6 + $0x200] sm:$0xf]
          %v4330 = vld [vmem:[%s6 + $0x204] sm:$0xf]
          %v4331 = vld [vmem:[%s6 + $0x208] sm:$0xf]
          %v4332 = vld [vmem:[%s6 + $0x20c] sm:$0xf]
          %v4333 = vld [vmem:[%s6 + $0x210] sm:$0xf]
          %v4334 = vld [vmem:[%s6 + $0x214] sm:$0xf]
          %v4335 = vld [vmem:[%s6 + $0x218] sm:$0xf]
          %v4336 = vld [vmem:[%s6 + $0x21c] sm:$0xf]
          %v4337 = vld [vmem:[%s6 + $0x220] sm:$0xf]
          %v4338 = vld [vmem:[%s6 + $0x224] sm:$0xf]
          %v4339 = vld [vmem:[%s6 + $0x228] sm:$0xf]
          %v4340 = vld [vmem:[%s6 + $0x22c] sm:$0xf]
          %v4341 = vld [vmem:[%s6 + $0x230] sm:$0xf]
          %v4342 = vld [vmem:[%s6 + $0x234] sm:$0xf]
          %v4343 = vld [vmem:[%s6 + $0x238] sm:$0xf]
          %v4344 = vld [vmem:[%s6 + $0x23c] sm:$0xf]
          %v4345 = vld [vmem:[%s6 + $0x240] sm:$0xf]
          %v4346 = vld [vmem:[%s6 + $0x244] sm:$0xf]
          %v4347 = vld [vmem:[%s6 + $0x248] sm:$0xf]
          %v4348 = vld [vmem:[%s6 + $0x24c] sm:$0xf]
          %v4349 = vld [vmem:[%s6 + $0x250] sm:$0xf]
          %v4350 = vld [vmem:[%s6 + $0x254] sm:$0xf]
          %v4351 = vld [vmem:[%s6 + $0x258] sm:$0xf]
          %v4352 = vld [vmem:[%s6 + $0x25c] sm:$0xf]
          %v4353 = vld [vmem:[%s6 + $0x260] sm:$0xf]
          %v4354 = vld [vmem:[%s6 + $0x264] sm:$0xf]
          %v4355 = vld [vmem:[%s6 + $0x268] sm:$0xf]
          %v4356 = vld [vmem:[%s6 + $0x26c] sm:$0xf]
          %v4357 = vld [vmem:[%s6 + $0x270] sm:$0xf]
          %v4358 = vld [vmem:[%s6 + $0x274] sm:$0xf]
          %v4359 = vld [vmem:[%s6 + $0x278] sm:$0xf]
          %v4360 = vld [vmem:[%s6 + $0x27c] sm:$0xf]
          %v4361 = vld [vmem:[%s6 + $0x280] sm:$0xf]
          %v4362 = vld [vmem:[%s6 + $0x284] sm:$0xf]
          %v4363 = vld [vmem:[%s6 + $0x288] sm:$0xf]
          %v4364 = vld [vmem:[%s6 + $0x28c] sm:$0xf]
          %v4365 = vld [vmem:[%s6 + $0x290] sm:$0xf]
          %v4366 = vld [vmem:[%s6 + $0x294] sm:$0xf]
          %v4367 = vld [vmem:[%s6 + $0x298] sm:$0xf]
          %v4368 = vld [vmem:[%s6 + $0x29c] sm:$0xf]
          %v4369 = vld [vmem:[%s6 + $0x2a0] sm:$0xf]
          %v4370 = vld [vmem:[%s6 + $0x2a4] sm:$0xf]
          %v4371 = vld [vmem:[%s6 + $0x2a8] sm:$0xf]
          %v4372 = vld [vmem:[%s6 + $0x2ac] sm:$0xf]
          %v4373 = vld [vmem:[%s6 + $0x2b0] sm:$0xf]
          %v4374 = vld [vmem:[%s6 + $0x2b4] sm:$0xf]
          %v4375 = vld [vmem:[%s6 + $0x2b8] sm:$0xf]
          %v4376 = vld [vmem:[%s6 + $0x2bc] sm:$0xf]
          %v4377 = vld [vmem:[%s6 + $0x2c0] sm:$0xf]
          %v4378 = vld [vmem:[%s6 + $0x2c4] sm:$0xf]
          %v4379 = vld [vmem:[%s6 + $0x2c8] sm:$0xf]
          %v4380 = vld [vmem:[%s6 + $0x2cc] sm:$0xf]
          %v4381 = vld [vmem:[%s6 + $0x2d0] sm:$0xf]
          %v4382 = vld [vmem:[%s6 + $0x2d4] sm:$0xf]
          %v4383 = vld [vmem:[%s6 + $0x2d8] sm:$0xf]
          %v4384 = vld [vmem:[%s6 + $0x2dc] sm:$0xf]
          %v4385 = vld [vmem:[%s6 + $0x2e0] sm:$0xf]
          %v4386 = vld [vmem:[%s6 + $0x2e4] sm:$0xf]
          %v4387 = vld [vmem:[%s6 + $0x2e8] sm:$0xf]
          %v4388 = vld [vmem:[%s6 + $0x2ec] sm:$0xf]
          %v4389 = vld [vmem:[%s6 + $0x2f0] sm:$0xf]
          %v4390 = vld [vmem:[%s6 + $0x2f4] sm:$0xf]
          %v4391 = vld [vmem:[%s6 + $0x2f8] sm:$0xf]
          %v4392 = vld [vmem:[%s6 + $0x2fc] sm:$0xf]
          %v4393 = vld [vmem:[%s6 + $0x300] sm:$0xf]
          %v4394 = vld [vmem:[%s6 + $0x304] sm:$0xf]
          %v4395 = vld [vmem:[%s6 + $0x308] sm:$0xf]
          %v4396 = vld [vmem:[%s6 + $0x30c] sm:$0xf]
          %v4397 = vld [vmem:[%s6 + $0x310] sm:$0xf]
          %v4398 = vld [vmem:[%s6 + $0x314] sm:$0xf]
          %v4399 = vld [vmem:[%s6 + $0x318] sm:$0xf]
          %v4400 = vld [vmem:[%s6 + $0x31c] sm:$0xf]
          %v4401 = vld [vmem:[%s6 + $0x320] sm:$0xf]
          %v4402 = vld [vmem:[%s6 + $0x324] sm:$0xf]
          %v4403 = vld [vmem:[%s6 + $0x328] sm:$0xf]
          %v4404 = vld [vmem:[%s6 + $0x32c] sm:$0xf]
          %v4405 = vld [vmem:[%s6 + $0x330] sm:$0xf]
          %v4406 = vld [vmem:[%s6 + $0x334] sm:$0xf]
          %v4407 = vld [vmem:[%s6 + $0x338] sm:$0xf]
          %v4408 = vld [vmem:[%s6 + $0x33c] sm:$0xf]
          %v4409 = vld [vmem:[%s6 + $0x340] sm:$0xf]
          %v4410 = vld [vmem:[%s6 + $0x344] sm:$0xf]
          %v4411 = vld [vmem:[%s6 + $0x348] sm:$0xf]
          %v4412 = vld [vmem:[%s6 + $0x34c] sm:$0xf]
          %v4413 = vld [vmem:[%s6 + $0x350] sm:$0xf]
          %v4414 = vld [vmem:[%s6 + $0x354] sm:$0xf]
          %v4415 = vld [vmem:[%s6 + $0x358] sm:$0xf]
          %v4416 = vld [vmem:[%s6 + $0x35c] sm:$0xf]
          %v4417 = vld [vmem:[%s6 + $0x360] sm:$0xf]
          %v4418 = vld [vmem:[%s6 + $0x364] sm:$0xf]
          %v4419 = vld [vmem:[%s6 + $0x368] sm:$0xf]
          %v4420 = vld [vmem:[%s6 + $0x36c] sm:$0xf]
          %v4421 = vld [vmem:[%s6 + $0x370] sm:$0xf]
          %v4422 = vld [vmem:[%s6 + $0x374] sm:$0xf]
          %v4423 = vld [vmem:[%s6 + $0x378] sm:$0xf]
          %v4424 = vld [vmem:[%s6 + $0x37c] sm:$0xf]
          %v4425 = vld [vmem:[#allocation13] sm:$0x1]
          %v4427 = vlaneseq
          %v4428 = vshrl.u32 %v4427, 7
          %v4429 = vsub.s32 0, %v4428
          %v4430 = vrot.slane %v4425, %v4429
          %v4656 = vunpack.c.l.b16 %v4201
          %v4657 = vunpack.c.l.b16 %v4202
          %v4658 = vunpack.c.l.b16 %v4203
          %v4659 = vunpack.c.l.b16 %v4204
          %v4660 = vunpack.c.l.b16 %v4205
          %v4661 = vunpack.c.l.b16 %v4206
          %v4662 = vunpack.c.l.b16 %v4207
          %v4663 = vunpack.c.l.b16 %v4208
          %v4664 = vunpack.c.l.b16 %v4209
          %v4665 = vunpack.c.l.b16 %v4210
          %v4666 = vunpack.c.l.b16 %v4211
          %v4667 = vunpack.c.l.b16 %v4212
          %v4668 = vunpack.c.l.b16 %v4213
          %v4669 = vunpack.c.l.b16 %v4214
          %v4670 = vunpack.c.l.b16 %v4215
          %v4671 = vunpack.c.l.b16 %v4216
          %v4672 = vunpack.c.l.b16 %v4217
          %v4673 = vunpack.c.l.b16 %v4218
          %v4674 = vunpack.c.l.b16 %v4219
          %v4675 = vunpack.c.l.b16 %v4220
          %v4676 = vunpack.c.l.b16 %v4221
          %v4677 = vunpack.c.l.b16 %v4222
          %v4678 = vunpack.c.l.b16 %v4223
          %v4679 = vunpack.c.l.b16 %v4224
          %v4680 = vunpack.c.l.b16 %v4225
          %v4681 = vunpack.c.l.b16 %v4226
          %v4682 = vunpack.c.l.b16 %v4227
          %v4683 = vunpack.c.l.b16 %v4228
          %v4684 = vunpack.c.l.b16 %v4229
          %v4685 = vunpack.c.l.b16 %v4230
          %v4686 = vunpack.c.l.b16 %v4231
          %v4687 = vunpack.c.l.b16 %v4232
          %v4688 = vunpack.c.l.b16 %v4233
          %v4689 = vunpack.c.l.b16 %v4234
          %v4690 = vunpack.c.l.b16 %v4235
          %v4691 = vunpack.c.l.b16 %v4236
          %v4692 = vunpack.c.l.b16 %v4237
          %v4693 = vunpack.c.l.b16 %v4238
          %v4694 = vunpack.c.l.b16 %v4239
          %v4695 = vunpack.c.l.b16 %v4240
          %v4696 = vunpack.c.l.b16 %v4241
          %v4697 = vunpack.c.l.b16 %v4242
          %v4698 = vunpack.c.l.b16 %v4243
          %v4699 = vunpack.c.l.b16 %v4244
          %v4700 = vunpack.c.l.b16 %v4245
          %v4701 = vunpack.c.l.b16 %v4246
          %v4702 = vunpack.c.l.b16 %v4247
          %v4703 = vunpack.c.l.b16 %v4248
          %v4704 = vunpack.c.l.b16 %v4249
          %v4705 = vunpack.c.l.b16 %v4250
          %v4706 = vunpack.c.l.b16 %v4251
          %v4707 = vunpack.c.l.b16 %v4252
          %v4708 = vunpack.c.l.b16 %v4253
          %v4709 = vunpack.c.l.b16 %v4254
          %v4710 = vunpack.c.l.b16 %v4255
          %v4711 = vunpack.c.l.b16 %v4256
          %v4712 = vunpack.c.l.b16 %v4257
          %v4713 = vunpack.c.l.b16 %v4258
          %v4714 = vunpack.c.l.b16 %v4259
          %v4715 = vunpack.c.l.b16 %v4260
          %v4716 = vunpack.c.l.b16 %v4261
          %v4717 = vunpack.c.l.b16 %v4262
          %v4718 = vunpack.c.l.b16 %v4263
          %v4719 = vunpack.c.l.b16 %v4264
          %v4720 = vunpack.c.l.b16 %v4265
          %v4721 = vunpack.c.l.b16 %v4266
          %v4722 = vunpack.c.l.b16 %v4267
          %v4723 = vunpack.c.l.b16 %v4268
          %v4724 = vunpack.c.l.b16 %v4269
          %v4725 = vunpack.c.l.b16 %v4270
          %v4726 = vunpack.c.l.b16 %v4271
          %v4727 = vunpack.c.l.b16 %v4272
          %v4728 = vunpack.c.l.b16 %v4273
          %v4729 = vunpack.c.l.b16 %v4274
          %v4730 = vunpack.c.l.b16 %v4275
          %v4731 = vunpack.c.l.b16 %v4276
          %v4732 = vunpack.c.l.b16 %v4277
          %v4733 = vunpack.c.l.b16 %v4278
          %v4734 = vunpack.c.l.b16 %v4279
          %v4735 = vunpack.c.l.b16 %v4280
          %v4736 = vunpack.c.l.b16 %v4281
          %v4737 = vunpack.c.l.b16 %v4282
          %v4738 = vunpack.c.l.b16 %v4283
          %v4739 = vunpack.c.l.b16 %v4284
          %v4740 = vunpack.c.l.b16 %v4285
          %v4741 = vunpack.c.l.b16 %v4286
          %v4742 = vunpack.c.l.b16 %v4287
          %v4743 = vunpack.c.l.b16 %v4288
          %v4744 = vunpack.c.l.b16 %v4289
          %v4745 = vunpack.c.l.b16 %v4290
          %v4746 = vunpack.c.l.b16 %v4291
          %v4747 = vunpack.c.l.b16 %v4292
          %v4748 = vunpack.c.l.b16 %v4293
          %v4749 = vunpack.c.l.b16 %v4294
          %v4750 = vunpack.c.l.b16 %v4295
          %v4751 = vunpack.c.l.b16 %v4296
          %v4752 = vunpack.c.l.b16 %v4297
          %v4753 = vunpack.c.l.b16 %v4298
          %v4754 = vunpack.c.l.b16 %v4299
          %v4755 = vunpack.c.l.b16 %v4300
          %v4756 = vunpack.c.l.b16 %v4301
          %v4757 = vunpack.c.l.b16 %v4302
          %v4758 = vunpack.c.l.b16 %v4303
          %v4759 = vunpack.c.l.b16 %v4304
          %v4760 = vunpack.c.l.b16 %v4305
          %v4761 = vunpack.c.l.b16 %v4306
          %v4762 = vunpack.c.l.b16 %v4307
          %v4763 = vunpack.c.l.b16 %v4308
          %v4764 = vunpack.c.l.b16 %v4309
          %v4765 = vunpack.c.l.b16 %v4310
          %v4766 = vunpack.c.l.b16 %v4311
          %v4767 = vunpack.c.l.b16 %v4312
          %v4768 = vunpack.c.l.b16 %v4313
          %v4769 = vunpack.c.l.b16 %v4314
          %v4770 = vunpack.c.l.b16 %v4315
          %v4771 = vunpack.c.l.b16 %v4316
          %v4772 = vunpack.c.l.b16 %v4317
          %v4773 = vunpack.c.l.b16 %v4318
          %v4774 = vunpack.c.l.b16 %v4319
          %v4775 = vunpack.c.l.b16 %v4320
          %v4776 = vunpack.c.l.b16 %v4321
          %v4777 = vunpack.c.l.b16 %v4322
          %v4778 = vunpack.c.l.b16 %v4323
          %v4779 = vunpack.c.l.b16 %v4324
          %v4780 = vunpack.c.l.b16 %v4325
          %v4781 = vunpack.c.l.b16 %v4326
          %v4782 = vunpack.c.l.b16 %v4327
          %v4783 = vunpack.c.l.b16 %v4328
          %v4784 = vunpack.c.l.b16 %v4329
          %v4785 = vunpack.c.l.b16 %v4330
          %v4786 = vunpack.c.l.b16 %v4331
          %v4787 = vunpack.c.l.b16 %v4332
          %v4788 = vunpack.c.l.b16 %v4333
          %v4789 = vunpack.c.l.b16 %v4334
          %v4790 = vunpack.c.l.b16 %v4335
          %v4791 = vunpack.c.l.b16 %v4336
          %v4792 = vunpack.c.l.b16 %v4337
          %v4793 = vunpack.c.l.b16 %v4338
          %v4794 = vunpack.c.l.b16 %v4339
          %v4795 = vunpack.c.l.b16 %v4340
          %v4796 = vunpack.c.l.b16 %v4341
          %v4797 = vunpack.c.l.b16 %v4342
          %v4798 = vunpack.c.l.b16 %v4343
          %v4799 = vunpack.c.l.b16 %v4344
          %v4800 = vunpack.c.l.b16 %v4345
          %v4801 = vunpack.c.l.b16 %v4346
          %v4802 = vunpack.c.l.b16 %v4347
          %v4803 = vunpack.c.l.b16 %v4348
          %v4804 = vunpack.c.l.b16 %v4349
          %v4805 = vunpack.c.l.b16 %v4350
          %v4806 = vunpack.c.l.b16 %v4351
          %v4807 = vunpack.c.l.b16 %v4352
          %v4808 = vunpack.c.l.b16 %v4353
          %v4809 = vunpack.c.l.b16 %v4354
          %v4810 = vunpack.c.l.b16 %v4355
          %v4811 = vunpack.c.l.b16 %v4356
          %v4812 = vunpack.c.l.b16 %v4357
          %v4813 = vunpack.c.l.b16 %v4358
          %v4814 = vunpack.c.l.b16 %v4359
          %v4815 = vunpack.c.l.b16 %v4360
          %v4816 = vunpack.c.l.b16 %v4361
          %v4817 = vunpack.c.l.b16 %v4362
          %v4818 = vunpack.c.l.b16 %v4363
          %v4819 = vunpack.c.l.b16 %v4364
          %v4820 = vunpack.c.l.b16 %v4365
          %v4821 = vunpack.c.l.b16 %v4366
          %v4822 = vunpack.c.l.b16 %v4367
          %v4823 = vunpack.c.l.b16 %v4368
          %v4824 = vunpack.c.l.b16 %v4369
          %v4825 = vunpack.c.l.b16 %v4370
          %v4826 = vunpack.c.l.b16 %v4371
          %v4827 = vunpack.c.l.b16 %v4372
          %v4828 = vunpack.c.l.b16 %v4373
          %v4829 = vunpack.c.l.b16 %v4374
          %v4830 = vunpack.c.l.b16 %v4375
          %v4831 = vunpack.c.l.b16 %v4376
          %v4832 = vunpack.c.l.b16 %v4377
          %v4833 = vunpack.c.l.b16 %v4378
          %v4834 = vunpack.c.l.b16 %v4379
          %v4835 = vunpack.c.l.b16 %v4380
          %v4836 = vunpack.c.l.b16 %v4381
          %v4837 = vunpack.c.l.b16 %v4382
          %v4838 = vunpack.c.l.b16 %v4383
          %v4839 = vunpack.c.l.b16 %v4384
          %v4840 = vunpack.c.l.b16 %v4385
          %v4841 = vunpack.c.l.b16 %v4386
          %v4842 = vunpack.c.l.b16 %v4387
          %v4843 = vunpack.c.l.b16 %v4388
          %v4844 = vunpack.c.l.b16 %v4389
          %v4845 = vunpack.c.l.b16 %v4390
          %v4846 = vunpack.c.l.b16 %v4391
          %v4847 = vunpack.c.l.b16 %v4392
          %v4848 = vunpack.c.l.b16 %v4393
          %v4849 = vunpack.c.l.b16 %v4394
          %v4850 = vunpack.c.l.b16 %v4395
          %v4851 = vunpack.c.l.b16 %v4396
          %v4852 = vunpack.c.l.b16 %v4397
          %v4853 = vunpack.c.l.b16 %v4398
          %v4854 = vunpack.c.l.b16 %v4399
          %v4855 = vunpack.c.l.b16 %v4400
          %v4856 = vunpack.c.l.b16 %v4401
          %v4857 = vunpack.c.l.b16 %v4402
          %v4858 = vunpack.c.l.b16 %v4403
          %v4859 = vunpack.c.l.b16 %v4404
          %v4860 = vunpack.c.l.b16 %v4405
          %v4861 = vunpack.c.l.b16 %v4406
          %v4862 = vunpack.c.l.b16 %v4407
          %v4863 = vunpack.c.l.b16 %v4408
          %v4864 = vunpack.c.l.b16 %v4409
          %v4865 = vunpack.c.l.b16 %v4410
          %v4866 = vunpack.c.l.b16 %v4411
          %v4867 = vunpack.c.l.b16 %v4412
          %v4868 = vunpack.c.l.b16 %v4413
          %v4869 = vunpack.c.l.b16 %v4414
          %v4870 = vunpack.c.l.b16 %v4415
          %v4871 = vunpack.c.l.b16 %v4416
          %v4872 = vunpack.c.l.b16 %v4417
          %v4873 = vunpack.c.l.b16 %v4418
          %v4874 = vunpack.c.l.b16 %v4419
          %v4875 = vunpack.c.l.b16 %v4420
          %v4876 = vunpack.c.l.b16 %v4421
          %v4877 = vunpack.c.l.b16 %v4422
          %v4878 = vunpack.c.l.b16 %v4423
          %v4879 = vunpack.c.l.b16 %v4424
          %v4880 = vpack.c.b16 %v4657, %v4656
          %v4881 = vpack.c.b16 %v4659, %v4658
          %v4882 = vpack.c.b16 %v4661, %v4660
          %v4883 = vpack.c.b16 %v4663, %v4662
          %v4884 = vpack.c.b16 %v4665, %v4664
          %v4885 = vpack.c.b16 %v4667, %v4666
          %v4886 = vpack.c.b16 %v4669, %v4668
          %v4887 = vpack.c.b16 %v4671, %v4670
          %v4888 = vpack.c.b16 %v4673, %v4672
          %v4889 = vpack.c.b16 %v4675, %v4674
          %v4890 = vpack.c.b16 %v4677, %v4676
          %v4891 = vpack.c.b16 %v4679, %v4678
          %v4892 = vpack.c.b16 %v4681, %v4680
          %v4893 = vpack.c.b16 %v4683, %v4682
          %v4894 = vpack.c.b16 %v4685, %v4684
          %v4895 = vpack.c.b16 %v4687, %v4686
          %v4896 = vpack.c.b16 %v4689, %v4688
          %v4897 = vpack.c.b16 %v4691, %v4690
          %v4898 = vpack.c.b16 %v4693, %v4692
          %v4899 = vpack.c.b16 %v4695, %v4694
          %v4900 = vpack.c.b16 %v4697, %v4696
          %v4901 = vpack.c.b16 %v4699, %v4698
          %v4902 = vpack.c.b16 %v4701, %v4700
          %v4903 = vpack.c.b16 %v4703, %v4702
          %v4904 = vpack.c.b16 %v4705, %v4704
          %v4905 = vpack.c.b16 %v4707, %v4706
          %v4906 = vpack.c.b16 %v4709, %v4708
          %v4907 = vpack.c.b16 %v4711, %v4710
          %v4908 = vpack.c.b16 %v4713, %v4712
          %v4909 = vpack.c.b16 %v4715, %v4714
          %v4910 = vpack.c.b16 %v4717, %v4716
          %v4911 = vpack.c.b16 %v4719, %v4718
          %v4912 = vpack.c.b16 %v4721, %v4720
          %v4913 = vpack.c.b16 %v4723, %v4722
          %v4914 = vpack.c.b16 %v4725, %v4724
          %v4915 = vpack.c.b16 %v4727, %v4726
          %v4916 = vpack.c.b16 %v4729, %v4728
          %v4917 = vpack.c.b16 %v4731, %v4730
          %v4918 = vpack.c.b16 %v4733, %v4732
          %v4919 = vpack.c.b16 %v4735, %v4734
          %v4920 = vpack.c.b16 %v4737, %v4736
          %v4921 = vpack.c.b16 %v4739, %v4738
          %v4922 = vpack.c.b16 %v4741, %v4740
          %v4923 = vpack.c.b16 %v4743, %v4742
          %v4924 = vpack.c.b16 %v4745, %v4744
          %v4925 = vpack.c.b16 %v4747, %v4746
          %v4926 = vpack.c.b16 %v4749, %v4748
          %v4927 = vpack.c.b16 %v4751, %v4750
          %v4928 = vpack.c.b16 %v4753, %v4752
          %v4929 = vpack.c.b16 %v4755, %v4754
          %v4930 = vpack.c.b16 %v4757, %v4756
          %v4931 = vpack.c.b16 %v4759, %v4758
          %v4932 = vpack.c.b16 %v4761, %v4760
          %v4933 = vpack.c.b16 %v4763, %v4762
          %v4934 = vpack.c.b16 %v4765, %v4764
          %v4935 = vpack.c.b16 %v4767, %v4766
          %v4936 = vpack.c.b16 %v4769, %v4768
          %v4937 = vpack.c.b16 %v4771, %v4770
          %v4938 = vpack.c.b16 %v4773, %v4772
          %v4939 = vpack.c.b16 %v4775, %v4774
          %v4940 = vpack.c.b16 %v4777, %v4776
          %v4941 = vpack.c.b16 %v4779, %v4778
          %v4942 = vpack.c.b16 %v4781, %v4780
          %v4943 = vpack.c.b16 %v4783, %v4782
          %v4944 = vpack.c.b16 %v4785, %v4784
          %v4945 = vpack.c.b16 %v4787, %v4786
          %v4946 = vpack.c.b16 %v4789, %v4788
          %v4947 = vpack.c.b16 %v4791, %v4790
          %v4948 = vpack.c.b16 %v4793, %v4792
          %v4949 = vpack.c.b16 %v4795, %v4794
          %v4950 = vpack.c.b16 %v4797, %v4796
          %v4951 = vpack.c.b16 %v4799, %v4798
          %v4952 = vpack.c.b16 %v4801, %v4800
          %v4953 = vpack.c.b16 %v4803, %v4802
          %v4954 = vpack.c.b16 %v4805, %v4804
          %v4955 = vpack.c.b16 %v4807, %v4806
          %v4956 = vpack.c.b16 %v4809, %v4808
          %v4957 = vpack.c.b16 %v4811, %v4810
          %v4958 = vpack.c.b16 %v4813, %v4812
          %v4959 = vpack.c.b16 %v4815, %v4814
          %v4960 = vpack.c.b16 %v4817, %v4816
          %v4961 = vpack.c.b16 %v4819, %v4818
          %v4962 = vpack.c.b16 %v4821, %v4820
          %v4963 = vpack.c.b16 %v4823, %v4822
          %v4964 = vpack.c.b16 %v4825, %v4824
          %v4965 = vpack.c.b16 %v4827, %v4826
          %v4966 = vpack.c.b16 %v4829, %v4828
          %v4967 = vpack.c.b16 %v4831, %v4830
          %v4968 = vpack.c.b16 %v4833, %v4832
          %v4969 = vpack.c.b16 %v4835, %v4834
          %v4970 = vpack.c.b16 %v4837, %v4836
          %v4971 = vpack.c.b16 %v4839, %v4838
          %v4972 = vpack.c.b16 %v4841, %v4840
          %v4973 = vpack.c.b16 %v4843, %v4842
          %v4974 = vpack.c.b16 %v4845, %v4844
          %v4975 = vpack.c.b16 %v4847, %v4846
          %v4976 = vpack.c.b16 %v4849, %v4848
          %v4977 = vpack.c.b16 %v4851, %v4850
          %v4978 = vpack.c.b16 %v4853, %v4852
          %v4979 = vpack.c.b16 %v4855, %v4854
          %v4980 = vpack.c.b16 %v4857, %v4856
          %v4981 = vpack.c.b16 %v4859, %v4858
          %v4982 = vpack.c.b16 %v4861, %v4860
          %v4983 = vpack.c.b16 %v4863, %v4862
          %v4984 = vpack.c.b16 %v4865, %v4864
          %v4985 = vpack.c.b16 %v4867, %v4866
          %v4986 = vpack.c.b16 %v4869, %v4868
          %v4987 = vpack.c.b16 %v4871, %v4870
          %v4988 = vpack.c.b16 %v4873, %v4872
          %v4989 = vpack.c.b16 %v4875, %v4874
          %v4990 = vpack.c.b16 %v4877, %v4876
          %v4991 = vpack.c.b16 %v4879, %v4878
          %5104 = vmatprep.subr.bf16.mxu0 0
          %5105 = vmatpush1.bf16.msra.mxu0 %v4887
          %5106 = vmatprep.subr.bf16.mxu0 0
          %5107 = vmatpush1.bf16.msra.mxu0 %v4886
          %5108 = vmatprep.subr.bf16.mxu0 0
          %5109 = vmatpush1.bf16.msra.mxu0 %v4885
          %5110 = vmatprep.subr.bf16.mxu0 0
          %5111 = vmatpush1.bf16.msra.mxu0 %v4884
          %5112 = vmatprep.subr.bf16.mxu0 0
          %5113 = vmatpush1.bf16.msra.mxu0 %v4883
          %5114 = vmatprep.subr.bf16.mxu0 0
          %5115 = vmatpush1.bf16.msra.mxu0 %v4882
          %5116 = vmatprep.subr.bf16.mxu0 0
          %5117 = vmatpush1.bf16.msra.mxu0 %v4881
          %5118 = vmatprep.subr.bf16.mxu0 0
          %5119 = vmatpush1.bf16.msra.mxu0 %v4880
          %5120 = vmatprep.subr.bf16.mxu0 0
          %5121 = vmatpush2.bf16.msra.mxu0 %v4895
          %5122 = vmatprep.subr.bf16.mxu0 0
          %5123 = vmatpush2.bf16.msra.mxu0 %v4894
          %5124 = vmatprep.subr.bf16.mxu0 0
          %5125 = vmatpush2.bf16.msra.mxu0 %v4893
          %5126 = vmatprep.subr.bf16.mxu0 0
          %5127 = vmatpush2.bf16.msra.mxu0 %v4892
          %5128 = vmatprep.subr.bf16.mxu0 0
          %5129 = vmatpush2.bf16.msra.mxu0 %v4891
          %5130 = vmatprep.subr.bf16.mxu0 0
          %5131 = vmatpush2.bf16.msra.mxu0 %v4890
          %5132 = vmatprep.subr.bf16.mxu0 0
          %5133 = vmatpush2.bf16.msra.mxu0 %v4889
          %5134 = vmatprep.subr.bf16.mxu0 0
          %5135 = vmatpush2.bf16.msra.mxu0 %v4888
          %5136 = vmatprep.mubr.bf16.mxu0 %v4188
          %5137 = vmatmul.mubr.bf16.gmra.mxu0 %v4187
          %v5138 = vpop.f32.mrf.mxu0
          %v5139 = vadd.f32 %v4430, %v5138
          %v5140 = vpop.f32.mrf.mxu0
          %v5141 = vpop.f32.mrf.mxu0
          %v5142 = vpop.f32.mrf.mxu0
          %5143 = vdwg.mxu0
          %5144 = vmatprep.subr.bf16.mxu0 0
          %5145 = vmatpush1.bf16.msra.mxu0 %v4903
          %5146 = vmatprep.subr.bf16.mxu0 0
          %5147 = vmatpush1.bf16.msra.mxu0 %v4902
          %5148 = vmatprep.subr.bf16.mxu0 0
          %5149 = vmatpush1.bf16.msra.mxu0 %v4901
          %5150 = vmatprep.subr.bf16.mxu0 0
          %5151 = vmatpush1.bf16.msra.mxu0 %v4900
          %5152 = vmatprep.subr.bf16.mxu0 0
          %5153 = vmatpush1.bf16.msra.mxu0 %v4899
          %5154 = vmatprep.subr.bf16.mxu0 0
          %5155 = vmatpush1.bf16.msra.mxu0 %v4898
          %5156 = vmatprep.subr.bf16.mxu0 0
          %5157 = vmatpush1.bf16.msra.mxu0 %v4897
          %5158 = vmatprep.subr.bf16.mxu0 0
          %5159 = vmatpush1.bf16.msra.mxu0 %v4896
          %5160 = vmatprep.subr.bf16.mxu0 0
          %5161 = vmatpush2.bf16.msra.mxu0 %v4911
          %5162 = vmatprep.subr.bf16.mxu0 0
          %5163 = vmatpush2.bf16.msra.mxu0 %v4910
          %5164 = vmatprep.subr.bf16.mxu0 0
          %5165 = vmatpush2.bf16.msra.mxu0 %v4909
          %5166 = vmatprep.subr.bf16.mxu0 0
          %5167 = vmatpush2.bf16.msra.mxu0 %v4908
          %5168 = vmatprep.subr.bf16.mxu0 0
          %5169 = vmatpush2.bf16.msra.mxu0 %v4907
          %5170 = vmatprep.subr.bf16.mxu0 0
          %5171 = vmatpush2.bf16.msra.mxu0 %v4906
          %5172 = vmatprep.subr.bf16.mxu0 0
          %5173 = vmatpush2.bf16.msra.mxu0 %v4905
          %5174 = vmatprep.subr.bf16.mxu0 0
          %5175 = vmatpush2.bf16.msra.mxu0 %v4904
          %5176 = vmatprep.mubr.bf16.mxu0 %v4190
          %5177 = vmatmul.mubr.bf16.gmra.mxu0 %v4189
          %v5178 = vpop.f32.mrf.mxu0
          %v5179 = vadd.f32 %v5139, %v5178
          %v5180 = vpop.f32.mrf.mxu0
          %v5181 = vpop.f32.mrf.mxu0
          %v5182 = vpop.f32.mrf.mxu0
          %5183 = vdwg.mxu0
          %5184 = vmatprep.subr.bf16.mxu0 0
          %5185 = vmatpush1.bf16.msra.mxu0 %v4919
          %5186 = vmatprep.subr.bf16.mxu0 0
          %5187 = vmatpush1.bf16.msra.mxu0 %v4918
          %5188 = vmatprep.subr.bf16.mxu0 0
          %5189 = vmatpush1.bf16.msra.mxu0 %v4917
          %5190 = vmatprep.subr.bf16.mxu0 0
          %5191 = vmatpush1.bf16.msra.mxu0 %v4916
          %5192 = vmatprep.subr.bf16.mxu0 0
          %5193 = vmatpush1.bf16.msra.mxu0 %v4915
          %5194 = vmatprep.subr.bf16.mxu0 0
          %5195 = vmatpush1.bf16.msra.mxu0 %v4914
          %5196 = vmatprep.subr.bf16.mxu0 0
          %5197 = vmatpush1.bf16.msra.mxu0 %v4913
          %5198 = vmatprep.subr.bf16.mxu0 0
          %5199 = vmatpush1.bf16.msra.mxu0 %v4912
          %5200 = vmatprep.subr.bf16.mxu0 0
          %5201 = vmatpush2.bf16.msra.mxu0 %v4927
          %5202 = vmatprep.subr.bf16.mxu0 0
          %5203 = vmatpush2.bf16.msra.mxu0 %v4926
          %5204 = vmatprep.subr.bf16.mxu0 0
          %5205 = vmatpush2.bf16.msra.mxu0 %v4925
          %5206 = vmatprep.subr.bf16.mxu0 0
          %5207 = vmatpush2.bf16.msra.mxu0 %v4924
          %5208 = vmatprep.subr.bf16.mxu0 0
          %5209 = vmatpush2.bf16.msra.mxu0 %v4923
          %5210 = vmatprep.subr.bf16.mxu0 0
          %5211 = vmatpush2.bf16.msra.mxu0 %v4922
          %5212 = vmatprep.subr.bf16.mxu0 0
          %5213 = vmatpush2.bf16.msra.mxu0 %v4921
          %5214 = vmatprep.subr.bf16.mxu0 0
          %5215 = vmatpush2.bf16.msra.mxu0 %v4920
          %5216 = vmatprep.mubr.bf16.mxu0 %v4192
          %5217 = vmatmul.mubr.bf16.gmra.mxu0 %v4191
          %v5218 = vpop.f32.mrf.mxu0
          %v5219 = vadd.f32 %v5179, %v5218
          %v5220 = vpop.f32.mrf.mxu0
          %v5221 = vpop.f32.mrf.mxu0
          %v5222 = vpop.f32.mrf.mxu0
          %5223 = vdwg.mxu0
          %5224 = vmatprep.subr.bf16.mxu0 0
          %5225 = vmatpush1.bf16.msra.mxu0 %v4935
          %5226 = vmatprep.subr.bf16.mxu0 0
          %5227 = vmatpush1.bf16.msra.mxu0 %v4934
          %5228 = vmatprep.subr.bf16.mxu0 0
          %5229 = vmatpush1.bf16.msra.mxu0 %v4933
          %5230 = vmatprep.subr.bf16.mxu0 0
          %5231 = vmatpush1.bf16.msra.mxu0 %v4932
          %5232 = vmatprep.subr.bf16.mxu0 0
          %5233 = vmatpush1.bf16.msra.mxu0 %v4931
          %5234 = vmatprep.subr.bf16.mxu0 0
          %5235 = vmatpush1.bf16.msra.mxu0 %v4930
          %5236 = vmatprep.subr.bf16.mxu0 0
          %5237 = vmatpush1.bf16.msra.mxu0 %v4929
          %5238 = vmatprep.subr.bf16.mxu0 0
          %5239 = vmatpush1.bf16.msra.mxu0 %v4928
          %5240 = vmatprep.subr.bf16.mxu0 0
          %5241 = vmatpush2.bf16.msra.mxu0 %v4943
          %5242 = vmatprep.subr.bf16.mxu0 0
          %5243 = vmatpush2.bf16.msra.mxu0 %v4942
          %5244 = vmatprep.subr.bf16.mxu0 0
          %5245 = vmatpush2.bf16.msra.mxu0 %v4941
          %5246 = vmatprep.subr.bf16.mxu0 0
          %5247 = vmatpush2.bf16.msra.mxu0 %v4940
          %5248 = vmatprep.subr.bf16.mxu0 0
          %5249 = vmatpush2.bf16.msra.mxu0 %v4939
          %5250 = vmatprep.subr.bf16.mxu0 0
          %5251 = vmatpush2.bf16.msra.mxu0 %v4938
          %5252 = vmatprep.subr.bf16.mxu0 0
          %5253 = vmatpush2.bf16.msra.mxu0 %v4937
          %5254 = vmatprep.subr.bf16.mxu0 0
          %5255 = vmatpush2.bf16.msra.mxu0 %v4936
          %5256 = vmatprep.mubr.bf16.mxu0 %v4194
          %5257 = vmatmul.mubr.bf16.gmra.mxu0 %v4193
          %v5258 = vpop.f32.mrf.mxu0
          %v5259 = vadd.f32 %v5219, %v5258
          %v5260 = vpop.f32.mrf.mxu0
          %v5261 = vpop.f32.mrf.mxu0
          %v5262 = vpop.f32.mrf.mxu0
          %5263 = vdwg.mxu0
          %5264 = vmatprep.subr.bf16.mxu0 0
          %5265 = vmatpush1.bf16.msra.mxu0 %v4951
          %5266 = vmatprep.subr.bf16.mxu0 0
          %5267 = vmatpush1.bf16.msra.mxu0 %v4950
          %5268 = vmatprep.subr.bf16.mxu0 0
          %5269 = vmatpush1.bf16.msra.mxu0 %v4949
          %5270 = vmatprep.subr.bf16.mxu0 0
          %5271 = vmatpush1.bf16.msra.mxu0 %v4948
          %5272 = vmatprep.subr.bf16.mxu0 0
          %5273 = vmatpush1.bf16.msra.mxu0 %v4947
          %5274 = vmatprep.subr.bf16.mxu0 0
          %5275 = vmatpush1.bf16.msra.mxu0 %v4946
          %5276 = vmatprep.subr.bf16.mxu0 0
          %5277 = vmatpush1.bf16.msra.mxu0 %v4945
          %5278 = vmatprep.subr.bf16.mxu0 0
          %5279 = vmatpush1.bf16.msra.mxu0 %v4944
          %5280 = vmatprep.subr.bf16.mxu0 0
          %5281 = vmatpush2.bf16.msra.mxu0 %v4959
          %5282 = vmatprep.subr.bf16.mxu0 0
          %5283 = vmatpush2.bf16.msra.mxu0 %v4958
          %5284 = vmatprep.subr.bf16.mxu0 0
          %5285 = vmatpush2.bf16.msra.mxu0 %v4957
          %5286 = vmatprep.subr.bf16.mxu0 0
          %5287 = vmatpush2.bf16.msra.mxu0 %v4956
          %5288 = vmatprep.subr.bf16.mxu0 0
          %5289 = vmatpush2.bf16.msra.mxu0 %v4955
          %5290 = vmatprep.subr.bf16.mxu0 0
          %5291 = vmatpush2.bf16.msra.mxu0 %v4954
          %5292 = vmatprep.subr.bf16.mxu0 0
          %5293 = vmatpush2.bf16.msra.mxu0 %v4953
          %5294 = vmatprep.subr.bf16.mxu0 0
          %5295 = vmatpush2.bf16.msra.mxu0 %v4952
          %5296 = vmatprep.mubr.bf16.mxu0 %v4196
          %5297 = vmatmul.mubr.bf16.gmra.mxu0 %v4195
          %v5298 = vpop.f32.mrf.mxu0
          %v5299 = vadd.f32 %v5259, %v5298
          %v5300 = vpop.f32.mrf.mxu0
          %v5301 = vpop.f32.mrf.mxu0
          %v5302 = vpop.f32.mrf.mxu0
          %5303 = vdwg.mxu0
          %5304 = vmatprep.subr.bf16.mxu0 0
          %5305 = vmatpush1.bf16.msra.mxu0 %v4967
          %5306 = vmatprep.subr.bf16.mxu0 0
          %5307 = vmatpush1.bf16.msra.mxu0 %v4966
          %5308 = vmatprep.subr.bf16.mxu0 0
          %5309 = vmatpush1.bf16.msra.mxu0 %v4965
          %5310 = vmatprep.subr.bf16.mxu0 0
          %5311 = vmatpush1.bf16.msra.mxu0 %v4964
          %5312 = vmatprep.subr.bf16.mxu0 0
          %5313 = vmatpush1.bf16.msra.mxu0 %v4963
          %5314 = vmatprep.subr.bf16.mxu0 0
          %5315 = vmatpush1.bf16.msra.mxu0 %v4962
          %5316 = vmatprep.subr.bf16.mxu0 0
          %5317 = vmatpush1.bf16.msra.mxu0 %v4961
          %5318 = vmatprep.subr.bf16.mxu0 0
          %5319 = vmatpush1.bf16.msra.mxu0 %v4960
          %5320 = vmatprep.subr.bf16.mxu0 0
          %5321 = vmatpush2.bf16.msra.mxu0 %v4975
          %5322 = vmatprep.subr.bf16.mxu0 0
          %5323 = vmatpush2.bf16.msra.mxu0 %v4974
          %5324 = vmatprep.subr.bf16.mxu0 0
          %5325 = vmatpush2.bf16.msra.mxu0 %v4973
          %5326 = vmatprep.subr.bf16.mxu0 0
          %5327 = vmatpush2.bf16.msra.mxu0 %v4972
          %5328 = vmatprep.subr.bf16.mxu0 0
          %5329 = vmatpush2.bf16.msra.mxu0 %v4971
          %5330 = vmatprep.subr.bf16.mxu0 0
          %5331 = vmatpush2.bf16.msra.mxu0 %v4970
          %5332 = vmatprep.subr.bf16.mxu0 0
          %5333 = vmatpush2.bf16.msra.mxu0 %v4969
          %5334 = vmatprep.subr.bf16.mxu0 0
          %5335 = vmatpush2.bf16.msra.mxu0 %v4968
          %5336 = vmatprep.mubr.bf16.mxu0 %v4198
          %5337 = vmatmul.mubr.bf16.gmra.mxu0 %v4197
          %v5338 = vpop.f32.mrf.mxu0
          %v5339 = vadd.f32 %v5299, %v5338
          %v5340 = vpop.f32.mrf.mxu0
          %v5341 = vpop.f32.mrf.mxu0
          %v5342 = vpop.f32.mrf.mxu0
          %5343 = vdwg.mxu0
          %5344 = vmatprep.subr.bf16.mxu0 0
          %5345 = vmatpush1.bf16.msra.mxu0 %v4983
          %5346 = vmatprep.subr.bf16.mxu0 0
          %5347 = vmatpush1.bf16.msra.mxu0 %v4982
          %5348 = vmatprep.subr.bf16.mxu0 0
          %5349 = vmatpush1.bf16.msra.mxu0 %v4981
          %5350 = vmatprep.subr.bf16.mxu0 0
          %5351 = vmatpush1.bf16.msra.mxu0 %v4980
          %5352 = vmatprep.subr.bf16.mxu0 0
          %5353 = vmatpush1.bf16.msra.mxu0 %v4979
          %5354 = vmatprep.subr.bf16.mxu0 0
          %5355 = vmatpush1.bf16.msra.mxu0 %v4978
          %5356 = vmatprep.subr.bf16.mxu0 0
          %5357 = vmatpush1.bf16.msra.mxu0 %v4977
          %5358 = vmatprep.subr.bf16.mxu0 0
          %5359 = vmatpush1.bf16.msra.mxu0 %v4976
          %5360 = vmatprep.subr.bf16.mxu0 0
          %5361 = vmatpush2.bf16.msra.mxu0 %v4991
          %5362 = vmatprep.subr.bf16.mxu0 0
          %5363 = vmatpush2.bf16.msra.mxu0 %v4990
          %5364 = vmatprep.subr.bf16.mxu0 0
          %5365 = vmatpush2.bf16.msra.mxu0 %v4989
          %5366 = vmatprep.subr.bf16.mxu0 0
          %5367 = vmatpush2.bf16.msra.mxu0 %v4988
          %5368 = vmatprep.subr.bf16.mxu0 0
          %5369 = vmatpush2.bf16.msra.mxu0 %v4987
          %5370 = vmatprep.subr.bf16.mxu0 0
          %5371 = vmatpush2.bf16.msra.mxu0 %v4986
          %5372 = vmatprep.subr.bf16.mxu0 0
          %5373 = vmatpush2.bf16.msra.mxu0 %v4985
          %5374 = vmatprep.subr.bf16.mxu0 0
          %5375 = vmatpush2.bf16.msra.mxu0 %v4984
          %5376 = vmatprep.mubr.bf16.mxu0 %v4200
          %5377 = vmatmul.mubr.bf16.gmra.mxu0 %v4199
          %v5378 = vpop.f32.mrf.mxu0
          %v5379 = vadd.f32 %v5339, %v5378
          %v5380 = vpop.f32.mrf.mxu0
          %v5381 = vpop.f32.mrf.mxu0
          %v5382 = vpop.f32.mrf.mxu0
          %5383 = vdwg.mxu0
          %vm5384 = vcmask 9216
          %v5385 = vsel %vm5384, %v5379, -inf
          %5386 = vmax.xlane.f32.xlu0 %v5385
          %v5387 = vpop.xlane.xlu0 %5386
          %v5388 = vsub.f32 %v5379, %v5387
          %v5389 = vmul.f32 %v5388, 1.442695
          %v5390 = vpow.pop %v5389
          %v5391 = vsel %vm5384, %v5390, 0.0
          %5392 = vadd.xlane.f32.xlu0 %v5391
          %v5393 = vpop.xlane.xlu0 %5392
          %v5394 = vlog2.pop %v5393
          %v5395 = vmul.f32 %v5394, 0.6931472
          %v5396 = vsub.f32 %v5388, %v5395
          %5397 = vst.msk [vmem:[#allocation15] sm:$0x3] %vm5384, %v5396
        $region84: #{recover_cnn_forward.1} parent=51 // pred_fallthru
          _
        // Predicated region
        $region85: #{recover_cnn_forward.1} parent=51 // pred_check
          %p5398 = pneg %p231
        $region86: #{recover_cnn_forward.1} parent=51 // pred_check_branch
          %5400 = sbr.rel (%p5398) target = $region88
        $region87: #{recover_cnn_forward.1} parent=51 // pred_region
          %s5402 = ssub.s32 32, 32
          %5403 = vsyncadd [#allocation6], %s5402
          %s5405 = sshll.u32 [#allocation15], 4
          %s5406 = int_to_ptr.vmem [resolvable:$true] %s5405
          %5408 = dma.vmem_to_hbm [thread:$0]  %s5406, 32, %s8, [#allocation6]
        $region88: #{recover_cnn_forward.1} parent=51 // pred_fallthru
          _
        // Predicated region
        $region89: #{recover_cnn_forward.1} parent=51 // pred_check
          %p5409 = pneg %p231
        $region90: #{recover_cnn_forward.1} parent=51 // pred_check_branch
          %5411 = sbr.rel (%p5409) target = $region92
        $region91: #{recover_cnn_forward.1} parent=51 // pred_region
          %5412 = dma.done [#allocation6], 32
        $region92: #{recover_cnn_forward.1} parent=51 // pred_fallthru
          _
      $region52: #{recover_cnn_forward.1} parent=5 // pred_fallthru
        _
      %p5413 = scmp.le.s32.totalorder 2, %s25
      // Predicated region
      $region93: #{recover_cnn_forward.1} parent=5 // pred_check
        %p5414 = pneg %p5413
      $region94: #{recover_cnn_forward.1} parent=5 // pred_check_branch
        %5416 = sbr.rel (%p5414) target = $region96
      $region95: #{recover_cnn_forward.1} parent=5 // pred_region
        %s5417 = ssub.s32 %s25, 2
      $region96: #{recover_cnn_forward.1} parent=5 // pred_fallthru
        _
    $region6: #{recover_cnn_forward.1} parent=1 // loop_footer
      %s29 = sadd.s32 1, %s25
    $region7: #{recover_cnn_forward.1} parent=1 // loop_footer_branch
      %24 = sbr.rel target = $region3
    $region8: #{recover_cnn_forward.1} parent=1 // loop_exit
      _
    %5418 = vsyncpa [#allocation5], 1
    %s5419 = scalar_lea.sflag [#allocation5], 1
    %5420 = vsyncpa %s5419, 1
    %5421 = vsyncpa [#allocation8], 1
    %s5422 = scalar_lea.sflag [#allocation8], 1
    %5423 = vsyncpa %s5422, 1
    %5424 = vsyncpa [#allocation11], 1
    %s5425 = scalar_lea.sflag [#allocation11], 1
    %5426 = vsyncpa %s5425, 1
    %5427 = vsyncpa [#allocation14], 1
    %5428 = vsyncpa [#allocation6], 1
    %s5429 = scalar_lea.sflag [#allocation6], 1
    %5430 = vsyncpa %s5429, 1

</llo_original>
